<compile_context>
chip_gen: v7x
topology: tpu7x:2x2x1
jax: 0.10.0
libtpu: 0.0.40
codegen_flags: <defaults>
</compile_context>

<pallas_src>
import functools

import numpy as np
import jax
import jax.numpy as jnp
from jax import lax
from jax.experimental import pallas as pl
from jax.experimental.pallas import tpu as pltpu


_VMEM_LIMIT = 64 * 1024 * 1024  # explicit scoped-VMEM ceiling (<= physical on all gens)


def _batch_chunks(n, rows_per_item):
    """Grid size over the batch axis: 2 chunks when each chunk still has >= 8 MXU
    rows (keeps both v7x TensorCores busy), else a single fully-folded chunk."""
    if n % 2 == 0 and (n // 2) * rows_per_item >= 8:
        return 2
    return 1


# ---------------------------------------------------------------------------
# Kernel 1: fused LeakyReLU + Conv2d(k4, s2, p1) + up-path ReLU, writing a
# zero-bordered (1-pixel padded) bf16 tile that the up kernel consumes directly.
# Input is the space-to-depth(2) of the zero-padded NHWC image, so the stride-2
# 4x4 conv becomes 4 accumulated unit-stride matmuls formed from VMEM slices.
# ---------------------------------------------------------------------------
def _down_kernel(x_ref, w_ref, o_ref, *, Nb, Ho, Wo, neg_slope):
    c4 = x_ref.shape[-1]
    cmid = o_ref.shape[-1]
    xa = x_ref[...]                                          # [Nb, Ho+1, Wo+1, 4*Cin] f32
    xa = jnp.where(xa > 0, xa, neg_slope * xa).astype(jnp.bfloat16)  # LeakyReLU, cast once
    m = Nb * Ho * Wo
    acc = jnp.zeros((m, cmid), jnp.float32)
    for t, (dy, dx) in enumerate(((0, 0), (0, 1), (1, 0), (1, 1))):
        a = xa[:, dy:dy + Ho, dx:dx + Wo, :].reshape(m, c4)
        acc = acc + jnp.dot(a, w_ref[t], preferred_element_type=jnp.float32)
    d = jnp.maximum(acc, 0.0).astype(jnp.bfloat16)           # up-path ReLU fused here
    o_ref[...] = jnp.zeros(o_ref.shape, o_ref.dtype)         # zero border of padded tile
    o_ref[:, 1:Ho + 1, 1:Wo + 1, :] = d.reshape(Nb, Ho, Wo, cmid)


def down_conv_relu(x_nhwc, w_down, neg_slope=0.2):
    N, H, W, Cin = x_nhwc.shape
    Cmid = w_down.shape[0]
    assert H % 2 == 0 and W % 2 == 0
    Ho, Wo = H // 2, W // 2
    Hs, Ws = Ho + 1, Wo + 1
    # TODO(synk): the zero-pad + space-to-depth below is one extra XLA pass over x;
    # doing it in-kernel needs stride-2 sublane slices that Mosaic lowers poorly.
    xp = jnp.pad(x_nhwc, ((0, 0), (1, 1), (1, 1), (0, 0)))
    xs = (xp.reshape(N, Hs, 2, Ws, 2, Cin)
            .transpose(0, 1, 3, 2, 4, 5)
            .reshape(N, Hs, Ws, 4 * Cin))
    # w2[dy*2+dx, (by*2+bx)*Cin + c, o] = w_down[o, c, 2*dy+by, 2*dx+bx]
    w2 = (w_down.reshape(Cmid, Cin, 2, 2, 2, 2)
                .transpose(2, 4, 3, 5, 1, 0)
                .reshape(4, 4 * Cin, Cmid)
                .astype(jnp.bfloat16))
    G = _batch_chunks(N, Ho * Wo)
    Nb = N // G
    flops = 2 * N * Ho * Wo * 16 * Cin * Cmid
    bytes_accessed = xs.size * 4 + w2.size * 2 + N * (Ho + 2) * (Wo + 2) * Cmid * 2
    return pl.pallas_call(
        functools.partial(_down_kernel, Nb=Nb, Ho=Ho, Wo=Wo, neg_slope=neg_slope),
        out_shape=jax.ShapeDtypeStruct((N, Ho + 2, Wo + 2, Cmid), jnp.bfloat16),
        grid=(G,),
        in_specs=[
            pl.BlockSpec((Nb, Hs, Ws, 4 * Cin), lambda g: (g, 0, 0, 0)),
            pl.BlockSpec((4, 4 * Cin, Cmid), lambda g: (0, 0, 0)),   # weight resident
        ],
        out_specs=pl.BlockSpec((Nb, Ho + 2, Wo + 2, Cmid), lambda g: (g, 0, 0, 0)),
        compiler_params=pltpu.CompilerParams(
            dimension_semantics=("parallel",), vmem_limit_bytes=_VMEM_LIMIT),
        cost_estimate=pl.CostEstimate(flops=flops, transcendentals=0,
                                      bytes_accessed=bytes_accessed),
    )(xs, w2)


# ---------------------------------------------------------------------------
# Kernel 2: ConvTranspose2d(k4, s2, p1) as 4 polyphase 2x2 stride-1 convs over the
# already-ReLU'd, already-padded bf16 tile. Each phase is written straight into its
# interleaved location of a [N, Hi, 2, Wi, 2*Co] layout (== NHWC after a free
# reshape), and per-channel f32 sum / sum-of-squares are emitted for BatchNorm.
# ---------------------------------------------------------------------------
def _up_kernel(d_ref, w_ref, u_ref, s_ref, ss_ref, *, Nb, Hi, Wi, Co):
    dp = d_ref[...]                                          # [Nb, Hi+2, Wi+2, Cmid] bf16
    m = Nb * Hi * Wi
    s = jnp.zeros((1, Co), jnp.float32)
    ss = jnp.zeros((1, Co), jnp.float32)
    for ph_h in range(2):
        for ph_w in range(2):
            p = ph_h * 2 + ph_w
            acc = jnp.zeros((m, Co), jnp.float32)
            for t, (dy, dx) in enumerate(((0, 0), (0, 1), (1, 0), (1, 1))):
                a = dp[:, ph_h + dy:ph_h + dy + Hi,
                        ph_w + dx:ph_w + dx + Wi, :].reshape(m, -1)
                acc = acc + jnp.dot(a, w_ref[p * 4 + t],
                                    preferred_element_type=jnp.float32)
            s = s + jnp.sum(acc, axis=0, keepdims=True)
            ss = ss + jnp.sum(acc * acc, axis=0, keepdims=True)
            u_ref[:, :, ph_h:ph_h + 1, :, ph_w * Co:(ph_w + 1) * Co] = (
                acc.reshape(Nb, Hi, 1, Wi, Co).astype(u_ref.dtype))
    s_ref[...] = s.reshape(1, 1, Co)
    ss_ref[...] = ss.reshape(1, 1, Co)


def up_conv_with_stats(dpad, w_up):
    # w_up: [Cmid(=inner_nc), Co(=outer_nc), 4, 4]  (PyTorch ConvTranspose2d layout)
    N, Hp, Wp, Cmid = dpad.shape
    Hi, Wi = Hp - 2, Wp - 2
    Co = w_up.shape[1]
    mats = []
    for ph_h in range(2):
        for ph_w in range(2):
            for dy in range(2):
                for dx in range(2):
                    mats.append(w_up[:, :, 3 - ph_h - 2 * dy, 3 - ph_w - 2 * dx])
    wp = jnp.stack(mats, axis=0).astype(jnp.bfloat16)        # [16, Cmid, Co]
    G = _batch_chunks(N, Hi * Wi)
    Nb = N // G
    flops = 2 * N * Hi * Wi * 16 * Cmid * Co
    bytes_accessed = (dpad.size * 2 + wp.size * 2
                      + N * 4 * Hi * Wi * Co * 2 + 2 * G * Co * 4)
    return pl.pallas_call(
        functools.partial(_up_kernel, Nb=Nb, Hi=Hi, Wi=Wi, Co=Co),
        out_shape=(
            jax.ShapeDtypeStruct((N, Hi, 2, Wi, 2 * Co), jnp.bfloat16),
            jax.ShapeDtypeStruct((G, 1, Co), jnp.float32),
            jax.ShapeDtypeStruct((G, 1, Co), jnp.float32),
        ),
        grid=(G,),
        in_specs=[
            pl.BlockSpec((Nb, Hi + 2, Wi + 2, Cmid), lambda g: (g, 0, 0, 0)),
            pl.BlockSpec((16, Cmid, Co), lambda g: (0, 0, 0)),   # weight resident
        ],
        out_specs=(
            pl.BlockSpec((Nb, Hi, 2, Wi, 2 * Co), lambda g: (g, 0, 0, 0, 0)),
            pl.BlockSpec((1, 1, Co), lambda g: (g, 0, 0)),
            pl.BlockSpec((1, 1, Co), lambda g: (g, 0, 0)),
        ),
        compiler_params=pltpu.CompilerParams(
            dimension_semantics=("parallel",), vmem_limit_bytes=_VMEM_LIMIT),
        cost_estimate=pl.CostEstimate(flops=flops, transcendentals=0,
                                      bytes_accessed=bytes_accessed),
    )(dpad, wp)


# ---------------------------------------------------------------------------
# Kernel 3: BatchNorm apply (scale/shift precomputed from the fused stats),
# row-tiled over the channels-last [M, C] slab with a fixed, cdiv-based tiling.
# ---------------------------------------------------------------------------
def _bn_kernel(u_ref, sc_ref, sh_ref, o_ref):
    o_ref[...] = u_ref[...].astype(jnp.float32) * sc_ref[...] + sh_ref[...]


def bn_apply(u_flat, scale, shift):
    M, C = u_flat.shape
    if M <= 16:
        tm = M
    else:
        tm = min(1024, (((M + 1) // 2) + 7) // 8 * 8)   # >=2 parallel steps, <=1024 rows
    grid = (pl.cdiv(M, tm),)
    return pl.pallas_call(
        _bn_kernel,
        out_shape=jax.ShapeDtypeStruct((M, C), jnp.float32),
        grid=grid,
        in_specs=[
            pl.BlockSpec((tm, C), lambda i: (i, 0)),
            pl.BlockSpec((1, C), lambda i: (0, 0)),
            pl.BlockSpec((1, C), lambda i: (0, 0)),
        ],
        out_specs=pl.BlockSpec((tm, C), lambda i: (i, 0)),
        compiler_params=pltpu.CompilerParams(
            dimension_semantics=("parallel",), vmem_limit_bytes=_VMEM_LIMIT),
    )(u_flat, scale.reshape(1, C), shift.reshape(1, C))


# ---------------------------------------------------------------------------
# Forward pass (innermost UnetSkipConnectionBlock)
# ---------------------------------------------------------------------------
def unet_innermost_forward(x_nchw, params, eps=1e-5):
    N, _, H, W = x_nchw.shape
    Co = params["w_up"].shape[1]
    x_nhwc = jnp.transpose(x_nchw, (0, 2, 3, 1))

    # down = [LeakyReLU(0.2), Conv2d]; the up-path ReLU and the 1-pixel zero pad
    # needed by the transposed conv are fused into the same kernel's store.
    dpad = down_conv_relu(x_nhwc, params["w_down"], neg_slope=0.2)   # [N,H/2+2,W/2+2,inner] bf16

    # up = [ReLU (done above), ConvTranspose2d] with fused per-chunk BN sums.
    u5, psum, pssq = up_conv_with_stats(dpad, params["w_up"])

    count = N * H * W
    mean = jnp.sum(psum, axis=(0, 1)) / count
    ex2 = jnp.sum(pssq, axis=(0, 1)) / count
    # Documented precision choice: bf16 matmuls with f32 accumulation; biased batch
    # variance via E[x^2]-mean^2 from the f32 accumulator, clamped at 0.
    var = jnp.maximum(ex2 - mean * mean, 0.0)
    inv = lax.rsqrt(var + eps)
    scale = params["gamma"] * inv
    shift = params["beta"] - mean * scale

    # u5 is already phase-interleaved NHWC ([N, H/2, 2, W/2, 2*Co]); flattening to
    # [N*H*W, Co] is a free contiguous-dim merge -- no XLA de-interleave pass.
    u_flat = u5.reshape(N * H * W, Co)
    bn_flat = bn_apply(u_flat, scale, shift)

    bn_nchw = jnp.transpose(bn_flat.reshape(N, H, W, Co), (0, 3, 1, 2))
    # skip connection: concat([x, model(x)], channel axis)
    return jnp.concatenate([x_nchw, bn_nchw], axis=1)
    # TODO(synk): BatchNorm2d running_mean/running_var buffer updates are not modeled
    # (forward output in training mode uses batch statistics only, as implemented).


# pure-JAX reference (XLA convs, f32) for correctness checking
def reference_forward(x, params):
    lx = jnp.where(x > 0, x, 0.2 * x)
    d = lax.conv_general_dilated(
        lx, params["w_down"], (2, 2), ((1, 1), (1, 1)),
        dimension_numbers=("NCHW", "OIHW", "NCHW"),
        precision=lax.Precision.HIGHEST)
    r = jnp.maximum(d, 0.0)
    w_eq = jnp.flip(params["w_up"], axis=(2, 3)).transpose(1, 0, 2, 3)
    u = lax.conv_general_dilated(
        r, w_eq, (1, 1), ((2, 2), (2, 2)), lhs_dilation=(2, 2),
        dimension_numbers=("NCHW", "OIHW", "NCHW"),
        precision=lax.Precision.HIGHEST)
    mean = u.mean(axis=(0, 2, 3), keepdims=True)
    var = ((u - mean) ** 2).mean(axis=(0, 2, 3), keepdims=True)
    bn = (u - mean) * lax.rsqrt(var + 1e-5)
    bn = bn * params["gamma"].reshape(1, -1, 1, 1) + params["beta"].reshape(1, -1, 1, 1)
    return jnp.concatenate([x, bn], axis=1)


if __name__ == "__main__":
    outer_nc, inner_nc = 4, 8
    input_nc = outer_nc            # input_nc defaults to outer_nc in __init__
    N, H, W = 2, 16, 16

    key = jax.random.PRNGKey(0)
    k1, k2, kx = jax.random.split(key, 3)
    params = {
        # Conv2d: [inner_nc, input_nc, 4, 4]; ConvTranspose2d: [inner_nc, outer_nc, 4, 4]
        "w_down": 0.02 * jax.random.normal(k1, (inner_nc, input_nc, 4, 4), jnp.float32),
        "w_up":   0.02 * jax.random.normal(k2, (inner_nc, outer_nc, 4, 4), jnp.float32),
        # BatchNorm2d default init: weight=1, bias=0
        "gamma":  jnp.ones((outer_nc,), jnp.float32),
        "beta":   jnp.zeros((outer_nc,), jnp.float32),
    }
    x = jax.random.normal(kx, (N, input_nc, H, W), jnp.float32)

    fwd = jax.jit(unet_innermost_forward)
    out = jax.block_until_ready(fwd(x, params))
    ref = jax.block_until_ready(jax.jit(reference_forward)(x, params))

    assert out.shape == (N, input_nc + outer_nc, H, W), out.shape
    if not np.allclose(np.asarray(out), np.asarray(ref), atol=5e-2, rtol=5e-2):
        raise AssertionError(
            "mismatch vs reference, max abs diff = "
            f"{float(np.max(np.abs(np.asarray(out) - np.asarray(ref))))}")
    print("KERNEL_OK")
</pallas_src>

<mosaic_0001>
module attributes {stable_mosaic.version = 11 : i64} {
  func.func @_down_kernel(%arg0: i32, %arg1: memref<1x9x9x16xf32, #tpu.memory_space<vmem>>, %arg2: memref<4x16x8xbf16, #tpu.memory_space<vmem>>, %arg3: memref<1x10x10x8xbf16, #tpu.memory_space<vmem>>) attributes {dimension_semantics = [#tpu.dimension_semantics<parallel>], iteration_bounds = array<i64: 2>, scalar_prefetch = 0 : i64, scratch_operands = 0 : i64, tpu.core_type = #tpu.core_type<tc>, window_params = [{transform_indices = @transform_0, window_bounds = array<i64: 1, 9, 9, 16>}, {pipeline_mode = #tpu.pipeline_mode<synchronous>, transform_indices = @transform_1, window_bounds = array<i64: 4, 16, 8>}, {transform_indices = @transform_2, window_bounds = array<i64: 1, 10, 10, 8>}]} {
    %c0 = arith.constant 0 : index
    %c0_0 = arith.constant 0 : index
    %c0_1 = arith.constant 0 : index
    %c0_2 = arith.constant 0 : index
    %0 = vector.load %arg1[%c0, %c0_0, %c0_1, %c0_2] : memref<1x9x9x16xf32, #tpu.memory_space<vmem>>, vector<1x9x9x16xf32>
    %cst = arith.constant 0.000000e+00 : f32
    %1 = vector.broadcast %cst : f32 to vector<1x9x9x16xf32>
    %2 = arith.cmpf ogt, %0, %1 : vector<1x9x9x16xf32>
    %cst_3 = arith.constant 2.000000e-01 : f32
    %3 = vector.broadcast %cst_3 : f32 to vector<1x9x9x16xf32>
    %4 = arith.mulf %3, %0 : vector<1x9x9x16xf32>
    %5 = arith.select %2, %0, %4 : vector<1x9x9x16xi1>, vector<1x9x9x16xf32>
    %6 = arith.truncf %5 : vector<1x9x9x16xf32> to vector<1x9x9x16xbf16>
    %cst_4 = arith.constant 0.000000e+00 : f32
    %7 = vector.broadcast %cst_4 : f32 to vector<64x8xf32>
    %8 = vector.extract_strided_slice %6 {offsets = [0, 0, 0, 0], sizes = [1, 8, 8, 16], strides = [1, 1, 1, 1]} : vector<1x9x9x16xbf16> to vector<1x8x8x16xbf16>
    %9 = vector.shape_cast %8 : vector<1x8x8x16xbf16> to vector<64x16xbf16>
    %c0_5 = arith.constant 0 : index
    %c0_6 = arith.constant 0 : index
    %c0_7 = arith.constant 0 : index
    %10 = vector.load %arg2[%c0_5, %c0_6, %c0_7] : memref<4x16x8xbf16, #tpu.memory_space<vmem>>, vector<1x16x8xbf16>
    %11 = vector.shape_cast %10 : vector<1x16x8xbf16> to vector<16x8xbf16>
    %cst_8 = arith.constant dense<0.000000e+00> : vector<64x8xf32>
    %12 = tpu.matmul %9, %11, %cst_8 {dimension_numbers = #tpu.dot_dimension_numbers<[1], [0], [0], [1], [0, 0, 1, 1], [], []>} : vector<64x16xbf16>, vector<16x8xbf16>, vector<64x8xf32> -> vector<64x8xf32>
    %13 = arith.addf %7, %12 : vector<64x8xf32>
    %14 = vector.extract_strided_slice %6 {offsets = [0, 0, 1, 0], sizes = [1, 8, 8, 16], strides = [1, 1, 1, 1]} : vector<1x9x9x16xbf16> to vector<1x8x8x16xbf16>
    %15 = vector.shape_cast %14 : vector<1x8x8x16xbf16> to vector<64x16xbf16>
    %c1 = arith.constant 1 : index
    %c0_9 = arith.constant 0 : index
    %c0_10 = arith.constant 0 : index
    %16 = vector.load %arg2[%c1, %c0_9, %c0_10] : memref<4x16x8xbf16, #tpu.memory_space<vmem>>, vector<1x16x8xbf16>
    %17 = vector.shape_cast %16 : vector<1x16x8xbf16> to vector<16x8xbf16>
    %cst_11 = arith.constant dense<0.000000e+00> : vector<64x8xf32>
    %18 = tpu.matmul %15, %17, %cst_11 {dimension_numbers = #tpu.dot_dimension_numbers<[1], [0], [0], [1], [0, 0, 1, 1], [], []>} : vector<64x16xbf16>, vector<16x8xbf16>, vector<64x8xf32> -> vector<64x8xf32>
    %19 = arith.addf %13, %18 : vector<64x8xf32>
    %20 = vector.extract_strided_slice %6 {offsets = [0, 1, 0, 0], sizes = [1, 8, 8, 16], strides = [1, 1, 1, 1]} : vector<1x9x9x16xbf16> to vector<1x8x8x16xbf16>
    %21 = vector.shape_cast %20 : vector<1x8x8x16xbf16> to vector<64x16xbf16>
    %c2 = arith.constant 2 : index
    %c0_12 = arith.constant 0 : index
    %c0_13 = arith.constant 0 : index
    %22 = vector.load %arg2[%c2, %c0_12, %c0_13] : memref<4x16x8xbf16, #tpu.memory_space<vmem>>, vector<1x16x8xbf16>
    %23 = vector.shape_cast %22 : vector<1x16x8xbf16> to vector<16x8xbf16>
    %cst_14 = arith.constant dense<0.000000e+00> : vector<64x8xf32>
    %24 = tpu.matmul %21, %23, %cst_14 {dimension_numbers = #tpu.dot_dimension_numbers<[1], [0], [0], [1], [0, 0, 1, 1], [], []>} : vector<64x16xbf16>, vector<16x8xbf16>, vector<64x8xf32> -> vector<64x8xf32>
    %25 = arith.addf %19, %24 : vector<64x8xf32>
    %26 = vector.extract_strided_slice %6 {offsets = [0, 1, 1, 0], sizes = [1, 8, 8, 16], strides = [1, 1, 1, 1]} : vector<1x9x9x16xbf16> to vector<1x8x8x16xbf16>
    %27 = vector.shape_cast %26 : vector<1x8x8x16xbf16> to vector<64x16xbf16>
    %c3 = arith.constant 3 : index
    %c0_15 = arith.constant 0 : index
    %c0_16 = arith.constant 0 : index
    %28 = vector.load %arg2[%c3, %c0_15, %c0_16] : memref<4x16x8xbf16, #tpu.memory_space<vmem>>, vector<1x16x8xbf16>
    %29 = vector.shape_cast %28 : vector<1x16x8xbf16> to vector<16x8xbf16>
    %cst_17 = arith.constant dense<0.000000e+00> : vector<64x8xf32>
    %30 = tpu.matmul %27, %29, %cst_17 {dimension_numbers = #tpu.dot_dimension_numbers<[1], [0], [0], [1], [0, 0, 1, 1], [], []>} : vector<64x16xbf16>, vector<16x8xbf16>, vector<64x8xf32> -> vector<64x8xf32>
    %31 = arith.addf %25, %30 : vector<64x8xf32>
    %cst_18 = arith.constant 0.000000e+00 : f32
    %32 = vector.broadcast %cst_18 : f32 to vector<64x8xf32>
    %33 = arith.maximumf %31, %32 : vector<64x8xf32>
    %34 = arith.truncf %33 : vector<64x8xf32> to vector<64x8xbf16>
    %cst_19 = arith.constant 0.000000e+00 : bf16
    %35 = vector.broadcast %cst_19 : bf16 to vector<1x10x10x8xbf16>
    %c0_20 = arith.constant 0 : index
    %c0_21 = arith.constant 0 : index
    %c0_22 = arith.constant 0 : index
    %c0_23 = arith.constant 0 : index
    %36 = vector.load %arg3[%c0_20, %c0_21, %c0_22, %c0_23] : memref<1x10x10x8xbf16, #tpu.memory_space<vmem>>, vector<1x10x10x8xbf16>
    tpu.vector_store %arg3[%c0_20, %c0_21, %c0_22, %c0_23], %35 {strides = array<i32>} : memref<1x10x10x8xbf16, #tpu.memory_space<vmem>>, vector<1x10x10x8xbf16>,
    %37 = vector.shape_cast %34 : vector<64x8xbf16> to vector<1x8x8x8xbf16>
    %c0_24 = arith.constant 0 : index
    %c1_25 = arith.constant 1 : index
    %c1_26 = arith.constant 1 : index
    %c0_27 = arith.constant 0 : index
    %38 = vector.load %arg3[%c0_24, %c1_25, %c1_26, %c0_27] : memref<1x10x10x8xbf16, #tpu.memory_space<vmem>>, vector<1x8x8x8xbf16>
    tpu.vector_store %arg3[%c0_24, %c1_25, %c1_26, %c0_27], %37 {strides = array<i32>} : memref<1x10x10x8xbf16, #tpu.memory_space<vmem>>, vector<1x8x8x8xbf16>,
    return
  }
  func.func @transform_0(%arg0: i32) -> (i32, i32, i32, i32) {
    %c0_i32 = arith.constant 0 : i32
    %c0_i32_0 = arith.constant 0 : i32
    %c0_i32_1 = arith.constant 0 : i32
    %c0_i32_2 = arith.constant 0 : i32
    return %arg0, %c0_i32, %c0_i32_0, %c0_i32_1 : i32, i32, i32, i32
  }
  func.func @transform_1(%arg0: i32) -> (i32, i32, i32) {
    %c0_i32 = arith.constant 0 : i32
    %c0_i32_0 = arith.constant 0 : i32
    %c0_i32_1 = arith.constant 0 : i32
    %c0_i32_2 = arith.constant 0 : i32
    return %c0_i32, %c0_i32_0, %c0_i32_1 : i32, i32, i32
  }
  func.func @transform_2(%arg0: i32) -> (i32, i32, i32, i32) {
    %c0_i32 = arith.constant 0 : i32
    %c0_i32_0 = arith.constant 0 : i32
    %c0_i32_1 = arith.constant 0 : i32
    %c0_i32_2 = arith.constant 0 : i32
    return %arg0, %c0_i32, %c0_i32_0, %c0_i32_1 : i32, i32, i32, i32
  }
}

module attributes {stable_mosaic.version = 11 : i64} {
  func.func @_bn_kernel(%arg0: i32, %arg1: memref<256x4xbf16, #tpu.memory_space<vmem>>, %arg2: memref<1x4xf32, #tpu.memory_space<vmem>>, %arg3: memref<1x4xf32, #tpu.memory_space<vmem>>, %arg4: memref<256x4xf32, #tpu.memory_space<vmem>>) attributes {dimension_semantics = [#tpu.dimension_semantics<parallel>], iteration_bounds = array<i64: 2>, scalar_prefetch = 0 : i64, scratch_operands = 0 : i64, tpu.core_type = #tpu.core_type<tc>, window_params = [{transform_indices = @transform_0, window_bounds = array<i64: 256, 4>}, {pipeline_mode = #tpu.pipeline_mode<synchronous>, transform_indices = @transform_1, window_bounds = array<i64: 1, 4>}, {pipeline_mode = #tpu.pipeline_mode<synchronous>, transform_indices = @transform_2, window_bounds = array<i64: 1, 4>}, {transform_indices = @transform_3, window_bounds = array<i64: 256, 4>}]} {
    %c0 = arith.constant 0 : index
    %c0_0 = arith.constant 0 : index
    %0 = vector.load %arg1[%c0, %c0_0] : memref<256x4xbf16, #tpu.memory_space<vmem>>, vector<256x4xbf16>
    %1 = arith.extf %0 : vector<256x4xbf16> to vector<256x4xf32>
    %c0_1 = arith.constant 0 : index
    %c0_2 = arith.constant 0 : index
    %2 = vector.load %arg2[%c0_1, %c0_2] : memref<1x4xf32, #tpu.memory_space<vmem>>, vector<1x4xf32>
    %3 = vector.broadcast %2 : vector<1x4xf32> to vector<256x4xf32>
    %4 = arith.mulf %1, %3 : vector<256x4xf32>
    %c0_3 = arith.constant 0 : index
    %c0_4 = arith.constant 0 : index
    %5 = vector.load %arg3[%c0_3, %c0_4] : memref<1x4xf32, #tpu.memory_space<vmem>>, vector<1x4xf32>
    %6 = vector.broadcast %5 : vector<1x4xf32> to vector<256x4xf32>
    %7 = arith.addf %4, %6 : vector<256x4xf32>
    %c0_5 = arith.constant 0 : index
    %c0_6 = arith.constant 0 : index
    %8 = vector.load %arg4[%c0_5, %c0_6] : memref<256x4xf32, #tpu.memory_space<vmem>>, vector<256x4xf32>
    tpu.vector_store %arg4[%c0_5, %c0_6], %7 {strides = array<i32>} : memref<256x4xf32, #tpu.memory_space<vmem>>, vector<256x4xf32>,
    return
  }
  func.func @transform_0(%arg0: i32) -> (i32, i32) {
    %c0_i32 = arith.constant 0 : i32
    %c0_i32_0 = arith.constant 0 : i32
    return %arg0, %c0_i32 : i32, i32
  }
  func.func @transform_1(%arg0: i32) -> (i32, i32) {
    %c0_i32 = arith.constant 0 : i32
    %c0_i32_0 = arith.constant 0 : i32
    %c0_i32_1 = arith.constant 0 : i32
    return %c0_i32, %c0_i32_0 : i32, i32
  }
  func.func @transform_2(%arg0: i32) -> (i32, i32) {
    %c0_i32 = arith.constant 0 : i32
    %c0_i32_0 = arith.constant 0 : i32
    %c0_i32_1 = arith.constant 0 : i32
    return %c0_i32, %c0_i32_0 : i32, i32
  }
  func.func @transform_3(%arg0: i32) -> (i32, i32) {
    %c0_i32 = arith.constant 0 : i32
    %c0_i32_0 = arith.constant 0 : i32
    return %arg0, %c0_i32 : i32, i32
  }
}

module attributes {stable_mosaic.version = 11 : i64} {
  func.func @_up_kernel(%arg0: i32, %arg1: memref<1x10x10x8xbf16, #tpu.memory_space<vmem>>, %arg2: memref<16x8x4xbf16, #tpu.memory_space<vmem>>, %arg3: memref<1x8x2x8x8xbf16, #tpu.memory_space<vmem>>, %arg4: memref<1x1x4xf32, #tpu.memory_space<vmem>>, %arg5: memref<1x1x4xf32, #tpu.memory_space<vmem>>) attributes {dimension_semantics = [#tpu.dimension_semantics<parallel>], iteration_bounds = array<i64: 2>, scalar_prefetch = 0 : i64, scratch_operands = 0 : i64, tpu.core_type = #tpu.core_type<tc>, window_params = [{transform_indices = @transform_0, window_bounds = array<i64: 1, 10, 10, 8>}, {pipeline_mode = #tpu.pipeline_mode<synchronous>, transform_indices = @transform_1, window_bounds = array<i64: 16, 8, 4>}, {transform_indices = @transform_2, window_bounds = array<i64: 1, 8, 2, 8, 8>}, {transform_indices = @transform_3, window_bounds = array<i64: 1, 1, 4>}, {transform_indices = @transform_4, window_bounds = array<i64: 1, 1, 4>}]} {
    %c0 = arith.constant 0 : index
    %c0_0 = arith.constant 0 : index
    %c0_1 = arith.constant 0 : index
    %c0_2 = arith.constant 0 : index
    %0 = vector.load %arg1[%c0, %c0_0, %c0_1, %c0_2] : memref<1x10x10x8xbf16, #tpu.memory_space<vmem>>, vector<1x10x10x8xbf16>
    %cst = arith.constant 0.000000e+00 : f32
    %1 = vector.broadcast %cst : f32 to vector<1x4xf32>
    %cst_3 = arith.constant 0.000000e+00 : f32
    %2 = vector.broadcast %cst_3 : f32 to vector<1x4xf32>
    %cst_4 = arith.constant 0.000000e+00 : f32
    %3 = vector.broadcast %cst_4 : f32 to vector<64x4xf32>
    %4 = vector.extract_strided_slice %0 {offsets = [0, 0, 0, 0], sizes = [1, 8, 8, 8], strides = [1, 1, 1, 1]} : vector<1x10x10x8xbf16> to vector<1x8x8x8xbf16>
    %5 = vector.shape_cast %4 : vector<1x8x8x8xbf16> to vector<64x8xbf16>
    %c0_5 = arith.constant 0 : index
    %c0_6 = arith.constant 0 : index
    %c0_7 = arith.constant 0 : index
    %6 = vector.load %arg2[%c0_5, %c0_6, %c0_7] : memref<16x8x4xbf16, #tpu.memory_space<vmem>>, vector<1x8x4xbf16>
    %7 = vector.shape_cast %6 : vector<1x8x4xbf16> to vector<8x4xbf16>
    %cst_8 = arith.constant dense<0.000000e+00> : vector<64x4xf32>
    %8 = tpu.matmul %5, %7, %cst_8 {dimension_numbers = #tpu.dot_dimension_numbers<[1], [0], [0], [1], [0, 0, 1, 1], [], []>} : vector<64x8xbf16>, vector<8x4xbf16>, vector<64x4xf32> -> vector<64x4xf32>
    %9 = arith.addf %3, %8 : vector<64x4xf32>
    %10 = vector.extract_strided_slice %0 {offsets = [0, 0, 1, 0], sizes = [1, 8, 8, 8], strides = [1, 1, 1, 1]} : vector<1x10x10x8xbf16> to vector<1x8x8x8xbf16>
    %11 = vector.shape_cast %10 : vector<1x8x8x8xbf16> to vector<64x8xbf16>
    %c1 = arith.constant 1 : index
    %c0_9 = arith.constant 0 : index
    %c0_10 = arith.constant 0 : index
    %12 = vector.load %arg2[%c1, %c0_9, %c0_10] : memref<16x8x4xbf16, #tpu.memory_space<vmem>>, vector<1x8x4xbf16>
    %13 = vector.shape_cast %12 : vector<1x8x4xbf16> to vector<8x4xbf16>
    %cst_11 = arith.constant dense<0.000000e+00> : vector<64x4xf32>
    %14 = tpu.matmul %11, %13, %cst_11 {dimension_numbers = #tpu.dot_dimension_numbers<[1], [0], [0], [1], [0, 0, 1, 1], [], []>} : vector<64x8xbf16>, vector<8x4xbf16>, vector<64x4xf32> -> vector<64x4xf32>
    %15 = arith.addf %9, %14 : vector<64x4xf32>
    %16 = vector.extract_strided_slice %0 {offsets = [0, 1, 0, 0], sizes = [1, 8, 8, 8], strides = [1, 1, 1, 1]} : vector<1x10x10x8xbf16> to vector<1x8x8x8xbf16>
    %17 = vector.shape_cast %16 : vector<1x8x8x8xbf16> to vector<64x8xbf16>
    %c2 = arith.constant 2 : index
    %c0_12 = arith.constant 0 : index
    %c0_13 = arith.constant 0 : index
    %18 = vector.load %arg2[%c2, %c0_12, %c0_13] : memref<16x8x4xbf16, #tpu.memory_space<vmem>>, vector<1x8x4xbf16>
    %19 = vector.shape_cast %18 : vector<1x8x4xbf16> to vector<8x4xbf16>
    %cst_14 = arith.constant dense<0.000000e+00> : vector<64x4xf32>
    %20 = tpu.matmul %17, %19, %cst_14 {dimension_numbers = #tpu.dot_dimension_numbers<[1], [0], [0], [1], [0, 0, 1, 1], [], []>} : vector<64x8xbf16>, vector<8x4xbf16>, vector<64x4xf32> -> vector<64x4xf32>
    %21 = arith.addf %15, %20 : vector<64x4xf32>
    %22 = vector.extract_strided_slice %0 {offsets = [0, 1, 1, 0], sizes = [1, 8, 8, 8], strides = [1, 1, 1, 1]} : vector<1x10x10x8xbf16> to vector<1x8x8x8xbf16>
    %23 = vector.shape_cast %22 : vector<1x8x8x8xbf16> to vector<64x8xbf16>
    %c3 = arith.constant 3 : index
    %c0_15 = arith.constant 0 : index
    %c0_16 = arith.constant 0 : index
    %24 = vector.load %arg2[%c3, %c0_15, %c0_16] : memref<16x8x4xbf16, #tpu.memory_space<vmem>>, vector<1x8x4xbf16>
    %25 = vector.shape_cast %24 : vector<1x8x4xbf16> to vector<8x4xbf16>
    %cst_17 = arith.constant dense<0.000000e+00> : vector<64x4xf32>
    %26 = tpu.matmul %23, %25, %cst_17 {dimension_numbers = #tpu.dot_dimension_numbers<[1], [0], [0], [1], [0, 0, 1, 1], [], []>} : vector<64x8xbf16>, vector<8x4xbf16>, vector<64x4xf32> -> vector<64x4xf32>
    %27 = arith.addf %21, %26 : vector<64x4xf32>
    %cst_18 = arith.constant dense<0.000000e+00> : vector<4xf32>
    %28 = vector.multi_reduction <add>, %27, %cst_18 [0] : vector<64x4xf32> to vector<4xf32>
    %29 = vector.shape_cast %28 : vector<4xf32> to vector<1x4xf32>
    %30 = arith.addf %1, %29 : vector<1x4xf32>
    %31 = arith.mulf %27, %27 : vector<64x4xf32>
    %cst_19 = arith.constant dense<0.000000e+00> : vector<4xf32>
    %32 = vector.multi_reduction <add>, %31, %cst_19 [0] : vector<64x4xf32> to vector<4xf32>
    %33 = vector.shape_cast %32 : vector<4xf32> to vector<1x4xf32>
    %34 = arith.addf %2, %33 : vector<1x4xf32>
    %35 = vector.shape_cast %27 : vector<64x4xf32> to vector<1x8x1x8x4xf32>
    %36 = arith.truncf %35 : vector<1x8x1x8x4xf32> to vector<1x8x1x8x4xbf16>
    %c0_20 = arith.constant 0 : index
    %c0_21 = arith.constant 0 : index
    %c0_22 = arith.constant 0 : index
    %c0_23 = arith.constant 0 : index
    %c0_24 = arith.constant 0 : index
    %37 = vector.load %arg3[%c0_20, %c0_21, %c0_22, %c0_23, %c0_24] : memref<1x8x2x8x8xbf16, #tpu.memory_space<vmem>>, vector<1x8x1x8x4xbf16>
    tpu.vector_store %arg3[%c0_20, %c0_21, %c0_22, %c0_23, %c0_24], %36 {strides = array<i32>} : memref<1x8x2x8x8xbf16, #tpu.memory_space<vmem>>, vector<1x8x1x8x4xbf16>,
    %cst_25 = arith.constant 0.000000e+00 : f32
    %38 = vector.broadcast %cst_25 : f32 to vector<64x4xf32>
    %39 = vector.extract_strided_slice %0 {offsets = [0, 0, 1, 0], sizes = [1, 8, 8, 8], strides = [1, 1, 1, 1]} : vector<1x10x10x8xbf16> to vector<1x8x8x8xbf16>
    %40 = vector.shape_cast %39 : vector<1x8x8x8xbf16> to vector<64x8xbf16>
    %c4 = arith.constant 4 : index
    %c0_26 = arith.constant 0 : index
    %c0_27 = arith.constant 0 : index
    %41 = vector.load %arg2[%c4, %c0_26, %c0_27] : memref<16x8x4xbf16, #tpu.memory_space<vmem>>, vector<1x8x4xbf16>
    %42 = vector.shape_cast %41 : vector<1x8x4xbf16> to vector<8x4xbf16>
    %cst_28 = arith.constant dense<0.000000e+00> : vector<64x4xf32>
    %43 = tpu.matmul %40, %42, %cst_28 {dimension_numbers = #tpu.dot_dimension_numbers<[1], [0], [0], [1], [0, 0, 1, 1], [], []>} : vector<64x8xbf16>, vector<8x4xbf16>, vector<64x4xf32> -> vector<64x4xf32>
    %44 = arith.addf %38, %43 : vector<64x4xf32>
    %45 = vector.extract_strided_slice %0 {offsets = [0, 0, 2, 0], sizes = [1, 8, 8, 8], strides = [1, 1, 1, 1]} : vector<1x10x10x8xbf16> to vector<1x8x8x8xbf16>
    %46 = vector.shape_cast %45 : vector<1x8x8x8xbf16> to vector<64x8xbf16>
    %c5 = arith.constant 5 : index
    %c0_29 = arith.constant 0 : index
    %c0_30 = arith.constant 0 : index
    %47 = vector.load %arg2[%c5, %c0_29, %c0_30] : memref<16x8x4xbf16, #tpu.memory_space<vmem>>, vector<1x8x4xbf16>
    %48 = vector.shape_cast %47 : vector<1x8x4xbf16> to vector<8x4xbf16>
    %cst_31 = arith.constant dense<0.000000e+00> : vector<64x4xf32>
    %49 = tpu.matmul %46, %48, %cst_31 {dimension_numbers = #tpu.dot_dimension_numbers<[1], [0], [0], [1], [0, 0, 1, 1], [], []>} : vector<64x8xbf16>, vector<8x4xbf16>, vector<64x4xf32> -> vector<64x4xf32>
    %50 = arith.addf %44, %49 : vector<64x4xf32>
    %51 = vector.extract_strided_slice %0 {offsets = [0, 1, 1, 0], sizes = [1, 8, 8, 8], strides = [1, 1, 1, 1]} : vector<1x10x10x8xbf16> to vector<1x8x8x8xbf16>
    %52 = vector.shape_cast %51 : vector<1x8x8x8xbf16> to vector<64x8xbf16>
    %c6 = arith.constant 6 : index
    %c0_32 = arith.constant 0 : index
    %c0_33 = arith.constant 0 : index
    %53 = vector.load %arg2[%c6, %c0_32, %c0_33] : memref<16x8x4xbf16, #tpu.memory_space<vmem>>, vector<1x8x4xbf16>
    %54 = vector.shape_cast %53 : vector<1x8x4xbf16> to vector<8x4xbf16>
    %cst_34 = arith.constant dense<0.000000e+00> : vector<64x4xf32>
    %55 = tpu.matmul %52, %54, %cst_34 {dimension_numbers = #tpu.dot_dimension_numbers<[1], [0], [0], [1], [0, 0, 1, 1], [], []>} : vector<64x8xbf16>, vector<8x4xbf16>, vector<64x4xf32> -> vector<64x4xf32>
    %56 = arith.addf %50, %55 : vector<64x4xf32>
    %57 = vector.extract_strided_slice %0 {offsets = [0, 1, 2, 0], sizes = [1, 8, 8, 8], strides = [1, 1, 1, 1]} : vector<1x10x10x8xbf16> to vector<1x8x8x8xbf16>
    %58 = vector.shape_cast %57 : vector<1x8x8x8xbf16> to vector<64x8xbf16>
    %c7 = arith.constant 7 : index
    %c0_35 = arith.constant 0 : index
    %c0_36 = arith.constant 0 : index
    %59 = vector.load %arg2[%c7, %c0_35, %c0_36] : memref<16x8x4xbf16, #tpu.memory_space<vmem>>, vector<1x8x4xbf16>
    %60 = vector.shape_cast %59 : vector<1x8x4xbf16> to vector<8x4xbf16>
    %cst_37 = arith.constant dense<0.000000e+00> : vector<64x4xf32>
    %61 = tpu.matmul %58, %60, %cst_37 {dimension_numbers = #tpu.dot_dimension_numbers<[1], [0], [0], [1], [0, 0, 1, 1], [], []>} : vector<64x8xbf16>, vector<8x4xbf16>, vector<64x4xf32> -> vector<64x4xf32>
    %62 = arith.addf %56, %61 : vector<64x4xf32>
    %cst_38 = arith.constant dense<0.000000e+00> : vector<4xf32>
    %63 = vector.multi_reduction <add>, %62, %cst_38 [0] : vector<64x4xf32> to vector<4xf32>
    %64 = vector.shape_cast %63 : vector<4xf32> to vector<1x4xf32>
    %65 = arith.addf %30, %64 : vector<1x4xf32>
    %66 = arith.mulf %62, %62 : vector<64x4xf32>
    %cst_39 = arith.constant dense<0.000000e+00> : vector<4xf32>
    %67 = vector.multi_reduction <add>, %66, %cst_39 [0] : vector<64x4xf32> to vector<4xf32>
    %68 = vector.shape_cast %67 : vector<4xf32> to vector<1x4xf32>
    %69 = arith.addf %34, %68 : vector<1x4xf32>
    %70 = vector.shape_cast %62 : vector<64x4xf32> to vector<1x8x1x8x4xf32>
    %71 = arith.truncf %70 : vector<1x8x1x8x4xf32> to vector<1x8x1x8x4xbf16>
    %c0_40 = arith.constant 0 : index
    %c0_41 = arith.constant 0 : index
    %c0_42 = arith.constant 0 : index
    %c0_43 = arith.constant 0 : index
    %c4_44 = arith.constant 4 : index
    %72 = vector.load %arg3[%c0_40, %c0_41, %c0_42, %c0_43, %c4_44] : memref<1x8x2x8x8xbf16, #tpu.memory_space<vmem>>, vector<1x8x1x8x4xbf16>
    tpu.vector_store %arg3[%c0_40, %c0_41, %c0_42, %c0_43, %c4_44], %71 {strides = array<i32>} : memref<1x8x2x8x8xbf16, #tpu.memory_space<vmem>>, vector<1x8x1x8x4xbf16>,
    %cst_45 = arith.constant 0.000000e+00 : f32
    %73 = vector.broadcast %cst_45 : f32 to vector<64x4xf32>
    %74 = vector.extract_strided_slice %0 {offsets = [0, 1, 0, 0], sizes = [1, 8, 8, 8], strides = [1, 1, 1, 1]} : vector<1x10x10x8xbf16> to vector<1x8x8x8xbf16>
    %75 = vector.shape_cast %74 : vector<1x8x8x8xbf16> to vector<64x8xbf16>
    %c8 = arith.constant 8 : index
    %c0_46 = arith.constant 0 : index
    %c0_47 = arith.constant 0 : index
    %76 = vector.load %arg2[%c8, %c0_46, %c0_47] : memref<16x8x4xbf16, #tpu.memory_space<vmem>>, vector<1x8x4xbf16>
    %77 = vector.shape_cast %76 : vector<1x8x4xbf16> to vector<8x4xbf16>
    %cst_48 = arith.constant dense<0.000000e+00> : vector<64x4xf32>
    %78 = tpu.matmul %75, %77, %cst_48 {dimension_numbers = #tpu.dot_dimension_numbers<[1], [0], [0], [1], [0, 0, 1, 1], [], []>} : vector<64x8xbf16>, vector<8x4xbf16>, vector<64x4xf32> -> vector<64x4xf32>
    %79 = arith.addf %73, %78 : vector<64x4xf32>
    %80 = vector.extract_strided_slice %0 {offsets = [0, 1, 1, 0], sizes = [1, 8, 8, 8], strides = [1, 1, 1, 1]} : vector<1x10x10x8xbf16> to vector<1x8x8x8xbf16>
    %81 = vector.shape_cast %80 : vector<1x8x8x8xbf16> to vector<64x8xbf16>
    %c9 = arith.constant 9 : index
    %c0_49 = arith.constant 0 : index
    %c0_50 = arith.constant 0 : index
    %82 = vector.load %arg2[%c9, %c0_49, %c0_50] : memref<16x8x4xbf16, #tpu.memory_space<vmem>>, vector<1x8x4xbf16>
    %83 = vector.shape_cast %82 : vector<1x8x4xbf16> to vector<8x4xbf16>
    %cst_51 = arith.constant dense<0.000000e+00> : vector<64x4xf32>
    %84 = tpu.matmul %81, %83, %cst_51 {dimension_numbers = #tpu.dot_dimension_numbers<[1], [0], [0], [1], [0, 0, 1, 1], [], []>} : vector<64x8xbf16>, vector<8x4xbf16>, vector<64x4xf32> -> vector<64x4xf32>
    %85 = arith.addf %79, %84 : vector<64x4xf32>
    %86 = vector.extract_strided_slice %0 {offsets = [0, 2, 0, 0], sizes = [1, 8, 8, 8], strides = [1, 1, 1, 1]} : vector<1x10x10x8xbf16> to vector<1x8x8x8xbf16>
    %87 = vector.shape_cast %86 : vector<1x8x8x8xbf16> to vector<64x8xbf16>
    %c10 = arith.constant 10 : index
    %c0_52 = arith.constant 0 : index
    %c0_53 = arith.constant 0 : index
    %88 = vector.load %arg2[%c10, %c0_52, %c0_53] : memref<16x8x4xbf16, #tpu.memory_space<vmem>>, vector<1x8x4xbf16>
    %89 = vector.shape_cast %88 : vector<1x8x4xbf16> to vector<8x4xbf16>
    %cst_54 = arith.constant dense<0.000000e+00> : vector<64x4xf32>
    %90 = tpu.matmul %87, %89, %cst_54 {dimension_numbers = #tpu.dot_dimension_numbers<[1], [0], [0], [1], [0, 0, 1, 1], [], []>} : vector<64x8xbf16>, vector<8x4xbf16>, vector<64x4xf32> -> vector<64x4xf32>
    %91 = arith.addf %85, %90 : vector<64x4xf32>
    %92 = vector.extract_strided_slice %0 {offsets = [0, 2, 1, 0], sizes = [1, 8, 8, 8], strides = [1, 1, 1, 1]} : vector<1x10x10x8xbf16> to vector<1x8x8x8xbf16>
    %93 = vector.shape_cast %92 : vector<1x8x8x8xbf16> to vector<64x8xbf16>
    %c11 = arith.constant 11 : index
    %c0_55 = arith.constant 0 : index
    %c0_56 = arith.constant 0 : index
    %94 = vector.load %arg2[%c11, %c0_55, %c0_56] : memref<16x8x4xbf16, #tpu.memory_space<vmem>>, vector<1x8x4xbf16>
    %95 = vector.shape_cast %94 : vector<1x8x4xbf16> to vector<8x4xbf16>
    %cst_57 = arith.constant dense<0.000000e+00> : vector<64x4xf32>
    %96 = tpu.matmul %93, %95, %cst_57 {dimension_numbers = #tpu.dot_dimension_numbers<[1], [0], [0], [1], [0, 0, 1, 1], [], []>} : vector<64x8xbf16>, vector<8x4xbf16>, vector<64x4xf32> -> vector<64x4xf32>
    %97 = arith.addf %91, %96 : vector<64x4xf32>
    %cst_58 = arith.constant dense<0.000000e+00> : vector<4xf32>
    %98 = vector.multi_reduction <add>, %97, %cst_58 [0] : vector<64x4xf32> to vector<4xf32>
    %99 = vector.shape_cast %98 : vector<4xf32> to vector<1x4xf32>
    %100 = arith.addf %65, %99 : vector<1x4xf32>
    %101 = arith.mulf %97, %97 : vector<64x4xf32>
    %cst_59 = arith.constant dense<0.000000e+00> : vector<4xf32>
    %102 = vector.multi_reduction <add>, %101, %cst_59 [0] : vector<64x4xf32> to vector<4xf32>
    %103 = vector.shape_cast %102 : vector<4xf32> to vector<1x4xf32>
    %104 = arith.addf %69, %103 : vector<1x4xf32>
    %105 = vector.shape_cast %97 : vector<64x4xf32> to vector<1x8x1x8x4xf32>
    %106 = arith.truncf %105 : vector<1x8x1x8x4xf32> to vector<1x8x1x8x4xbf16>
    %c0_60 = arith.constant 0 : index
    %c0_61 = arith.constant 0 : index
    %c1_62 = arith.constant 1 : index
    %c0_63 = arith.constant 0 : index
    %c0_64 = arith.constant 0 : index
    %107 = vector.load %arg3[%c0_60, %c0_61, %c1_62, %c0_63, %c0_64] : memref<1x8x2x8x8xbf16, #tpu.memory_space<vmem>>, vector<1x8x1x8x4xbf16>
    tpu.vector_store %arg3[%c0_60, %c0_61, %c1_62, %c0_63, %c0_64], %106 {strides = array<i32>} : memref<1x8x2x8x8xbf16, #tpu.memory_space<vmem>>, vector<1x8x1x8x4xbf16>,
    %cst_65 = arith.constant 0.000000e+00 : f32
    %108 = vector.broadcast %cst_65 : f32 to vector<64x4xf32>
    %109 = vector.extract_strided_slice %0 {offsets = [0, 1, 1, 0], sizes = [1, 8, 8, 8], strides = [1, 1, 1, 1]} : vector<1x10x10x8xbf16> to vector<1x8x8x8xbf16>
    %110 = vector.shape_cast %109 : vector<1x8x8x8xbf16> to vector<64x8xbf16>
    %c12 = arith.constant 12 : index
    %c0_66 = arith.constant 0 : index
    %c0_67 = arith.constant 0 : index
    %111 = vector.load %arg2[%c12, %c0_66, %c0_67] : memref<16x8x4xbf16, #tpu.memory_space<vmem>>, vector<1x8x4xbf16>
    %112 = vector.shape_cast %111 : vector<1x8x4xbf16> to vector<8x4xbf16>
    %cst_68 = arith.constant dense<0.000000e+00> : vector<64x4xf32>
    %113 = tpu.matmul %110, %112, %cst_68 {dimension_numbers = #tpu.dot_dimension_numbers<[1], [0], [0], [1], [0, 0, 1, 1], [], []>} : vector<64x8xbf16>, vector<8x4xbf16>, vector<64x4xf32> -> vector<64x4xf32>
    %114 = arith.addf %108, %113 : vector<64x4xf32>
    %115 = vector.extract_strided_slice %0 {offsets = [0, 1, 2, 0], sizes = [1, 8, 8, 8], strides = [1, 1, 1, 1]} : vector<1x10x10x8xbf16> to vector<1x8x8x8xbf16>
    %116 = vector.shape_cast %115 : vector<1x8x8x8xbf16> to vector<64x8xbf16>
    %c13 = arith.constant 13 : index
    %c0_69 = arith.constant 0 : index
    %c0_70 = arith.constant 0 : index
    %117 = vector.load %arg2[%c13, %c0_69, %c0_70] : memref<16x8x4xbf16, #tpu.memory_space<vmem>>, vector<1x8x4xbf16>
    %118 = vector.shape_cast %117 : vector<1x8x4xbf16> to vector<8x4xbf16>
    %cst_71 = arith.constant dense<0.000000e+00> : vector<64x4xf32>
    %119 = tpu.matmul %116, %118, %cst_71 {dimension_numbers = #tpu.dot_dimension_numbers<[1], [0], [0], [1], [0, 0, 1, 1], [], []>} : vector<64x8xbf16>, vector<8x4xbf16>, vector<64x4xf32> -> vector<64x4xf32>
    %120 = arith.addf %114, %119 : vector<64x4xf32>
    %121 = vector.extract_strided_slice %0 {offsets = [0, 2, 1, 0], sizes = [1, 8, 8, 8], strides = [1, 1, 1, 1]} : vector<1x10x10x8xbf16> to vector<1x8x8x8xbf16>
    %122 = vector.shape_cast %121 : vector<1x8x8x8xbf16> to vector<64x8xbf16>
    %c14 = arith.constant 14 : index
    %c0_72 = arith.constant 0 : index
    %c0_73 = arith.constant 0 : index
    %123 = vector.load %arg2[%c14, %c0_72, %c0_73] : memref<16x8x4xbf16, #tpu.memory_space<vmem>>, vector<1x8x4xbf16>
    %124 = vector.shape_cast %123 : vector<1x8x4xbf16> to vector<8x4xbf16>
    %cst_74 = arith.constant dense<0.000000e+00> : vector<64x4xf32>
    %125 = tpu.matmul %122, %124, %cst_74 {dimension_numbers = #tpu.dot_dimension_numbers<[1], [0], [0], [1], [0, 0, 1, 1], [], []>} : vector<64x8xbf16>, vector<8x4xbf16>, vector<64x4xf32> -> vector<64x4xf32>
    %126 = arith.addf %120, %125 : vector<64x4xf32>
    %127 = vector.extract_strided_slice %0 {offsets = [0, 2, 2, 0], sizes = [1, 8, 8, 8], strides = [1, 1, 1, 1]} : vector<1x10x10x8xbf16> to vector<1x8x8x8xbf16>
    %128 = vector.shape_cast %127 : vector<1x8x8x8xbf16> to vector<64x8xbf16>
    %c15 = arith.constant 15 : index
    %c0_75 = arith.constant 0 : index
    %c0_76 = arith.constant 0 : index
    %129 = vector.load %arg2[%c15, %c0_75, %c0_76] : memref<16x8x4xbf16, #tpu.memory_space<vmem>>, vector<1x8x4xbf16>
    %130 = vector.shape_cast %129 : vector<1x8x4xbf16> to vector<8x4xbf16>
    %cst_77 = arith.constant dense<0.000000e+00> : vector<64x4xf32>
    %131 = tpu.matmul %128, %130, %cst_77 {dimension_numbers = #tpu.dot_dimension_numbers<[1], [0], [0], [1], [0, 0, 1, 1], [], []>} : vector<64x8xbf16>, vector<8x4xbf16>, vector<64x4xf32> -> vector<64x4xf32>
    %132 = arith.addf %126, %131 : vector<64x4xf32>
    %cst_78 = arith.constant dense<0.000000e+00> : vector<4xf32>
    %133 = vector.multi_reduction <add>, %132, %cst_78 [0] : vector<64x4xf32> to vector<4xf32>
    %134 = vector.shape_cast %133 : vector<4xf32> to vector<1x4xf32>
    %135 = arith.addf %100, %134 : vector<1x4xf32>
    %136 = arith.mulf %132, %132 : vector<64x4xf32>
    %cst_79 = arith.constant dense<0.000000e+00> : vector<4xf32>
    %137 = vector.multi_reduction <add>, %136, %cst_79 [0] : vector<64x4xf32> to vector<4xf32>
    %138 = vector.shape_cast %137 : vector<4xf32> to vector<1x4xf32>
    %139 = arith.addf %104, %138 : vector<1x4xf32>
    %140 = vector.shape_cast %132 : vector<64x4xf32> to vector<1x8x1x8x4xf32>
    %141 = arith.truncf %140 : vector<1x8x1x8x4xf32> to vector<1x8x1x8x4xbf16>
    %c0_80 = arith.constant 0 : index
    %c0_81 = arith.constant 0 : index
    %c1_82 = arith.constant 1 : index
    %c0_83 = arith.constant 0 : index
    %c4_84 = arith.constant 4 : index
    %142 = vector.load %arg3[%c0_80, %c0_81, %c1_82, %c0_83, %c4_84] : memref<1x8x2x8x8xbf16, #tpu.memory_space<vmem>>, vector<1x8x1x8x4xbf16>
    tpu.vector_store %arg3[%c0_80, %c0_81, %c1_82, %c0_83, %c4_84], %141 {strides = array<i32>} : memref<1x8x2x8x8xbf16, #tpu.memory_space<vmem>>, vector<1x8x1x8x4xbf16>,
    %143 = vector.shape_cast %135 : vector<1x4xf32> to vector<1x1x4xf32>
    %c0_85 = arith.constant 0 : index
    %c0_86 = arith.constant 0 : index
    %c0_87 = arith.constant 0 : index
    %144 = vector.load %arg4[%c0_85, %c0_86, %c0_87] : memref<1x1x4xf32, #tpu.memory_space<vmem>>, vector<1x1x4xf32>
    tpu.vector_store %arg4[%c0_85, %c0_86, %c0_87], %143 {strides = array<i32>} : memref<1x1x4xf32, #tpu.memory_space<vmem>>, vector<1x1x4xf32>,
    %145 = vector.shape_cast %139 : vector<1x4xf32> to vector<1x1x4xf32>
    %c0_88 = arith.constant 0 : index
    %c0_89 = arith.constant 0 : index
    %c0_90 = arith.constant 0 : index
    %146 = vector.load %arg5[%c0_88, %c0_89, %c0_90] : memref<1x1x4xf32, #tpu.memory_space<vmem>>, vector<1x1x4xf32>
    tpu.vector_store %arg5[%c0_88, %c0_89, %c0_90], %145 {strides = array<i32>} : memref<1x1x4xf32, #tpu.memory_space<vmem>>, vector<1x1x4xf32>,
    return
  }
  func.func @transform_0(%arg0: i32) -> (i32, i32, i32, i32) {
    %c0_i32 = arith.constant 0 : i32
    %c0_i32_0 = arith.constant 0 : i32
    %c0_i32_1 = arith.constant 0 : i32
    %c0_i32_2 = arith.constant 0 : i32
    return %arg0, %c0_i32, %c0_i32_0, %c0_i32_1 : i32, i32, i32, i32
  }
  func.func @transform_1(%arg0: i32) -> (i32, i32, i32) {
    %c0_i32 = arith.constant 0 : i32
    %c0_i32_0 = arith.constant 0 : i32
    %c0_i32_1 = arith.constant 0 : i32
    %c0_i32_2 = arith.constant 0 : i32
    return %c0_i32, %c0_i32_0, %c0_i32_1 : i32, i32, i32
  }
  func.func @transform_2(%arg0: i32) -> (i32, i32, i32, i32, i32) {
    %c0_i32 = arith.constant 0 : i32
    %c0_i32_0 = arith.constant 0 : i32
    %c0_i32_1 = arith.constant 0 : i32
    %c0_i32_2 = arith.constant 0 : i32
    %c0_i32_3 = arith.constant 0 : i32
    return %arg0, %c0_i32, %c0_i32_0, %c0_i32_1, %c0_i32_2 : i32, i32, i32, i32, i32
  }
  func.func @transform_3(%arg0: i32) -> (i32, i32, i32) {
    %c0_i32 = arith.constant 0 : i32
    %c0_i32_0 = arith.constant 0 : i32
    %c0_i32_1 = arith.constant 0 : i32
    return %arg0, %c0_i32, %c0_i32_0 : i32, i32, i32
  }
  func.func @transform_4(%arg0: i32) -> (i32, i32, i32) {
    %c0_i32 = arith.constant 0 : i32
    %c0_i32_0 = arith.constant 0 : i32
    %c0_i32_1 = arith.constant 0 : i32
    return %arg0, %c0_i32, %c0_i32_0 : i32, i32, i32
  }
}

</mosaic_0001>

<llo_original>
// kernel: unet_innermost_forward.3
$region0: #{unet_innermost_forward.3}
  #allocation0 [shape = 'u32[]', space=smem, size = 0x4, offset = 0x4, fixed_abs, tag = 'smem constant byte address 0x4 - core index']
  #allocation1 [shape = 'u32[144,128]{1,0:T(1,128)}', space=vmem, size = 0x12000, scoped, tag = 'internal scratch']
  %s0 = inlined_call_operand.hbm [shape: f32[2,9,9,16], index: 0, kind: input, shape index: {}]
  %s1 = inlined_call_operand.hbm [shape: bf16[4,16,8], index: 1, kind: input, shape index: {}]
  %s2 = inlined_call_operand.hbm [shape: bf16[2,10,10,8], index: 2, kind: output, shape index: {}]
  %s3 = sld [smem:[#allocation0]]
  $region49: #{unet_innermost_forward.3} parent=0
    _
  %s5 = ssub.s32 1, %s3
  %s6 = scalar_select 0, %s5, %s3
  $region1: #{unet_innermost_forward.3} parent=0
    #allocation2 [shape = 'u8[147456]{0}', space=vmem, size = 0x24000, scoped, tag = 'input window, operand 0']
    #allocation3 [shape = 's32[2]{0}', space=sflag, size = 0x8, scoped, tag = 'scoped memory for unet_innermost_forward.3']
    #allocation4 [shape = 's32[2]{0}', space=sflag, size = 0x8, scoped, tag = 'scoped memory for unet_innermost_forward.3']
    #allocation5 [shape = 'u8[16384]{0}', space=vmem, size = 0x4000, scoped, tag = 'input window, operand 1, single buffered']
    #allocation6 [shape = 's32[1]{0}', space=sflag, size = 0x4, scoped, tag = 'scoped memory for unet_innermost_forward.3']
    #allocation7 [shape = 'u8[81920]{0}', space=vmem, size = 0x14000, scoped, tag = 'output window, operand 0']
    %7 = vsyncpa [#allocation3], 0
    %s8 = scalar_lea.sflag [#allocation3], 1
    %9 = vsyncpa %s8, 0
    %10 = vsyncpa [#allocation6], 0
    %11 = vsyncpa [#allocation4], 0
    %s12 = scalar_lea.sflag [#allocation4], 1
    %13 = vsyncpa %s12, 0
    loop: start=0, step=1, limit=4
    $region2: #{unet_innermost_forward.3} parent=1 // loop_pre_header
      _
    $region3: #{unet_innermost_forward.3} parent=1 // loop_header
      %s15 = sphi 0, %s19
      %p16 = scmp.ge.s32.totalorder %s15, 4
      %s25 = sphi 0, %s27
      %s28 = sphi 0, %s25
      %s29 = sphi 0, %s28
      %s45 = sphi 0, %s29
      %s49 = sphi 0, %s49
      %s51 = sphi 0, %s49
      %s52 = sphi 0, %s51
      %s66 = sphi 0, %s52
      %s72 = sphi 0, %s74
      %s75 = sphi 0, %s72
      %s76 = sphi 0, %s75
      %s92 = sphi 0, %s76
    $region4: #{unet_innermost_forward.3} parent=1 // loop_header_branch
      %18 = sbr.rel (%p16) target = $region8
    $region5: #{unet_innermost_forward.3} parent=1 // loop_body
      %s20 = ssub.s32 %s15, 1
      %s21 = ssub.s32 %s15, 2
      %s22 = sadd.s32 %s15, 1
      %s23 = ssub.s32 %s15, %s22
      %p24 = scmp.eq.s32.totalorder %s23, 0
      %s26 = sadd.s32 %s25, 1
      %s27 = scalar_select %p24, %s25, %s26
      %p30 = pneg %p24
      %p31 = scmp.eq.s32.totalorder %s15, 1
      %p32 = por %p30, %p31
      %p33 = scmp.ne.s32.totalorder %s25, %s28
      %p34 = scmp.eq.s32.totalorder %s15, 0
      %p35 = por %p33, %p34
      %p36 = scmp.ne.s32.totalorder %s25, %s28
      %p37 = scmp.eq.s32.totalorder %s20, 1
      %p38 = por %p36, %p37
      %p39 = scmp.ne.s32.totalorder %s28, %s29
      %p40 = scmp.eq.s32.totalorder %s20, 0
      %p41 = por %p39, %p40
      %p42 = scmp.ne.s32.totalorder %s28, %s29
      %p43 = scmp.eq.s32.totalorder %s21, 1
      %p44 = por %p42, %p43
      %p46 = scmp.ne.s32.totalorder %s29, %s45
      %p47 = scmp.eq.s32.totalorder %s21, 0
      %p48 = por %p46, %p47
      %s50 = sadd.s32 %s49, 1
      %p53 = scmp.eq.s32.totalorder %s15, 1
      %p54 = scmp.ne.s32.totalorder %s49, %s51
      %p55 = scmp.eq.s32.totalorder %s15, 0
      %p56 = por %p54, %p55
      %p57 = scmp.ne.s32.totalorder %s49, %s51
      %p58 = scmp.eq.s32.totalorder %s20, 1
      %p59 = por %p57, %p58
      %p60 = scmp.ne.s32.totalorder %s51, %s52
      %p61 = scmp.eq.s32.totalorder %s20, 0
      %p62 = por %p60, %p61
      %p63 = scmp.ne.s32.totalorder %s51, %s52
      %p64 = scmp.eq.s32.totalorder %s21, 1
      %p65 = por %p63, %p64
      %p67 = scmp.ne.s32.totalorder %s52, %s66
      %p68 = scmp.eq.s32.totalorder %s21, 0
      %p69 = por %p67, %p68
      %s70 = ssub.s32 %s15, %s22
      %p71 = scmp.eq.s32.totalorder %s70, 0
      %s73 = sadd.s32 %s72, 1
      %s74 = scalar_select %p71, %s72, %s73
      %p77 = pneg %p71
      %p78 = scmp.eq.s32.totalorder %s15, 1
      %p79 = por %p77, %p78
      %p80 = scmp.ne.s32.totalorder %s72, %s75
      %p81 = scmp.eq.s32.totalorder %s15, 0
      %p82 = por %p80, %p81
      %p83 = scmp.ne.s32.totalorder %s72, %s75
      %p84 = scmp.eq.s32.totalorder %s20, 1
      %p85 = por %p83, %p84
      %p86 = scmp.ne.s32.totalorder %s75, %s76
      %p87 = scmp.eq.s32.totalorder %s20, 0
      %p88 = por %p86, %p87
      %p89 = scmp.ne.s32.totalorder %s75, %s76
      %p90 = scmp.eq.s32.totalorder %s21, 1
      %p91 = por %p89, %p90
      %p93 = scmp.ne.s32.totalorder %s76, %s92
      %p94 = scmp.eq.s32.totalorder %s21, 0
      %p95 = por %p93, %p94
      %p96 = scmp.le.s32.totalorder 1, %s15
      %p97 = scmp.lt.s32.totalorder %s15, 3
      %p98 = pnand %p96, %p97
      %p99 = pneg %p98
      // Predicated region
      $region9: #{unet_innermost_forward.3} parent=5 // pred_check
        _
      $region10: #{unet_innermost_forward.3} parent=5 // pred_check_branch
        %101 = sbr.rel (%p98) target = $region12
      $region11: #{unet_innermost_forward.3} parent=5 // pred_region
        %s102 = ssub.s32 %s15, 1
        // Predicated region
        $region13: #{unet_innermost_forward.3} parent=11 // pred_check
          %p103 = pneg %p62
        $region14: #{unet_innermost_forward.3} parent=11 // pred_check_branch
          %105 = sbr.rel (%p103) target = $region16
        $region15: #{unet_innermost_forward.3} parent=11 // pred_region
          %s107 = ssub.s32 512, 512
          %108 = vsyncadd [#allocation6], %s107
          %s109 = sshll.u32 [#allocation5], 4
          %s110 = int_to_ptr.vmem [resolvable:$true] %s109
          %115 = dma.hbm_to_vmem [thread:$0]  %s1, 512, %s110, [#allocation6], 64, 64, 4
        $region16: #{unet_innermost_forward.3} parent=11 // pred_fallthru
          _
      $region12: #{unet_innermost_forward.3} parent=5 // pred_fallthru
        _
      %p116 = scmp.lt.s32.totalorder %s15, 2
      // Predicated region
      $region17: #{unet_innermost_forward.3} parent=5 // pred_check
        %p117 = pneg %p116
      $region18: #{unet_innermost_forward.3} parent=5 // pred_check_branch
        %119 = sbr.rel (%p117) target = $region20
      $region19: #{unet_innermost_forward.3} parent=5 // pred_region
        // Predicated region
        $region21: #{unet_innermost_forward.3} parent=19 // pred_check
          %p120 = pneg %p35
        $region22: #{unet_innermost_forward.3} parent=19 // pred_check_branch
          %122 = sbr.rel (%p120) target = $region24
        $region23: #{unet_innermost_forward.3} parent=19 // pred_region
          %s123 = sand.u32 %s25, 1
          %s124 = scalar_lea.sflag [#allocation3], %s123
          %s125 = sand.u32 %s25, 1
          %s126 = smul.addr %s125, 144
          %s127 = scalar_lea.vmem [#allocation2], %s126
          %s129 = ssub.s32 2304, 2304
          %130 = vsyncadd %s124, %s129
          %s131 = smul.addr %s15, 18
          %s132 = smul.addr %s131, 128
          %s133 = scalar_lea.hbm %s0, %s132
          %s134 = sshll.u32 %s127, 4
          %s135 = int_to_ptr.vmem [resolvable:$true] %s134
          %140 = dma.hbm_to_vmem [thread:$0]  %s133, 2304, %s135, %s124, 128, 128, 8
        $region24: #{unet_innermost_forward.3} parent=19 // pred_fallthru
          _
      $region20: #{unet_innermost_forward.3} parent=5 // pred_fallthru
        _
      %p141 = scmp.le.s32.totalorder 1, %s15
      %p142 = scmp.lt.s32.totalorder %s15, 3
      %p143 = pnand %p141, %p142
      %p144 = pneg %p143
      // Predicated region
      $region25: #{unet_innermost_forward.3} parent=5 // pred_check
        _
      $region26: #{unet_innermost_forward.3} parent=5 // pred_check_branch
        %146 = sbr.rel (%p143) target = $region28
      $region27: #{unet_innermost_forward.3} parent=5 // pred_region
        %s147 = ssub.s32 %s15, 1
        %s148 = sand.u32 %s28, 1
        %s149 = scalar_lea.sflag [#allocation3], %s148
        %s150 = sand.u32 %s28, 1
        %s151 = smul.addr %s150, 144
        %s152 = scalar_lea.vmem [#allocation2], %s151
        // Predicated region
        $region29: #{unet_innermost_forward.3} parent=27 // pred_check
          %p153 = pneg %p41
        $region30: #{unet_innermost_forward.3} parent=27 // pred_check_branch
          %155 = sbr.rel (%p153) target = $region32
        $region31: #{unet_innermost_forward.3} parent=27 // pred_region
          %156 = dma.done %s149, 2304
        $region32: #{unet_innermost_forward.3} parent=27 // pred_fallthru
          _
        // Predicated region
        $region33: #{unet_innermost_forward.3} parent=27 // pred_check
          %p157 = pneg %p62
        $region34: #{unet_innermost_forward.3} parent=27 // pred_check_branch
          %159 = sbr.rel (%p157) target = $region36
        $region35: #{unet_innermost_forward.3} parent=27 // pred_region
          %160 = dma.done [#allocation6], 512
        $region36: #{unet_innermost_forward.3} parent=27 // pred_fallthru
          _
        %s161 = sand.u32 %s28, 1
        %s162 = scalar_lea.sflag [#allocation3], %s161
        %s163 = sand.u32 %s28, 1
        %s164 = smul.addr %s163, 144
        %s165 = scalar_lea.vmem [#allocation2], %s164
        %p166 = pneg %p41
        %p167 = pneg %p38
        %p168 = pneg %p62
        %p169 = pneg %p59
        %p170 = pneg %p88
        %p171 = pneg %p85
        %s172 = sand.u32 %s75, 1
        %s173 = scalar_lea.sflag [#allocation4], %s172
        %s174 = sand.u32 %s75, 1
        %s175 = smul.addr %s174, 80
        %s176 = scalar_lea.vmem [#allocation7], %s175
        %v178 = vld [vmem:[%s152] sm:$0xff]
        %v179 = vld [vmem:[%s152 + $0x8] sm:$0x1]
        %v180 = vld [vmem:[%s152 + $0x10] sm:$0xff]
        %v181 = vld [vmem:[%s152 + $0x18] sm:$0x1]
        %v182 = vld [vmem:[%s152 + $0x20] sm:$0xff]
        %v183 = vld [vmem:[%s152 + $0x28] sm:$0x1]
        %v184 = vld [vmem:[%s152 + $0x30] sm:$0xff]
        %v185 = vld [vmem:[%s152 + $0x38] sm:$0x1]
        %v186 = vld [vmem:[%s152 + $0x40] sm:$0xff]
        %v187 = vld [vmem:[%s152 + $0x48] sm:$0x1]
        %v188 = vld [vmem:[%s152 + $0x50] sm:$0xff]
        %v189 = vld [vmem:[%s152 + $0x58] sm:$0x1]
        %v190 = vld [vmem:[%s152 + $0x60] sm:$0xff]
        %v191 = vld [vmem:[%s152 + $0x68] sm:$0x1]
        %v192 = vld [vmem:[%s152 + $0x70] sm:$0xff]
        %v193 = vld [vmem:[%s152 + $0x78] sm:$0x1]
        %v194 = vld [vmem:[%s152 + $0x80] sm:$0xff]
        %v195 = vld [vmem:[%s152 + $0x88] sm:$0x1]
        %vm196 = vcmp.gt.f32.partialorder %v178, 0.0
        %vm197 = vcmp.gt.f32.partialorder %v179, 0.0
        %vm198 = vcmp.gt.f32.partialorder %v180, 0.0
        %vm199 = vcmp.gt.f32.partialorder %v181, 0.0
        %vm200 = vcmp.gt.f32.partialorder %v182, 0.0
        %vm201 = vcmp.gt.f32.partialorder %v183, 0.0
        %vm202 = vcmp.gt.f32.partialorder %v184, 0.0
        %vm203 = vcmp.gt.f32.partialorder %v185, 0.0
        %vm204 = vcmp.gt.f32.partialorder %v186, 0.0
        %vm205 = vcmp.gt.f32.partialorder %v187, 0.0
        %vm206 = vcmp.gt.f32.partialorder %v188, 0.0
        %vm207 = vcmp.gt.f32.partialorder %v189, 0.0
        %vm208 = vcmp.gt.f32.partialorder %v190, 0.0
        %vm209 = vcmp.gt.f32.partialorder %v191, 0.0
        %vm210 = vcmp.gt.f32.partialorder %v192, 0.0
        %vm211 = vcmp.gt.f32.partialorder %v193, 0.0
        %vm212 = vcmp.gt.f32.partialorder %v194, 0.0
        %vm213 = vcmp.gt.f32.partialorder %v195, 0.0
        %v214 = vmul.f32 %v178, 0.2
        %v215 = vmul.f32 %v179, 0.2
        %v216 = vmul.f32 %v180, 0.2
        %v217 = vmul.f32 %v181, 0.2
        %v218 = vmul.f32 %v182, 0.2
        %v219 = vmul.f32 %v183, 0.2
        %v220 = vmul.f32 %v184, 0.2
        %v221 = vmul.f32 %v185, 0.2
        %v222 = vmul.f32 %v186, 0.2
        %v223 = vmul.f32 %v187, 0.2
        %v224 = vmul.f32 %v188, 0.2
        %v225 = vmul.f32 %v189, 0.2
        %v226 = vmul.f32 %v190, 0.2
        %v227 = vmul.f32 %v191, 0.2
        %v228 = vmul.f32 %v192, 0.2
        %v229 = vmul.f32 %v193, 0.2
        %v230 = vmul.f32 %v194, 0.2
        %v231 = vmul.f32 %v195, 0.2
        %v232 = vsel %vm196, %v178, %v214
        %v233 = vsel %vm197, %v179, %v215
        %v234 = vsel %vm198, %v180, %v216
        %v235 = vsel %vm199, %v181, %v217
        %v236 = vsel %vm200, %v182, %v218
        %v237 = vsel %vm201, %v183, %v219
        %v238 = vsel %vm202, %v184, %v220
        %v239 = vsel %vm203, %v185, %v221
        %v240 = vsel %vm204, %v186, %v222
        %v241 = vsel %vm205, %v187, %v223
        %v242 = vsel %vm206, %v188, %v224
        %v243 = vsel %vm207, %v189, %v225
        %v244 = vsel %vm208, %v190, %v226
        %v245 = vsel %vm209, %v191, %v227
        %v246 = vsel %vm210, %v192, %v228
        %v247 = vsel %vm211, %v193, %v229
        %v248 = vsel %vm212, %v194, %v230
        %v249 = vsel %vm213, %v195, %v231
        %v250 = vpack.c.bf16 %v233, %v232
        %v251 = vpack.c.bf16 %v235, %v234
        %v252 = vpack.c.bf16 %v237, %v236
        %v253 = vpack.c.bf16 %v239, %v238
        %v254 = vpack.c.bf16 %v241, %v240
        %v255 = vpack.c.bf16 %v243, %v242
        %v256 = vpack.c.bf16 %v245, %v244
        %v257 = vpack.c.bf16 %v247, %v246
        %v258 = vpack.c.bf16 %v249, %v248
        %v259 = vld [vmem:[#allocation5] sm:$0xf]
        %v260 = vld [vmem:[#allocation5 + $0x4] sm:$0xf]
        %v269 = vunpack.c.l.b16 %v250
        %v270 = vunpack.c.h.b16 %v250
        %v271 = vunpack.c.l.b16 %v251
        %v272 = vunpack.c.h.b16 %v251
        %v273 = vunpack.c.l.b16 %v252
        %v274 = vunpack.c.h.b16 %v252
        %v275 = vunpack.c.l.b16 %v253
        %v276 = vunpack.c.h.b16 %v253
        %v277 = vunpack.c.l.b16 %v254
        %v278 = vunpack.c.h.b16 %v254
        %v279 = vunpack.c.l.b16 %v255
        %v280 = vunpack.c.h.b16 %v255
        %v281 = vunpack.c.l.b16 %v256
        %v282 = vunpack.c.h.b16 %v256
        %v283 = vunpack.c.l.b16 %v257
        %v284 = vunpack.c.h.b16 %v257
        %v285 = vpack.c.b16 %v269, %v269
        %v286 = vpack.c.b16 %v270, %v270
        %v287 = vpack.c.b16 %v271, %v271
        %v288 = vpack.c.b16 %v272, %v272
        %v289 = vpack.c.b16 %v273, %v273
        %v290 = vpack.c.b16 %v274, %v274
        %v291 = vpack.c.b16 %v275, %v275
        %v292 = vpack.c.b16 %v276, %v276
        %v293 = vpack.c.b16 %v277, %v277
        %v294 = vpack.c.b16 %v278, %v278
        %v295 = vpack.c.b16 %v279, %v279
        %v296 = vpack.c.b16 %v280, %v280
        %v297 = vpack.c.b16 %v281, %v281
        %v298 = vpack.c.b16 %v282, %v282
        %v299 = vpack.c.b16 %v283, %v283
        %v300 = vpack.c.b16 %v284, %v284
        %vm301 = vsmask.f32 3328
        %vm302 = vsmask.f32 7440
        %vm303 = vmor %vm301, %vm302
        %v305 = vshrl.u32 %v285, 16
        %v307 = vrot.slane %v305, 4
        %v308 = vshll.u32 %v285, 16
        %v310 = vrot.slane %v308, 5
        %v311 = vor.u32 %v307, %v310
        %v312 = vrot.slane %v311, 4
        %v314 = vshll.u32 %v286, 16
        %v316 = vrot.slane %v314, 5
        %v317 = vsel %vm303, %v312, %v316
        %v319 = vshrl.u32 %v287, 16
        %v321 = vrot.slane %v319, 4
        %v322 = vshll.u32 %v287, 16
        %v324 = vrot.slane %v322, 5
        %v325 = vor.u32 %v321, %v324
        %v326 = vrot.slane %v325, 4
        %v328 = vshll.u32 %v288, 16
        %v330 = vrot.slane %v328, 5
        %v331 = vsel %vm303, %v326, %v330
        %v333 = vshrl.u32 %v289, 16
        %v335 = vrot.slane %v333, 4
        %v336 = vshll.u32 %v289, 16
        %v338 = vrot.slane %v336, 5
        %v339 = vor.u32 %v335, %v338
        %v340 = vrot.slane %v339, 4
        %v342 = vshll.u32 %v290, 16
        %v344 = vrot.slane %v342, 5
        %v345 = vsel %vm303, %v340, %v344
        %v347 = vshrl.u32 %v291, 16
        %v349 = vrot.slane %v347, 4
        %v350 = vshll.u32 %v291, 16
        %v352 = vrot.slane %v350, 5
        %v353 = vor.u32 %v349, %v352
        %v354 = vrot.slane %v353, 4
        %v356 = vshll.u32 %v292, 16
        %v358 = vrot.slane %v356, 5
        %v359 = vsel %vm303, %v354, %v358
        %v361 = vshrl.u32 %v293, 16
        %v363 = vrot.slane %v361, 4
        %v364 = vshll.u32 %v293, 16
        %v366 = vrot.slane %v364, 5
        %v367 = vor.u32 %v363, %v366
        %v368 = vrot.slane %v367, 4
        %v370 = vshll.u32 %v294, 16
        %v372 = vrot.slane %v370, 5
        %v373 = vsel %vm303, %v368, %v372
        %v375 = vshrl.u32 %v295, 16
        %v377 = vrot.slane %v375, 4
        %v378 = vshll.u32 %v295, 16
        %v380 = vrot.slane %v378, 5
        %v381 = vor.u32 %v377, %v380
        %v382 = vrot.slane %v381, 4
        %v384 = vshll.u32 %v296, 16
        %v386 = vrot.slane %v384, 5
        %v387 = vsel %vm303, %v382, %v386
        %v389 = vshrl.u32 %v297, 16
        %v391 = vrot.slane %v389, 4
        %v392 = vshll.u32 %v297, 16
        %v394 = vrot.slane %v392, 5
        %v395 = vor.u32 %v391, %v394
        %v396 = vrot.slane %v395, 4
        %v398 = vshll.u32 %v298, 16
        %v400 = vrot.slane %v398, 5
        %v401 = vsel %vm303, %v396, %v400
        %v403 = vshrl.u32 %v299, 16
        %v405 = vrot.slane %v403, 4
        %v406 = vshll.u32 %v299, 16
        %v408 = vrot.slane %v406, 5
        %v409 = vor.u32 %v405, %v408
        %v410 = vrot.slane %v409, 4
        %v412 = vshll.u32 %v300, 16
        %v414 = vrot.slane %v412, 5
        %v415 = vsel %vm303, %v410, %v414
        %s416 = scalar_lea.vmem [#allocation5], 8
        %v417 = vld [vmem:[%s416] sm:$0xf]
        %v418 = vld [vmem:[%s416 + $0x4] sm:$0xf]
        %v419 = vunpack.c.l.b16 %v317
        %v420 = vunpack.c.l.b16 %v331
        %v421 = vunpack.c.l.b16 %v345
        %v422 = vunpack.c.l.b16 %v359
        %v423 = vunpack.c.l.b16 %v373
        %v424 = vunpack.c.l.b16 %v387
        %v425 = vunpack.c.l.b16 %v401
        %v426 = vunpack.c.l.b16 %v415
        %v427 = vpack.c.b16 %v420, %v419
        %v428 = vpack.c.b16 %v422, %v421
        %v429 = vpack.c.b16 %v424, %v423
        %v430 = vpack.c.b16 %v426, %v425
        %v433 = vunpack.c.l.b16 %v417
        %v434 = vunpack.c.l.b16 %v418
        %v435 = vpack.c.b16 %v434, %v433
        %vm437 = vcmask 130048
        %v439 = vsel %vm437, %v427, 0
        %v442 = vsel %vm437, %v428, 0
        %v445 = vsel %vm437, %v429, 0
        %v448 = vsel %vm437, %v430, 0
        %450 = vmatprep.subr.bf16.mxu0 0
        %451 = vmatpush1.bf16.msra.mxu0 %v435
        %452 = vmatprep.subr.bf16.mxu0 0
        %453 = vmatpush1.bf16.msra.mxu0 0
        %454 = vmatprep.subr.bf16.mxu0 0
        %455 = vmatpush1.bf16.msra.mxu0 0
        %456 = vmatprep.subr.bf16.mxu0 0
        %457 = vmatpush1.bf16.msra.mxu0 0
        %458 = vmatprep.subr.bf16.mxu0 0
        %459 = vmatpush1.bf16.msra.mxu0 0
        %460 = vmatprep.subr.bf16.mxu0 0
        %461 = vmatpush1.bf16.msra.mxu0 0
        %462 = vmatprep.subr.bf16.mxu0 0
        %463 = vmatpush1.bf16.msra.mxu0 0
        %464 = vmatprep.subr.bf16.mxu0 0
        %465 = vmatpush1.bf16.msra.mxu0 0
        %466 = vmatprep.subr.bf16.mxu0 0
        %467 = vmatpush1.bf16.msra.mxu0 0
        %468 = vmatprep.subr.bf16.mxu0 0
        %469 = vmatpush1.bf16.msra.mxu0 0
        %470 = vmatprep.subr.bf16.mxu0 0
        %471 = vmatpush1.bf16.msra.mxu0 0
        %472 = vmatprep.subr.bf16.mxu0 0
        %473 = vmatpush1.bf16.msra.mxu0 0
        %474 = vmatprep.subr.bf16.mxu0 0
        %475 = vmatpush1.bf16.msra.mxu0 0
        %476 = vmatprep.subr.bf16.mxu0 0
        %477 = vmatpush1.bf16.msra.mxu0 0
        %478 = vmatprep.subr.bf16.mxu0 0
        %479 = vmatpush1.bf16.msra.mxu0 0
        %480 = vmatprep.subr.bf16.mxu0 0
        %481 = vmatpush1.bf16.msra.mxu0 0
        %482 = vmatprep.mubr.bf16.mxu0 0
        %483 = vmatmul.mubr.bf16.gmra.mrb[0].mxu0 %v439
        %v484 = vpop.f32.mrb[0].mxu0
        %v485 = vadd.f32 0.0, %v484
        %v486 = vpop.f32.mrb[0].mxu0
        %v487 = vpop.f32.mrb[0].mxu0
        %v488 = vadd.f32 0.0, %v487
        %v489 = vpop.f32.mrb[0].mxu0
        %490 = vmatprep.mubr.bf16.mxu0 0
        %491 = vmatmul.mubr.bf16.gmra.mrb[0].mxu0 %v442
        %v492 = vpop.f32.mrb[0].mxu0
        %v493 = vadd.f32 0.0, %v492
        %v494 = vpop.f32.mrb[0].mxu0
        %v495 = vpop.f32.mrb[0].mxu0
        %v496 = vadd.f32 0.0, %v495
        %v497 = vpop.f32.mrb[0].mxu0
        %498 = vmatprep.mubr.bf16.mxu0 0
        %499 = vmatmul.mubr.bf16.gmra.mrb[0].mxu0 %v445
        %v500 = vpop.f32.mrb[0].mxu0
        %v501 = vadd.f32 0.0, %v500
        %v502 = vpop.f32.mrb[0].mxu0
        %v503 = vpop.f32.mrb[0].mxu0
        %v504 = vadd.f32 0.0, %v503
        %v505 = vpop.f32.mrb[0].mxu0
        %506 = vmatprep.mubr.bf16.mxu0 0
        %507 = vmatmul.mubr.bf16.gmra.mrb[0].mxu0 %v448
        %v508 = vpop.f32.mrb[0].mxu0
        %v509 = vadd.f32 0.0, %v508
        %v510 = vpop.f32.mrb[0].mxu0
        %v511 = vpop.f32.mrb[0].mxu0
        %v512 = vadd.f32 0.0, %v511
        %v513 = vpop.f32.mrb[0].mxu0
        %514 = vdwg.mxu0
        %v515 = vpack.c.b16 %v271, %v269
        %v516 = vpack.c.b16 %v275, %v273
        %v517 = vpack.c.b16 %v279, %v277
        %v518 = vpack.c.b16 %v283, %v281
        %v521 = vunpack.c.l.b16 %v259
        %v522 = vunpack.c.l.b16 %v260
        %v523 = vpack.c.b16 %v522, %v521
        %v526 = vsel %vm437, %v515, 0
        %v529 = vsel %vm437, %v516, 0
        %v532 = vsel %vm437, %v517, 0
        %v535 = vsel %vm437, %v518, 0
        %537 = vmatprep.subr.bf16.mxu0 0
        %538 = vmatpush1.bf16.msra.mxu0 %v523
        %539 = vmatprep.subr.bf16.mxu0 0
        %540 = vmatpush1.bf16.msra.mxu0 0
        %541 = vmatprep.subr.bf16.mxu0 0
        %542 = vmatpush1.bf16.msra.mxu0 0
        %543 = vmatprep.subr.bf16.mxu0 0
        %544 = vmatpush1.bf16.msra.mxu0 0
        %545 = vmatprep.subr.bf16.mxu0 0
        %546 = vmatpush1.bf16.msra.mxu0 0
        %547 = vmatprep.subr.bf16.mxu0 0
        %548 = vmatpush1.bf16.msra.mxu0 0
        %549 = vmatprep.subr.bf16.mxu0 0
        %550 = vmatpush1.bf16.msra.mxu0 0
        %551 = vmatprep.subr.bf16.mxu0 0
        %552 = vmatpush1.bf16.msra.mxu0 0
        %553 = vmatprep.subr.bf16.mxu0 0
        %554 = vmatpush1.bf16.msra.mxu0 0
        %555 = vmatprep.subr.bf16.mxu0 0
        %556 = vmatpush1.bf16.msra.mxu0 0
        %557 = vmatprep.subr.bf16.mxu0 0
        %558 = vmatpush1.bf16.msra.mxu0 0
        %559 = vmatprep.subr.bf16.mxu0 0
        %560 = vmatpush1.bf16.msra.mxu0 0
        %561 = vmatprep.subr.bf16.mxu0 0
        %562 = vmatpush1.bf16.msra.mxu0 0
        %563 = vmatprep.subr.bf16.mxu0 0
        %564 = vmatpush1.bf16.msra.mxu0 0
        %565 = vmatprep.subr.bf16.mxu0 0
        %566 = vmatpush1.bf16.msra.mxu0 0
        %567 = vmatprep.subr.bf16.mxu0 0
        %568 = vmatpush1.bf16.msra.mxu0 0
        %569 = vmatprep.mubr.bf16.mxu0 0
        %570 = vmatmul.mubr.bf16.gmra.mrb[0].mxu0 %v526
        %v571 = vpop.f32.mrb[0].mxu0
        %v572 = vadd.f32 %v485, %v571
        %v573 = vpop.f32.mrb[0].mxu0
        %v574 = vpop.f32.mrb[0].mxu0
        %v575 = vadd.f32 %v488, %v574
        %v576 = vpop.f32.mrb[0].mxu0
        %577 = vmatprep.mubr.bf16.mxu0 0
        %578 = vmatmul.mubr.bf16.gmra.mrb[0].mxu0 %v529
        %v579 = vpop.f32.mrb[0].mxu0
        %v580 = vadd.f32 %v493, %v579
        %v581 = vpop.f32.mrb[0].mxu0
        %v582 = vpop.f32.mrb[0].mxu0
        %v583 = vadd.f32 %v496, %v582
        %v584 = vpop.f32.mrb[0].mxu0
        %585 = vmatprep.mubr.bf16.mxu0 0
        %586 = vmatmul.mubr.bf16.gmra.mrb[0].mxu0 %v532
        %v587 = vpop.f32.mrb[0].mxu0
        %v588 = vadd.f32 %v501, %v587
        %v589 = vpop.f32.mrb[0].mxu0
        %v590 = vpop.f32.mrb[0].mxu0
        %v591 = vadd.f32 %v504, %v590
        %v592 = vpop.f32.mrb[0].mxu0
        %593 = vmatprep.mubr.bf16.mxu0 0
        %594 = vmatmul.mubr.bf16.gmra.mrb[0].mxu0 %v535
        %v595 = vpop.f32.mrb[0].mxu0
        %v596 = vadd.f32 %v509, %v595
        %v597 = vpop.f32.mrb[0].mxu0
        %v598 = vpop.f32.mrb[0].mxu0
        %v599 = vadd.f32 %v512, %v598
        %v600 = vpop.f32.mrb[0].mxu0
        %601 = vdwg.mxu0
        %s602 = scalar_lea.vmem [#allocation5], 16
        %v603 = vld [vmem:[%s602] sm:$0xf]
        %v604 = vld [vmem:[%s602 + $0x4] sm:$0xf]
        %v606 = vunpack.c.l.b16 %v258
        %v607 = vpack.c.b16 %v273, %v271
        %v608 = vpack.c.b16 %v277, %v275
        %v609 = vpack.c.b16 %v281, %v279
        %v610 = vpack.c.b16 %v606, %v283
        %v613 = vunpack.c.l.b16 %v603
        %v614 = vunpack.c.l.b16 %v604
        %v615 = vpack.c.b16 %v614, %v613
        %v618 = vsel %vm437, %v607, 0
        %v621 = vsel %vm437, %v608, 0
        %v624 = vsel %vm437, %v609, 0
        %v627 = vsel %vm437, %v610, 0
        %629 = vmatprep.subr.bf16.mxu0 0
        %630 = vmatpush1.bf16.msra.mxu0 %v615
        %631 = vmatprep.subr.bf16.mxu0 0
        %632 = vmatpush1.bf16.msra.mxu0 0
        %633 = vmatprep.subr.bf16.mxu0 0
        %634 = vmatpush1.bf16.msra.mxu0 0
        %635 = vmatprep.subr.bf16.mxu0 0
        %636 = vmatpush1.bf16.msra.mxu0 0
        %637 = vmatprep.subr.bf16.mxu0 0
        %638 = vmatpush1.bf16.msra.mxu0 0
        %639 = vmatprep.subr.bf16.mxu0 0
        %640 = vmatpush1.bf16.msra.mxu0 0
        %641 = vmatprep.subr.bf16.mxu0 0
        %642 = vmatpush1.bf16.msra.mxu0 0
        %643 = vmatprep.subr.bf16.mxu0 0
        %644 = vmatpush1.bf16.msra.mxu0 0
        %645 = vmatprep.subr.bf16.mxu0 0
        %646 = vmatpush1.bf16.msra.mxu0 0
        %647 = vmatprep.subr.bf16.mxu0 0
        %648 = vmatpush1.bf16.msra.mxu0 0
        %649 = vmatprep.subr.bf16.mxu0 0
        %650 = vmatpush1.bf16.msra.mxu0 0
        %651 = vmatprep.subr.bf16.mxu0 0
        %652 = vmatpush1.bf16.msra.mxu0 0
        %653 = vmatprep.subr.bf16.mxu0 0
        %654 = vmatpush1.bf16.msra.mxu0 0
        %655 = vmatprep.subr.bf16.mxu0 0
        %656 = vmatpush1.bf16.msra.mxu0 0
        %657 = vmatprep.subr.bf16.mxu0 0
        %658 = vmatpush1.bf16.msra.mxu0 0
        %659 = vmatprep.subr.bf16.mxu0 0
        %660 = vmatpush1.bf16.msra.mxu0 0
        %661 = vmatprep.mubr.bf16.mxu0 0
        %662 = vmatmul.mubr.bf16.gmra.mrb[0].mxu0 %v618
        %v663 = vpop.f32.mrb[0].mxu0
        %v664 = vadd.f32 0.0, %v663
        %v665 = vpop.f32.mrb[0].mxu0
        %v666 = vpop.f32.mrb[0].mxu0
        %v667 = vadd.f32 0.0, %v666
        %v668 = vpop.f32.mrb[0].mxu0
        %669 = vmatprep.mubr.bf16.mxu0 0
        %670 = vmatmul.mubr.bf16.gmra.mrb[0].mxu0 %v621
        %v671 = vpop.f32.mrb[0].mxu0
        %v672 = vadd.f32 0.0, %v671
        %v673 = vpop.f32.mrb[0].mxu0
        %v674 = vpop.f32.mrb[0].mxu0
        %v675 = vadd.f32 0.0, %v674
        %v676 = vpop.f32.mrb[0].mxu0
        %677 = vmatprep.mubr.bf16.mxu0 0
        %678 = vmatmul.mubr.bf16.gmra.mrb[0].mxu0 %v624
        %v679 = vpop.f32.mrb[0].mxu0
        %v680 = vadd.f32 0.0, %v679
        %v681 = vpop.f32.mrb[0].mxu0
        %v682 = vpop.f32.mrb[0].mxu0
        %v683 = vadd.f32 0.0, %v682
        %v684 = vpop.f32.mrb[0].mxu0
        %685 = vmatprep.mubr.bf16.mxu0 0
        %686 = vmatmul.mubr.bf16.gmra.mrb[0].mxu0 %v627
        %v687 = vpop.f32.mrb[0].mxu0
        %v688 = vadd.f32 0.0, %v687
        %v689 = vpop.f32.mrb[0].mxu0
        %v690 = vpop.f32.mrb[0].mxu0
        %v691 = vadd.f32 0.0, %v690
        %v692 = vpop.f32.mrb[0].mxu0
        %693 = vdwg.mxu0
        %v694 = vadd.f32 %v572, %v664
        %v695 = vadd.f32 %v575, %v667
        %v696 = vadd.f32 %v580, %v672
        %v697 = vadd.f32 %v583, %v675
        %v698 = vadd.f32 %v588, %v680
        %v699 = vadd.f32 %v591, %v683
        %v700 = vadd.f32 %v596, %v688
        %v701 = vadd.f32 %v599, %v691
        %v702 = vunpack.c.h.b16 %v258
        %v703 = vpack.c.b16 %v606, %v606
        %v704 = vpack.c.b16 %v702, %v702
        %v706 = vshrl.u32 %v703, 16
        %v708 = vrot.slane %v706, 4
        %v709 = vshll.u32 %v703, 16
        %v711 = vrot.slane %v709, 5
        %v712 = vor.u32 %v708, %v711
        %v713 = vrot.slane %v712, 4
        %v715 = vshll.u32 %v704, 16
        %v717 = vrot.slane %v715, 5
        %v718 = vsel %vm303, %v713, %v717
        %s719 = scalar_lea.vmem [#allocation5], 24
        %v720 = vld [vmem:[%s719] sm:$0xf]
        %v721 = vld [vmem:[%s719 + $0x4] sm:$0xf]
        %v722 = vunpack.c.l.b16 %v718
        %v723 = vpack.c.b16 %v421, %v420
        %v724 = vpack.c.b16 %v423, %v422
        %v725 = vpack.c.b16 %v425, %v424
        %v726 = vpack.c.b16 %v722, %v426
        %v729 = vunpack.c.l.b16 %v720
        %v730 = vunpack.c.l.b16 %v721
        %v731 = vpack.c.b16 %v730, %v729
        %v734 = vsel %vm437, %v723, 0
        %v737 = vsel %vm437, %v724, 0
        %v740 = vsel %vm437, %v725, 0
        %v743 = vsel %vm437, %v726, 0
        %745 = vmatprep.subr.bf16.mxu0 0
        %746 = vmatpush1.bf16.msra.mxu0 %v731
        %747 = vmatprep.subr.bf16.mxu0 0
        %748 = vmatpush1.bf16.msra.mxu0 0
        %749 = vmatprep.subr.bf16.mxu0 0
        %750 = vmatpush1.bf16.msra.mxu0 0
        %751 = vmatprep.subr.bf16.mxu0 0
        %752 = vmatpush1.bf16.msra.mxu0 0
        %753 = vmatprep.subr.bf16.mxu0 0
        %754 = vmatpush1.bf16.msra.mxu0 0
        %755 = vmatprep.subr.bf16.mxu0 0
        %756 = vmatpush1.bf16.msra.mxu0 0
        %757 = vmatprep.subr.bf16.mxu0 0
        %758 = vmatpush1.bf16.msra.mxu0 0
        %759 = vmatprep.subr.bf16.mxu0 0
        %760 = vmatpush1.bf16.msra.mxu0 0
        %761 = vmatprep.subr.bf16.mxu0 0
        %762 = vmatpush1.bf16.msra.mxu0 0
        %763 = vmatprep.subr.bf16.mxu0 0
        %764 = vmatpush1.bf16.msra.mxu0 0
        %765 = vmatprep.subr.bf16.mxu0 0
        %766 = vmatpush1.bf16.msra.mxu0 0
        %767 = vmatprep.subr.bf16.mxu0 0
        %768 = vmatpush1.bf16.msra.mxu0 0
        %769 = vmatprep.subr.bf16.mxu0 0
        %770 = vmatpush1.bf16.msra.mxu0 0
        %771 = vmatprep.subr.bf16.mxu0 0
        %772 = vmatpush1.bf16.msra.mxu0 0
        %773 = vmatprep.subr.bf16.mxu0 0
        %774 = vmatpush1.bf16.msra.mxu0 0
        %775 = vmatprep.subr.bf16.mxu0 0
        %776 = vmatpush1.bf16.msra.mxu0 0
        %777 = vmatprep.mubr.bf16.mxu0 0
        %778 = vmatmul.mubr.bf16.gmra.mrb[0].mxu0 %v734
        %v779 = vpop.f32.mrb[0].mxu0
        %v780 = vadd.f32 0.0, %v779
        %v781 = vpop.f32.mrb[0].mxu0
        %v782 = vpop.f32.mrb[0].mxu0
        %v783 = vadd.f32 0.0, %v782
        %v784 = vpop.f32.mrb[0].mxu0
        %785 = vmatprep.mubr.bf16.mxu0 0
        %786 = vmatmul.mubr.bf16.gmra.mrb[0].mxu0 %v737
        %v787 = vpop.f32.mrb[0].mxu0
        %v788 = vadd.f32 0.0, %v787
        %v789 = vpop.f32.mrb[0].mxu0
        %v790 = vpop.f32.mrb[0].mxu0
        %v791 = vadd.f32 0.0, %v790
        %v792 = vpop.f32.mrb[0].mxu0
        %793 = vmatprep.mubr.bf16.mxu0 0
        %794 = vmatmul.mubr.bf16.gmra.mrb[0].mxu0 %v740
        %v795 = vpop.f32.mrb[0].mxu0
        %v796 = vadd.f32 0.0, %v795
        %v797 = vpop.f32.mrb[0].mxu0
        %v798 = vpop.f32.mrb[0].mxu0
        %v799 = vadd.f32 0.0, %v798
        %v800 = vpop.f32.mrb[0].mxu0
        %801 = vmatprep.mubr.bf16.mxu0 0
        %802 = vmatmul.mubr.bf16.gmra.mrb[0].mxu0 %v743
        %v803 = vpop.f32.mrb[0].mxu0
        %v804 = vadd.f32 0.0, %v803
        %v805 = vpop.f32.mrb[0].mxu0
        %v806 = vpop.f32.mrb[0].mxu0
        %v807 = vadd.f32 0.0, %v806
        %v808 = vpop.f32.mrb[0].mxu0
        %809 = vdwg.mxu0
        %v810 = vadd.f32 %v694, %v780
        %v811 = vadd.f32 %v695, %v783
        %v812 = vadd.f32 %v696, %v788
        %v813 = vadd.f32 %v697, %v791
        %v814 = vadd.f32 %v698, %v796
        %v815 = vadd.f32 %v699, %v799
        %v816 = vadd.f32 %v700, %v804
        %v817 = vadd.f32 %v701, %v807
        %v818 = vmax.f32 %v810, 0.0
        %v819 = vmax.f32 %v811, 0.0
        %v820 = vmax.f32 %v812, 0.0
        %v821 = vmax.f32 %v813, 0.0
        %v822 = vmax.f32 %v814, 0.0
        %v823 = vmax.f32 %v815, 0.0
        %v824 = vmax.f32 %v816, 0.0
        %v825 = vmax.f32 %v817, 0.0
        %v826 = vpack.c.bf16 %v819, %v818
        %v827 = vpack.c.bf16 %v821, %v820
        %v828 = vpack.c.bf16 %v823, %v822
        %v829 = vpack.c.bf16 %v825, %v824
        %vm830 = vcmask 60416
        %831 = vst.msk [vmem:[%s176] sm:$0xf] %vm830, 0
        %vm832 = vcmask 57344
        %833 = vst.msk [vmem:[%s176 + $0x4] sm:$0x1] %vm832, 0
        %834 = vst.msk [vmem:[%s176 + $0x8] sm:$0xf] %vm830, 0
        %835 = vst.msk [vmem:[%s176 + $0xc] sm:$0x1] %vm832, 0
        %836 = vst.msk [vmem:[%s176 + $0x10] sm:$0xf] %vm830, 0
        %837 = vst.msk [vmem:[%s176 + $0x14] sm:$0x1] %vm832, 0
        %838 = vst.msk [vmem:[%s176 + $0x18] sm:$0xf] %vm830, 0
        %839 = vst.msk [vmem:[%s176 + $0x1c] sm:$0x1] %vm832, 0
        %840 = vst.msk [vmem:[%s176 + $0x20] sm:$0xf] %vm830, 0
        %841 = vst.msk [vmem:[%s176 + $0x24] sm:$0x1] %vm832, 0
        %842 = vst.msk [vmem:[%s176 + $0x28] sm:$0xf] %vm830, 0
        %843 = vst.msk [vmem:[%s176 + $0x2c] sm:$0x1] %vm832, 0
        %844 = vst.msk [vmem:[%s176 + $0x30] sm:$0xf] %vm830, 0
        %845 = vst.msk [vmem:[%s176 + $0x34] sm:$0x1] %vm832, 0
        %846 = vst.msk [vmem:[%s176 + $0x38] sm:$0xf] %vm830, 0
        %847 = vst.msk [vmem:[%s176 + $0x3c] sm:$0x1] %vm832, 0
        %848 = vst.msk [vmem:[%s176 + $0x40] sm:$0xf] %vm830, 0
        %849 = vst.msk [vmem:[%s176 + $0x44] sm:$0x1] %vm832, 0
        %850 = vst.msk [vmem:[%s176 + $0x48] sm:$0xf] %vm830, 0
        %851 = vst.msk [vmem:[%s176 + $0x4c] sm:$0x1] %vm832, 0
        %v856 = vunpack.c.l.b16 %v826
        %v857 = vunpack.c.h.b16 %v826
        %v858 = vunpack.c.l.b16 %v827
        %v859 = vunpack.c.h.b16 %v827
        %v860 = vunpack.c.l.b16 %v828
        %v861 = vunpack.c.h.b16 %v828
        %v862 = vunpack.c.l.b16 %v829
        %v863 = vunpack.c.h.b16 %v829
        %v864 = vpack.c.b16 %v856, %v856
        %v865 = vpack.c.b16 %v857, %v857
        %v866 = vpack.c.b16 %v858, %v858
        %v867 = vpack.c.b16 %v859, %v859
        %v868 = vpack.c.b16 %v860, %v860
        %v869 = vpack.c.b16 %v861, %v861
        %v870 = vpack.c.b16 %v862, %v862
        %v871 = vpack.c.b16 %v863, %v863
        %v873 = vshrl.u32 %v864, 16
        %v875 = vrot.slane %v873, 7
        %v876 = vshll.u32 %v864, 16
        %v878 = vor.u32 %v875, %v876
        %v879 = vrot.slane %v875, 4
        %v881 = vshrl.u32 %v865, 16
        %v883 = vrot.slane %v881, 7
        %v884 = vshll.u32 %v865, 16
        %v886 = vor.u32 %v883, %v884
        %v887 = vrot.slane %v883, 4
        %v889 = vshrl.u32 %v866, 16
        %v891 = vrot.slane %v889, 7
        %v892 = vshll.u32 %v866, 16
        %v894 = vor.u32 %v891, %v892
        %v895 = vrot.slane %v891, 4
        %v897 = vshrl.u32 %v867, 16
        %v899 = vrot.slane %v897, 7
        %v900 = vshll.u32 %v867, 16
        %v902 = vor.u32 %v899, %v900
        %v903 = vrot.slane %v899, 4
        %v905 = vshrl.u32 %v868, 16
        %v907 = vrot.slane %v905, 7
        %v908 = vshll.u32 %v868, 16
        %v910 = vor.u32 %v907, %v908
        %v911 = vrot.slane %v907, 4
        %v913 = vshrl.u32 %v869, 16
        %v915 = vrot.slane %v913, 7
        %v916 = vshll.u32 %v869, 16
        %v918 = vor.u32 %v915, %v916
        %v919 = vrot.slane %v915, 4
        %v921 = vshrl.u32 %v870, 16
        %v923 = vrot.slane %v921, 7
        %v924 = vshll.u32 %v870, 16
        %v926 = vor.u32 %v923, %v924
        %v927 = vrot.slane %v923, 4
        %v929 = vshrl.u32 %v871, 16
        %v931 = vrot.slane %v929, 7
        %v932 = vshll.u32 %v871, 16
        %v934 = vor.u32 %v931, %v932
        %v935 = vrot.slane %v931, 4
        %s952 = scalar_lea.vmem %s176, 8 [#allocation7]
        %vm953 = vcmask 60416
        %vm954 = vsmask.f32 7938
        %vm955 = vmand %vm953, %vm954
        %v956 = vld [vmem:[%s952] sm:$0xf]
        %v957 = vsel %vm955, %v878, %v956
        %958 = vst [vmem:[%s952] sm:$0xf] %v957
        %vm959 = vcmask 57344
        %vm960 = vsmask.f32 256
        %vm961 = vmand %vm959, %vm960
        %v962 = vld [vmem:[%s952 + $0x4] sm:$0x1]
        %v963 = vsel %vm961, %v879, %v962
        %964 = vst [vmem:[%s952 + $0x4] sm:$0x1] %v963
        %v965 = vld [vmem:[%s952 + $0x8] sm:$0xf]
        %v966 = vsel %vm955, %v886, %v965
        %967 = vst [vmem:[%s952 + $0x8] sm:$0xf] %v966
        %v968 = vld [vmem:[%s952 + $0xc] sm:$0x1]
        %v969 = vsel %vm961, %v887, %v968
        %970 = vst [vmem:[%s952 + $0xc] sm:$0x1] %v969
        %v971 = vld [vmem:[%s952 + $0x10] sm:$0xf]
        %v972 = vsel %vm955, %v894, %v971
        %973 = vst [vmem:[%s952 + $0x10] sm:$0xf] %v972
        %v974 = vld [vmem:[%s952 + $0x14] sm:$0x1]
        %v975 = vsel %vm961, %v895, %v974
        %976 = vst [vmem:[%s952 + $0x14] sm:$0x1] %v975
        %v977 = vld [vmem:[%s952 + $0x18] sm:$0xf]
        %v978 = vsel %vm955, %v902, %v977
        %979 = vst [vmem:[%s952 + $0x18] sm:$0xf] %v978
        %v980 = vld [vmem:[%s952 + $0x1c] sm:$0x1]
        %v981 = vsel %vm961, %v903, %v980
        %982 = vst [vmem:[%s952 + $0x1c] sm:$0x1] %v981
        %v983 = vld [vmem:[%s952 + $0x20] sm:$0xf]
        %v984 = vsel %vm955, %v910, %v983
        %985 = vst [vmem:[%s952 + $0x20] sm:$0xf] %v984
        %v986 = vld [vmem:[%s952 + $0x24] sm:$0x1]
        %v987 = vsel %vm961, %v911, %v986
        %988 = vst [vmem:[%s952 + $0x24] sm:$0x1] %v987
        %v989 = vld [vmem:[%s952 + $0x28] sm:$0xf]
        %v990 = vsel %vm955, %v918, %v989
        %991 = vst [vmem:[%s952 + $0x28] sm:$0xf] %v990
        %v992 = vld [vmem:[%s952 + $0x2c] sm:$0x1]
        %v993 = vsel %vm961, %v919, %v992
        %994 = vst [vmem:[%s952 + $0x2c] sm:$0x1] %v993
        %v995 = vld [vmem:[%s952 + $0x30] sm:$0xf]
        %v996 = vsel %vm955, %v926, %v995
        %997 = vst [vmem:[%s952 + $0x30] sm:$0xf] %v996
        %v998 = vld [vmem:[%s952 + $0x34] sm:$0x1]
        %v999 = vsel %vm961, %v927, %v998
        %1000 = vst [vmem:[%s952 + $0x34] sm:$0x1] %v999
        %v1001 = vld [vmem:[%s952 + $0x38] sm:$0xf]
        %v1002 = vsel %vm955, %v934, %v1001
        %1003 = vst [vmem:[%s952 + $0x38] sm:$0xf] %v1002
        %v1004 = vld [vmem:[%s952 + $0x3c] sm:$0x1]
        %v1005 = vsel %vm961, %v935, %v1004
        %1006 = vst [vmem:[%s952 + $0x3c] sm:$0x1] %v1005
        %s1007 = sand.u32 %s75, 1
        %s1008 = scalar_lea.sflag [#allocation4], %s1007
        %s1009 = sand.u32 %s75, 1
        %s1010 = smul.addr %s1009, 80
        %s1011 = scalar_lea.vmem [#allocation7], %s1010
        // Predicated region
        $region37: #{unet_innermost_forward.3} parent=27 // pred_check
          %p1012 = pneg %p85
        $region38: #{unet_innermost_forward.3} parent=27 // pred_check_branch
          %1014 = sbr.rel (%p1012) target = $region40
        $region39: #{unet_innermost_forward.3} parent=27 // pred_region
          %s1016 = ssub.s32 1280, 1280
          %1017 = vsyncadd %s1008, %s1016
          %s1018 = smul.addr %s20, 20
          %s1019 = smul.addr %s1018, 64
          %s1020 = scalar_lea.hbm %s2, %s1019
          %s1021 = sshll.u32 %s1011, 4
          %s1022 = int_to_ptr.vmem [resolvable:$true] %s1021
          %1027 = dma.vmem_to_hbm [thread:$0]  %s1022, 1280, %s1020, %s1008, 64, 64, 4
        $region40: #{unet_innermost_forward.3} parent=27 // pred_fallthru
          _
      $region28: #{unet_innermost_forward.3} parent=5 // pred_fallthru
        _
      %p1028 = scmp.le.s32.totalorder 2, %s15
      // Predicated region
      $region41: #{unet_innermost_forward.3} parent=5 // pred_check
        %p1029 = pneg %p1028
      $region42: #{unet_innermost_forward.3} parent=5 // pred_check_branch
        %1031 = sbr.rel (%p1029) target = $region44
      $region43: #{unet_innermost_forward.3} parent=5 // pred_region
        %s1032 = ssub.s32 %s15, 2
        // Predicated region
        $region45: #{unet_innermost_forward.3} parent=43 // pred_check
          %p1033 = pneg %p91
        $region46: #{unet_innermost_forward.3} parent=43 // pred_check_branch
          %1035 = sbr.rel (%p1033) target = $region48
        $region47: #{unet_innermost_forward.3} parent=43 // pred_region
          %s1036 = sand.u32 %s76, 1
          %s1037 = scalar_lea.sflag [#allocation4], %s1036
          %s1038 = sand.u32 %s76, 1
          %s1039 = smul.addr %s1038, 80
          %s1040 = scalar_lea.vmem [#allocation7], %s1039
          %1041 = dma.done %s1037, 1280
        $region48: #{unet_innermost_forward.3} parent=43 // pred_fallthru
          _
      $region44: #{unet_innermost_forward.3} parent=5 // pred_fallthru
        _
    $region6: #{unet_innermost_forward.3} parent=1 // loop_footer
      %s19 = sadd.s32 1, %s15
    $region7: #{unet_innermost_forward.3} parent=1 // loop_footer_branch
      %14 = sbr.rel target = $region3
    $region8: #{unet_innermost_forward.3} parent=1 // loop_exit
      _
    %1042 = vsyncpa [#allocation3], 1
    %s1043 = scalar_lea.sflag [#allocation3], 1
    %1044 = vsyncpa %s1043, 1
    %1045 = vsyncpa [#allocation6], 1
    %1046 = vsyncpa [#allocation4], 1
    %s1047 = scalar_lea.sflag [#allocation4], 1
    %1048 = vsyncpa %s1047, 1

// kernel: unet_innermost_forward.5
$region0: #{unet_innermost_forward.5}
  #allocation0 [shape = 'u32[]', space=smem, size = 0x4, offset = 0x4, fixed_abs, tag = 'smem constant byte address 0x4 - core index']
  #allocation1 [shape = 'u32[144,128]{1,0:T(1,128)}', space=vmem, size = 0x12000, scoped, tag = 'internal scratch']
  %s0 = inlined_call_operand.hbm [shape: bf16[512,4], index: 0, kind: input, shape index: {}]
  %s1 = inlined_call_operand.hbm [shape: f32[1,4], index: 1, kind: input, shape index: {}]
  %s2 = inlined_call_operand.hbm [shape: f32[1,4], index: 2, kind: input, shape index: {}]
  %s3 = inlined_call_operand.hbm [shape: f32[512,4], index: 3, kind: output, shape index: {}]
  %s4 = sld [smem:[#allocation0]]
  $region57: #{unet_innermost_forward.5} parent=0
    _
  %s6 = ssub.s32 1, %s4
  %s7 = scalar_select 0, %s6, %s4
  $region1: #{unet_innermost_forward.5} parent=0
    #allocation2 [shape = 'u8[131072]{0}', space=vmem, size = 0x20000, scoped, tag = 'input window, operand 0']
    #allocation3 [shape = 's32[2]{0}', space=sflag, size = 0x8, scoped, tag = 'scoped memory for unet_innermost_forward.5']
    #allocation4 [shape = 's32[2]{0}', space=sflag, size = 0x8, scoped, tag = 'scoped memory for unet_innermost_forward.5']
    #allocation5 [shape = 'u8[512]{0}', space=vmem, size = 0x400, scoped, tag = 'input window, operand 1, single buffered']
    #allocation6 [shape = 's32[1]{0}', space=sflag, size = 0x4, scoped, tag = 'scoped memory for unet_innermost_forward.5']
    #allocation7 [shape = 'u8[512]{0}', space=vmem, size = 0x400, scoped, tag = 'input window, operand 2, single buffered']
    #allocation8 [shape = 'u8[262144]{0}', space=vmem, size = 0x40000, scoped, tag = 'output window, operand 0']
    %8 = vsyncpa [#allocation3], 0
    %s9 = scalar_lea.sflag [#allocation3], 1
    %10 = vsyncpa %s9, 0
    %11 = vsyncpa [#allocation6], 0
    %12 = vsyncpa [#allocation4], 0
    %s13 = scalar_lea.sflag [#allocation4], 1
    %14 = vsyncpa %s13, 0
    loop: start=0, step=1, limit=4
    $region2: #{unet_innermost_forward.5} parent=1 // loop_pre_header
      _
    $region3: #{unet_innermost_forward.5} parent=1 // loop_header
      %s16 = sphi 0, %s20
      %p17 = scmp.ge.s32.totalorder %s16, 4
      %s26 = sphi 0, %s28
      %s29 = sphi 0, %s26
      %s30 = sphi 0, %s29
      %s46 = sphi 0, %s30
      %s50 = sphi 0, %s50
      %s52 = sphi 0, %s50
      %s53 = sphi 0, %s52
      %s67 = sphi 0, %s53
      %s71 = sphi 0, %s71
      %s73 = sphi 0, %s71
      %s74 = sphi 0, %s73
      %s88 = sphi 0, %s74
      %s94 = sphi 0, %s96
      %s97 = sphi 0, %s94
      %s98 = sphi 0, %s97
      %s114 = sphi 0, %s98
    $region4: #{unet_innermost_forward.5} parent=1 // loop_header_branch
      %19 = sbr.rel (%p17) target = $region8
    $region5: #{unet_innermost_forward.5} parent=1 // loop_body
      %s21 = ssub.s32 %s16, 1
      %s22 = ssub.s32 %s16, 2
      %s23 = sadd.s32 %s16, 1
      %s24 = ssub.s32 %s16, %s23
      %p25 = scmp.eq.s32.totalorder %s24, 0
      %s27 = sadd.s32 %s26, 1
      %s28 = scalar_select %p25, %s26, %s27
      %p31 = pneg %p25
      %p32 = scmp.eq.s32.totalorder %s16, 1
      %p33 = por %p31, %p32
      %p34 = scmp.ne.s32.totalorder %s26, %s29
      %p35 = scmp.eq.s32.totalorder %s16, 0
      %p36 = por %p34, %p35
      %p37 = scmp.ne.s32.totalorder %s26, %s29
      %p38 = scmp.eq.s32.totalorder %s21, 1
      %p39 = por %p37, %p38
      %p40 = scmp.ne.s32.totalorder %s29, %s30
      %p41 = scmp.eq.s32.totalorder %s21, 0
      %p42 = por %p40, %p41
      %p43 = scmp.ne.s32.totalorder %s29, %s30
      %p44 = scmp.eq.s32.totalorder %s22, 1
      %p45 = por %p43, %p44
      %p47 = scmp.ne.s32.totalorder %s30, %s46
      %p48 = scmp.eq.s32.totalorder %s22, 0
      %p49 = por %p47, %p48
      %s51 = sadd.s32 %s50, 1
      %p54 = scmp.eq.s32.totalorder %s16, 1
      %p55 = scmp.ne.s32.totalorder %s50, %s52
      %p56 = scmp.eq.s32.totalorder %s16, 0
      %p57 = por %p55, %p56
      %p58 = scmp.ne.s32.totalorder %s50, %s52
      %p59 = scmp.eq.s32.totalorder %s21, 1
      %p60 = por %p58, %p59
      %p61 = scmp.ne.s32.totalorder %s52, %s53
      %p62 = scmp.eq.s32.totalorder %s21, 0
      %p63 = por %p61, %p62
      %p64 = scmp.ne.s32.totalorder %s52, %s53
      %p65 = scmp.eq.s32.totalorder %s22, 1
      %p66 = por %p64, %p65
      %p68 = scmp.ne.s32.totalorder %s53, %s67
      %p69 = scmp.eq.s32.totalorder %s22, 0
      %p70 = por %p68, %p69
      %s72 = sadd.s32 %s71, 1
      %p75 = scmp.eq.s32.totalorder %s16, 1
      %p76 = scmp.ne.s32.totalorder %s71, %s73
      %p77 = scmp.eq.s32.totalorder %s16, 0
      %p78 = por %p76, %p77
      %p79 = scmp.ne.s32.totalorder %s71, %s73
      %p80 = scmp.eq.s32.totalorder %s21, 1
      %p81 = por %p79, %p80
      %p82 = scmp.ne.s32.totalorder %s73, %s74
      %p83 = scmp.eq.s32.totalorder %s21, 0
      %p84 = por %p82, %p83
      %p85 = scmp.ne.s32.totalorder %s73, %s74
      %p86 = scmp.eq.s32.totalorder %s22, 1
      %p87 = por %p85, %p86
      %p89 = scmp.ne.s32.totalorder %s74, %s88
      %p90 = scmp.eq.s32.totalorder %s22, 0
      %p91 = por %p89, %p90
      %s92 = ssub.s32 %s16, %s23
      %p93 = scmp.eq.s32.totalorder %s92, 0
      %s95 = sadd.s32 %s94, 1
      %s96 = scalar_select %p93, %s94, %s95
      %p99 = pneg %p93
      %p100 = scmp.eq.s32.totalorder %s16, 1
      %p101 = por %p99, %p100
      %p102 = scmp.ne.s32.totalorder %s94, %s97
      %p103 = scmp.eq.s32.totalorder %s16, 0
      %p104 = por %p102, %p103
      %p105 = scmp.ne.s32.totalorder %s94, %s97
      %p106 = scmp.eq.s32.totalorder %s21, 1
      %p107 = por %p105, %p106
      %p108 = scmp.ne.s32.totalorder %s97, %s98
      %p109 = scmp.eq.s32.totalorder %s21, 0
      %p110 = por %p108, %p109
      %p111 = scmp.ne.s32.totalorder %s97, %s98
      %p112 = scmp.eq.s32.totalorder %s22, 1
      %p113 = por %p111, %p112
      %p115 = scmp.ne.s32.totalorder %s98, %s114
      %p116 = scmp.eq.s32.totalorder %s22, 0
      %p117 = por %p115, %p116
      %p118 = scmp.le.s32.totalorder 1, %s16
      %p119 = scmp.lt.s32.totalorder %s16, 3
      %p120 = pnand %p118, %p119
      %p121 = pneg %p120
      // Predicated region
      $region9: #{unet_innermost_forward.5} parent=5 // pred_check
        _
      $region10: #{unet_innermost_forward.5} parent=5 // pred_check_branch
        %123 = sbr.rel (%p120) target = $region12
      $region11: #{unet_innermost_forward.5} parent=5 // pred_region
        %s124 = ssub.s32 %s16, 1
        // Predicated region
        $region13: #{unet_innermost_forward.5} parent=11 // pred_check
          %p125 = pneg %p63
        $region14: #{unet_innermost_forward.5} parent=11 // pred_check_branch
          %127 = sbr.rel (%p125) target = $region16
        $region15: #{unet_innermost_forward.5} parent=11 // pred_region
          %s129 = ssub.s32 16, 16
          %130 = vsyncadd [#allocation6], %s129
          %s132 = sshll.u32 [#allocation5], 4
          %s133 = int_to_ptr.vmem [resolvable:$true] %s132
          %135 = dma.hbm_to_vmem [thread:$0]  %s1, 16, %s133, [#allocation6]
        $region16: #{unet_innermost_forward.5} parent=11 // pred_fallthru
          _
        // Predicated region
        $region17: #{unet_innermost_forward.5} parent=11 // pred_check
          %p136 = pneg %p84
        $region18: #{unet_innermost_forward.5} parent=11 // pred_check_branch
          %138 = sbr.rel (%p136) target = $region20
        $region19: #{unet_innermost_forward.5} parent=11 // pred_region
          %s140 = ssub.s32 16, 16
          %141 = vsyncadd [#allocation6], %s140
          %s143 = sshll.u32 [#allocation7], 4
          %s144 = int_to_ptr.vmem [resolvable:$true] %s143
          %146 = dma.hbm_to_vmem [thread:$0]  %s2, 16, %s144, [#allocation6]
        $region20: #{unet_innermost_forward.5} parent=11 // pred_fallthru
          _
      $region12: #{unet_innermost_forward.5} parent=5 // pred_fallthru
        _
      %p147 = scmp.lt.s32.totalorder %s16, 2
      // Predicated region
      $region21: #{unet_innermost_forward.5} parent=5 // pred_check
        %p148 = pneg %p147
      $region22: #{unet_innermost_forward.5} parent=5 // pred_check_branch
        %150 = sbr.rel (%p148) target = $region24
      $region23: #{unet_innermost_forward.5} parent=5 // pred_region
        // Predicated region
        $region25: #{unet_innermost_forward.5} parent=23 // pred_check
          %p151 = pneg %p36
        $region26: #{unet_innermost_forward.5} parent=23 // pred_check_branch
          %153 = sbr.rel (%p151) target = $region28
        $region27: #{unet_innermost_forward.5} parent=23 // pred_region
          %s154 = sand.u32 %s26, 1
          %s155 = scalar_lea.sflag [#allocation3], %s154
          %s156 = sand.u32 %s26, 1
          %s157 = smul.addr %s156, 128
          %s158 = scalar_lea.vmem [#allocation2], %s157
          %s159 = smul.u32 32, %s16
          %s161 = ssub.s32 2048, 2048
          %162 = vsyncadd %s155, %s161
          %s163 = smul.addr %s159, 64
          %s164 = scalar_lea.hbm %s0, %s163
          %s165 = sshll.u32 %s158, 4
          %s166 = int_to_ptr.vmem [resolvable:$true] %s165
          %171 = dma.hbm_to_vmem [thread:$0]  %s164, 2048, %s166, %s155, 64, 64, 4
        $region28: #{unet_innermost_forward.5} parent=23 // pred_fallthru
          _
      $region24: #{unet_innermost_forward.5} parent=5 // pred_fallthru
        _
      %p172 = scmp.le.s32.totalorder 1, %s16
      %p173 = scmp.lt.s32.totalorder %s16, 3
      %p174 = pnand %p172, %p173
      %p175 = pneg %p174
      // Predicated region
      $region29: #{unet_innermost_forward.5} parent=5 // pred_check
        _
      $region30: #{unet_innermost_forward.5} parent=5 // pred_check_branch
        %177 = sbr.rel (%p174) target = $region32
      $region31: #{unet_innermost_forward.5} parent=5 // pred_region
        %s178 = ssub.s32 %s16, 1
        %s179 = sand.u32 %s29, 1
        %s180 = scalar_lea.sflag [#allocation3], %s179
        %s181 = sand.u32 %s29, 1
        %s182 = smul.addr %s181, 128
        %s183 = scalar_lea.vmem [#allocation2], %s182
        // Predicated region
        $region33: #{unet_innermost_forward.5} parent=31 // pred_check
          %p184 = pneg %p42
        $region34: #{unet_innermost_forward.5} parent=31 // pred_check_branch
          %186 = sbr.rel (%p184) target = $region36
        $region35: #{unet_innermost_forward.5} parent=31 // pred_region
          %187 = dma.done %s180, 2048
        $region36: #{unet_innermost_forward.5} parent=31 // pred_fallthru
          _
        // Predicated region
        $region37: #{unet_innermost_forward.5} parent=31 // pred_check
          %p188 = pneg %p63
        $region38: #{unet_innermost_forward.5} parent=31 // pred_check_branch
          %190 = sbr.rel (%p188) target = $region40
        $region39: #{unet_innermost_forward.5} parent=31 // pred_region
          %191 = dma.done [#allocation6], 16
        $region40: #{unet_innermost_forward.5} parent=31 // pred_fallthru
          _
        // Predicated region
        $region41: #{unet_innermost_forward.5} parent=31 // pred_check
          %p192 = pneg %p84
        $region42: #{unet_innermost_forward.5} parent=31 // pred_check_branch
          %194 = sbr.rel (%p192) target = $region44
        $region43: #{unet_innermost_forward.5} parent=31 // pred_region
          %195 = dma.done [#allocation6], 16
        $region44: #{unet_innermost_forward.5} parent=31 // pred_fallthru
          _
        %s196 = sand.u32 %s29, 1
        %s197 = scalar_lea.sflag [#allocation3], %s196
        %s198 = sand.u32 %s29, 1
        %s199 = smul.addr %s198, 128
        %s200 = scalar_lea.vmem [#allocation2], %s199
        %p201 = pneg %p42
        %p202 = pneg %p39
        %p203 = pneg %p63
        %p204 = pneg %p60
        %p205 = pneg %p84
        %p206 = pneg %p81
        %p207 = pneg %p110
        %p208 = pneg %p107
        %s209 = sand.u32 %s97, 1
        %s210 = scalar_lea.sflag [#allocation4], %s209
        %s211 = sand.u32 %s97, 1
        %s212 = smul.addr %s211, 256
        %s213 = scalar_lea.vmem [#allocation8], %s212
        %s214 = smul.u32 32, %s21
        %s215 = smul.u32 32, %s21
        %v216 = vld [vmem:[%s183] sm:$0xf]
        %v217 = vld [vmem:[%s183 + $0x4] sm:$0xf]
        %v218 = vld [vmem:[%s183 + $0x8] sm:$0xf]
        %v219 = vld [vmem:[%s183 + $0xc] sm:$0xf]
        %v220 = vld [vmem:[%s183 + $0x10] sm:$0xf]
        %v221 = vld [vmem:[%s183 + $0x14] sm:$0xf]
        %v222 = vld [vmem:[%s183 + $0x18] sm:$0xf]
        %v223 = vld [vmem:[%s183 + $0x1c] sm:$0xf]
        %v224 = vld [vmem:[%s183 + $0x20] sm:$0xf]
        %v225 = vld [vmem:[%s183 + $0x24] sm:$0xf]
        %v226 = vld [vmem:[%s183 + $0x28] sm:$0xf]
        %v227 = vld [vmem:[%s183 + $0x2c] sm:$0xf]
        %v228 = vld [vmem:[%s183 + $0x30] sm:$0xf]
        %v229 = vld [vmem:[%s183 + $0x34] sm:$0xf]
        %v230 = vld [vmem:[%s183 + $0x38] sm:$0xf]
        %v231 = vld [vmem:[%s183 + $0x3c] sm:$0xf]
        %v232 = vld [vmem:[%s183 + $0x40] sm:$0xf]
        %v233 = vld [vmem:[%s183 + $0x44] sm:$0xf]
        %v234 = vld [vmem:[%s183 + $0x48] sm:$0xf]
        %v235 = vld [vmem:[%s183 + $0x4c] sm:$0xf]
        %v236 = vld [vmem:[%s183 + $0x50] sm:$0xf]
        %v237 = vld [vmem:[%s183 + $0x54] sm:$0xf]
        %v238 = vld [vmem:[%s183 + $0x58] sm:$0xf]
        %v239 = vld [vmem:[%s183 + $0x5c] sm:$0xf]
        %v240 = vld [vmem:[%s183 + $0x60] sm:$0xf]
        %v241 = vld [vmem:[%s183 + $0x64] sm:$0xf]
        %v242 = vld [vmem:[%s183 + $0x68] sm:$0xf]
        %v243 = vld [vmem:[%s183 + $0x6c] sm:$0xf]
        %v244 = vld [vmem:[%s183 + $0x70] sm:$0xf]
        %v245 = vld [vmem:[%s183 + $0x74] sm:$0xf]
        %v246 = vld [vmem:[%s183 + $0x78] sm:$0xf]
        %v247 = vld [vmem:[%s183 + $0x7c] sm:$0xf]
        %v248 = vunpack.c.l.bf16 %v216
        %v249 = vunpack.c.l.bf16 %v217
        %v250 = vunpack.c.l.bf16 %v218
        %v251 = vunpack.c.l.bf16 %v219
        %v252 = vunpack.c.l.bf16 %v220
        %v253 = vunpack.c.l.bf16 %v221
        %v254 = vunpack.c.l.bf16 %v222
        %v255 = vunpack.c.l.bf16 %v223
        %v256 = vunpack.c.l.bf16 %v224
        %v257 = vunpack.c.l.bf16 %v225
        %v258 = vunpack.c.l.bf16 %v226
        %v259 = vunpack.c.l.bf16 %v227
        %v260 = vunpack.c.l.bf16 %v228
        %v261 = vunpack.c.l.bf16 %v229
        %v262 = vunpack.c.l.bf16 %v230
        %v263 = vunpack.c.l.bf16 %v231
        %v264 = vunpack.c.l.bf16 %v232
        %v265 = vunpack.c.l.bf16 %v233
        %v266 = vunpack.c.l.bf16 %v234
        %v267 = vunpack.c.l.bf16 %v235
        %v268 = vunpack.c.l.bf16 %v236
        %v269 = vunpack.c.l.bf16 %v237
        %v270 = vunpack.c.l.bf16 %v238
        %v271 = vunpack.c.l.bf16 %v239
        %v272 = vunpack.c.l.bf16 %v240
        %v273 = vunpack.c.l.bf16 %v241
        %v274 = vunpack.c.l.bf16 %v242
        %v275 = vunpack.c.l.bf16 %v243
        %v276 = vunpack.c.l.bf16 %v244
        %v277 = vunpack.c.l.bf16 %v245
        %v278 = vunpack.c.l.bf16 %v246
        %v279 = vunpack.c.l.bf16 %v247
        %v280 = vld [vmem:[#allocation5] sm:$0x1]
        %v282 = vlaneseq
        %v283 = vshrl.u32 %v282, 7
        %v284 = vsub.s32 0, %v283
        %v285 = vrot.slane %v280, %v284
        %v287 = vmul.f32 %v248, %v285
        %v288 = vmul.f32 %v249, %v285
        %v289 = vmul.f32 %v250, %v285
        %v290 = vmul.f32 %v251, %v285
        %v291 = vmul.f32 %v252, %v285
        %v292 = vmul.f32 %v253, %v285
        %v293 = vmul.f32 %v254, %v285
        %v294 = vmul.f32 %v255, %v285
        %v295 = vmul.f32 %v256, %v285
        %v296 = vmul.f32 %v257, %v285
        %v297 = vmul.f32 %v258, %v285
        %v298 = vmul.f32 %v259, %v285
        %v299 = vmul.f32 %v260, %v285
        %v300 = vmul.f32 %v261, %v285
        %v301 = vmul.f32 %v262, %v285
        %v302 = vmul.f32 %v263, %v285
        %v303 = vmul.f32 %v264, %v285
        %v304 = vmul.f32 %v265, %v285
        %v305 = vmul.f32 %v266, %v285
        %v306 = vmul.f32 %v267, %v285
        %v307 = vmul.f32 %v268, %v285
        %v308 = vmul.f32 %v269, %v285
        %v309 = vmul.f32 %v270, %v285
        %v310 = vmul.f32 %v271, %v285
        %v311 = vmul.f32 %v272, %v285
        %v312 = vmul.f32 %v273, %v285
        %v313 = vmul.f32 %v274, %v285
        %v314 = vmul.f32 %v275, %v285
        %v315 = vmul.f32 %v276, %v285
        %v316 = vmul.f32 %v277, %v285
        %v317 = vmul.f32 %v278, %v285
        %v318 = vmul.f32 %v279, %v285
        %v319 = vld [vmem:[#allocation7] sm:$0x1]
        %v321 = vlaneseq
        %v322 = vshrl.u32 %v321, 7
        %v323 = vsub.s32 0, %v322
        %v324 = vrot.slane %v319, %v323
        %v326 = vadd.f32 %v287, %v324
        %v327 = vadd.f32 %v288, %v324
        %v328 = vadd.f32 %v289, %v324
        %v329 = vadd.f32 %v290, %v324
        %v330 = vadd.f32 %v291, %v324
        %v331 = vadd.f32 %v292, %v324
        %v332 = vadd.f32 %v293, %v324
        %v333 = vadd.f32 %v294, %v324
        %v334 = vadd.f32 %v295, %v324
        %v335 = vadd.f32 %v296, %v324
        %v336 = vadd.f32 %v297, %v324
        %v337 = vadd.f32 %v298, %v324
        %v338 = vadd.f32 %v299, %v324
        %v339 = vadd.f32 %v300, %v324
        %v340 = vadd.f32 %v301, %v324
        %v341 = vadd.f32 %v302, %v324
        %v342 = vadd.f32 %v303, %v324
        %v343 = vadd.f32 %v304, %v324
        %v344 = vadd.f32 %v305, %v324
        %v345 = vadd.f32 %v306, %v324
        %v346 = vadd.f32 %v307, %v324
        %v347 = vadd.f32 %v308, %v324
        %v348 = vadd.f32 %v309, %v324
        %v349 = vadd.f32 %v310, %v324
        %v350 = vadd.f32 %v311, %v324
        %v351 = vadd.f32 %v312, %v324
        %v352 = vadd.f32 %v313, %v324
        %v353 = vadd.f32 %v314, %v324
        %v354 = vadd.f32 %v315, %v324
        %v355 = vadd.f32 %v316, %v324
        %v356 = vadd.f32 %v317, %v324
        %v357 = vadd.f32 %v318, %v324
        %vm358 = vcmask 31744
        %359 = vst.msk [vmem:[%s213] sm:$0xff] %vm358, %v326
        %360 = vst.msk [vmem:[%s213 + $0x8] sm:$0xff] %vm358, %v327
        %361 = vst.msk [vmem:[%s213 + $0x10] sm:$0xff] %vm358, %v328
        %362 = vst.msk [vmem:[%s213 + $0x18] sm:$0xff] %vm358, %v329
        %363 = vst.msk [vmem:[%s213 + $0x20] sm:$0xff] %vm358, %v330
        %364 = vst.msk [vmem:[%s213 + $0x28] sm:$0xff] %vm358, %v331
        %365 = vst.msk [vmem:[%s213 + $0x30] sm:$0xff] %vm358, %v332
        %366 = vst.msk [vmem:[%s213 + $0x38] sm:$0xff] %vm358, %v333
        %367 = vst.msk [vmem:[%s213 + $0x40] sm:$0xff] %vm358, %v334
        %368 = vst.msk [vmem:[%s213 + $0x48] sm:$0xff] %vm358, %v335
        %369 = vst.msk [vmem:[%s213 + $0x50] sm:$0xff] %vm358, %v336
        %370 = vst.msk [vmem:[%s213 + $0x58] sm:$0xff] %vm358, %v337
        %371 = vst.msk [vmem:[%s213 + $0x60] sm:$0xff] %vm358, %v338
        %372 = vst.msk [vmem:[%s213 + $0x68] sm:$0xff] %vm358, %v339
        %373 = vst.msk [vmem:[%s213 + $0x70] sm:$0xff] %vm358, %v340
        %374 = vst.msk [vmem:[%s213 + $0x78] sm:$0xff] %vm358, %v341
        %375 = vst.msk [vmem:[%s213 + $0x80] sm:$0xff] %vm358, %v342
        %376 = vst.msk [vmem:[%s213 + $0x88] sm:$0xff] %vm358, %v343
        %377 = vst.msk [vmem:[%s213 + $0x90] sm:$0xff] %vm358, %v344
        %378 = vst.msk [vmem:[%s213 + $0x98] sm:$0xff] %vm358, %v345
        %379 = vst.msk [vmem:[%s213 + $0xa0] sm:$0xff] %vm358, %v346
        %380 = vst.msk [vmem:[%s213 + $0xa8] sm:$0xff] %vm358, %v347
        %381 = vst.msk [vmem:[%s213 + $0xb0] sm:$0xff] %vm358, %v348
        %382 = vst.msk [vmem:[%s213 + $0xb8] sm:$0xff] %vm358, %v349
        %383 = vst.msk [vmem:[%s213 + $0xc0] sm:$0xff] %vm358, %v350
        %384 = vst.msk [vmem:[%s213 + $0xc8] sm:$0xff] %vm358, %v351
        %385 = vst.msk [vmem:[%s213 + $0xd0] sm:$0xff] %vm358, %v352
        %386 = vst.msk [vmem:[%s213 + $0xd8] sm:$0xff] %vm358, %v353
        %387 = vst.msk [vmem:[%s213 + $0xe0] sm:$0xff] %vm358, %v354
        %388 = vst.msk [vmem:[%s213 + $0xe8] sm:$0xff] %vm358, %v355
        %389 = vst.msk [vmem:[%s213 + $0xf0] sm:$0xff] %vm358, %v356
        %390 = vst.msk [vmem:[%s213 + $0xf8] sm:$0xff] %vm358, %v357
        %s391 = sand.u32 %s97, 1
        %s392 = scalar_lea.sflag [#allocation4], %s391
        %s393 = sand.u32 %s97, 1
        %s394 = smul.addr %s393, 256
        %s395 = scalar_lea.vmem [#allocation8], %s394
        // Predicated region
        $region45: #{unet_innermost_forward.5} parent=31 // pred_check
          %p396 = pneg %p107
        $region46: #{unet_innermost_forward.5} parent=31 // pred_check_branch
          %398 = sbr.rel (%p396) target = $region48
        $region47: #{unet_innermost_forward.5} parent=31 // pred_region
          %s399 = smul.u32 32, %s21
          %s401 = ssub.s32 4096, 4096
          %402 = vsyncadd %s392, %s401
          %s403 = smul.addr %s399, 128
          %s404 = scalar_lea.hbm %s3, %s403
          %s405 = sshll.u32 %s395, 4
          %s406 = int_to_ptr.vmem [resolvable:$true] %s405
          %411 = dma.vmem_to_hbm [thread:$0]  %s406, 4096, %s404, %s392, 128, 128, 8
        $region48: #{unet_innermost_forward.5} parent=31 // pred_fallthru
          _
      $region32: #{unet_innermost_forward.5} parent=5 // pred_fallthru
        _
      %p412 = scmp.le.s32.totalorder 2, %s16
      // Predicated region
      $region49: #{unet_innermost_forward.5} parent=5 // pred_check
        %p413 = pneg %p412
      $region50: #{unet_innermost_forward.5} parent=5 // pred_check_branch
        %415 = sbr.rel (%p413) target = $region52
      $region51: #{unet_innermost_forward.5} parent=5 // pred_region
        %s416 = ssub.s32 %s16, 2
        // Predicated region
        $region53: #{unet_innermost_forward.5} parent=51 // pred_check
          %p417 = pneg %p113
        $region54: #{unet_innermost_forward.5} parent=51 // pred_check_branch
          %419 = sbr.rel (%p417) target = $region56
        $region55: #{unet_innermost_forward.5} parent=51 // pred_region
          %s420 = sand.u32 %s98, 1
          %s421 = scalar_lea.sflag [#allocation4], %s420
          %s422 = sand.u32 %s98, 1
          %s423 = smul.addr %s422, 256
          %s424 = scalar_lea.vmem [#allocation8], %s423
          %425 = dma.done %s421, 4096
        $region56: #{unet_innermost_forward.5} parent=51 // pred_fallthru
          _
      $region52: #{unet_innermost_forward.5} parent=5 // pred_fallthru
        _
    $region6: #{unet_innermost_forward.5} parent=1 // loop_footer
      %s20 = sadd.s32 1, %s16
    $region7: #{unet_innermost_forward.5} parent=1 // loop_footer_branch
      %15 = sbr.rel target = $region3
    $region8: #{unet_innermost_forward.5} parent=1 // loop_exit
      _
    %426 = vsyncpa [#allocation3], 1
    %s427 = scalar_lea.sflag [#allocation3], 1
    %428 = vsyncpa %s427, 1
    %429 = vsyncpa [#allocation6], 1
    %430 = vsyncpa [#allocation4], 1
    %s431 = scalar_lea.sflag [#allocation4], 1
    %432 = vsyncpa %s431, 1

// kernel: unet_innermost_forward.4
$region0: #{unet_innermost_forward.4}
  #allocation0 [shape = 'u32[]', space=smem, size = 0x4, offset = 0x4, fixed_abs, tag = 'smem constant byte address 0x4 - core index']
  #allocation1 [shape = 'u32[144,128]{1,0:T(1,128)}', space=vmem, size = 0x12000, scoped, tag = 'internal scratch']
  %s0 = inlined_call_operand.hbm [shape: bf16[2,10,10,8], index: 0, kind: input, shape index: {}]
  %s1 = inlined_call_operand.hbm [shape: bf16[16,8,4], index: 1, kind: input, shape index: {}]
  %s2 = inlined_call_operand.hbm [shape: bf16[2,8,2,8,8], index: 2, kind: output, shape index: {0}]
  %s3 = inlined_call_operand.hbm [shape: f32[2,1,4], index: 3, kind: output, shape index: {1}]
  %s4 = inlined_call_operand.hbm [shape: f32[2,1,4], index: 4, kind: output, shape index: {2}]
  %5 = xla_tuple %s2, %s3, %s4
  %s6 = sld [smem:[#allocation0]]
  $region65: #{unet_innermost_forward.4} parent=0
    _
  %s8 = ssub.s32 1, %s6
  %s9 = scalar_select 0, %s8, %s6
  $region1: #{unet_innermost_forward.4} parent=0
    #allocation2 [shape = 'u8[81920]{0}', space=vmem, size = 0x14000, scoped, tag = 'input window, operand 0']
    #allocation3 [shape = 's32[2]{0}', space=sflag, size = 0x8, scoped, tag = 'scoped memory for unet_innermost_forward.4']
    #allocation4 [shape = 's32[2]{0}', space=sflag, size = 0x8, scoped, tag = 'scoped memory for unet_innermost_forward.4']
    #allocation5 [shape = 'u8[32768]{0}', space=vmem, size = 0x8000, scoped, tag = 'input window, operand 1, single buffered']
    #allocation6 [shape = 's32[1]{0}', space=sflag, size = 0x4, scoped, tag = 'scoped memory for unet_innermost_forward.4']
    #allocation7 [shape = 'u8[65536]{0}', space=vmem, size = 0x10000, scoped, tag = 'output window, operand 0']
    #allocation8 [shape = 'u8[1024]{0}', space=vmem, size = 0x400, scoped, tag = 'output window, operand 1']
    #allocation9 [shape = 's32[2]{0}', space=sflag, size = 0x8, scoped, tag = 'scoped memory for unet_innermost_forward.4']
    #allocation10 [shape = 'u8[1024]{0}', space=vmem, size = 0x400, scoped, tag = 'output window, operand 2']
    %10 = vsyncpa [#allocation3], 0
    %s11 = scalar_lea.sflag [#allocation3], 1
    %12 = vsyncpa %s11, 0
    %13 = vsyncpa [#allocation6], 0
    %14 = vsyncpa [#allocation4], 0
    %s15 = scalar_lea.sflag [#allocation4], 1
    %16 = vsyncpa %s15, 0
    %17 = vsyncpa [#allocation9], 0
    %s18 = scalar_lea.sflag [#allocation9], 1
    %19 = vsyncpa %s18, 0
    loop: start=0, step=1, limit=4
    $region2: #{unet_innermost_forward.4} parent=1 // loop_pre_header
      _
    $region3: #{unet_innermost_forward.4} parent=1 // loop_header
      %s21 = sphi 0, %s25
      %p22 = scmp.ge.s32.totalorder %s21, 4
      %s31 = sphi 0, %s33
      %s34 = sphi 0, %s31
      %s35 = sphi 0, %s34
      %s51 = sphi 0, %s35
      %s55 = sphi 0, %s55
      %s57 = sphi 0, %s55
      %s58 = sphi 0, %s57
      %s72 = sphi 0, %s58
      %s78 = sphi 0, %s80
      %s81 = sphi 0, %s78
      %s82 = sphi 0, %s81
      %s98 = sphi 0, %s82
      %s104 = sphi 0, %s106
      %s107 = sphi 0, %s104
      %s108 = sphi 0, %s107
      %s124 = sphi 0, %s108
      %s130 = sphi 0, %s132
      %s133 = sphi 0, %s130
      %s134 = sphi 0, %s133
      %s150 = sphi 0, %s134
    $region4: #{unet_innermost_forward.4} parent=1 // loop_header_branch
      %24 = sbr.rel (%p22) target = $region8
    $region5: #{unet_innermost_forward.4} parent=1 // loop_body
      %s26 = ssub.s32 %s21, 1
      %s27 = ssub.s32 %s21, 2
      %s28 = sadd.s32 %s21, 1
      %s29 = ssub.s32 %s21, %s28
      %p30 = scmp.eq.s32.totalorder %s29, 0
      %s32 = sadd.s32 %s31, 1
      %s33 = scalar_select %p30, %s31, %s32
      %p36 = pneg %p30
      %p37 = scmp.eq.s32.totalorder %s21, 1
      %p38 = por %p36, %p37
      %p39 = scmp.ne.s32.totalorder %s31, %s34
      %p40 = scmp.eq.s32.totalorder %s21, 0
      %p41 = por %p39, %p40
      %p42 = scmp.ne.s32.totalorder %s31, %s34
      %p43 = scmp.eq.s32.totalorder %s26, 1
      %p44 = por %p42, %p43
      %p45 = scmp.ne.s32.totalorder %s34, %s35
      %p46 = scmp.eq.s32.totalorder %s26, 0
      %p47 = por %p45, %p46
      %p48 = scmp.ne.s32.totalorder %s34, %s35
      %p49 = scmp.eq.s32.totalorder %s27, 1
      %p50 = por %p48, %p49
      %p52 = scmp.ne.s32.totalorder %s35, %s51
      %p53 = scmp.eq.s32.totalorder %s27, 0
      %p54 = por %p52, %p53
      %s56 = sadd.s32 %s55, 1
      %p59 = scmp.eq.s32.totalorder %s21, 1
      %p60 = scmp.ne.s32.totalorder %s55, %s57
      %p61 = scmp.eq.s32.totalorder %s21, 0
      %p62 = por %p60, %p61
      %p63 = scmp.ne.s32.totalorder %s55, %s57
      %p64 = scmp.eq.s32.totalorder %s26, 1
      %p65 = por %p63, %p64
      %p66 = scmp.ne.s32.totalorder %s57, %s58
      %p67 = scmp.eq.s32.totalorder %s26, 0
      %p68 = por %p66, %p67
      %p69 = scmp.ne.s32.totalorder %s57, %s58
      %p70 = scmp.eq.s32.totalorder %s27, 1
      %p71 = por %p69, %p70
      %p73 = scmp.ne.s32.totalorder %s58, %s72
      %p74 = scmp.eq.s32.totalorder %s27, 0
      %p75 = por %p73, %p74
      %s76 = ssub.s32 %s21, %s28
      %p77 = scmp.eq.s32.totalorder %s76, 0
      %s79 = sadd.s32 %s78, 1
      %s80 = scalar_select %p77, %s78, %s79
      %p83 = pneg %p77
      %p84 = scmp.eq.s32.totalorder %s21, 1
      %p85 = por %p83, %p84
      %p86 = scmp.ne.s32.totalorder %s78, %s81
      %p87 = scmp.eq.s32.totalorder %s21, 0
      %p88 = por %p86, %p87
      %p89 = scmp.ne.s32.totalorder %s78, %s81
      %p90 = scmp.eq.s32.totalorder %s26, 1
      %p91 = por %p89, %p90
      %p92 = scmp.ne.s32.totalorder %s81, %s82
      %p93 = scmp.eq.s32.totalorder %s26, 0
      %p94 = por %p92, %p93
      %p95 = scmp.ne.s32.totalorder %s81, %s82
      %p96 = scmp.eq.s32.totalorder %s27, 1
      %p97 = por %p95, %p96
      %p99 = scmp.ne.s32.totalorder %s82, %s98
      %p100 = scmp.eq.s32.totalorder %s27, 0
      %p101 = por %p99, %p100
      %s102 = ssub.s32 %s21, %s28
      %p103 = scmp.eq.s32.totalorder %s102, 0
      %s105 = sadd.s32 %s104, 1
      %s106 = scalar_select %p103, %s104, %s105
      %p109 = pneg %p103
      %p110 = scmp.eq.s32.totalorder %s21, 1
      %p111 = por %p109, %p110
      %p112 = scmp.ne.s32.totalorder %s104, %s107
      %p113 = scmp.eq.s32.totalorder %s21, 0
      %p114 = por %p112, %p113
      %p115 = scmp.ne.s32.totalorder %s104, %s107
      %p116 = scmp.eq.s32.totalorder %s26, 1
      %p117 = por %p115, %p116
      %p118 = scmp.ne.s32.totalorder %s107, %s108
      %p119 = scmp.eq.s32.totalorder %s26, 0
      %p120 = por %p118, %p119
      %p121 = scmp.ne.s32.totalorder %s107, %s108
      %p122 = scmp.eq.s32.totalorder %s27, 1
      %p123 = por %p121, %p122
      %p125 = scmp.ne.s32.totalorder %s108, %s124
      %p126 = scmp.eq.s32.totalorder %s27, 0
      %p127 = por %p125, %p126
      %s128 = ssub.s32 %s21, %s28
      %p129 = scmp.eq.s32.totalorder %s128, 0
      %s131 = sadd.s32 %s130, 1
      %s132 = scalar_select %p129, %s130, %s131
      %p135 = pneg %p129
      %p136 = scmp.eq.s32.totalorder %s21, 1
      %p137 = por %p135, %p136
      %p138 = scmp.ne.s32.totalorder %s130, %s133
      %p139 = scmp.eq.s32.totalorder %s21, 0
      %p140 = por %p138, %p139
      %p141 = scmp.ne.s32.totalorder %s130, %s133
      %p142 = scmp.eq.s32.totalorder %s26, 1
      %p143 = por %p141, %p142
      %p144 = scmp.ne.s32.totalorder %s133, %s134
      %p145 = scmp.eq.s32.totalorder %s26, 0
      %p146 = por %p144, %p145
      %p147 = scmp.ne.s32.totalorder %s133, %s134
      %p148 = scmp.eq.s32.totalorder %s27, 1
      %p149 = por %p147, %p148
      %p151 = scmp.ne.s32.totalorder %s134, %s150
      %p152 = scmp.eq.s32.totalorder %s27, 0
      %p153 = por %p151, %p152
      %p154 = scmp.le.s32.totalorder 1, %s21
      %p155 = scmp.lt.s32.totalorder %s21, 3
      %p156 = pnand %p154, %p155
      %p157 = pneg %p156
      // Predicated region
      $region9: #{unet_innermost_forward.4} parent=5 // pred_check
        _
      $region10: #{unet_innermost_forward.4} parent=5 // pred_check_branch
        %159 = sbr.rel (%p156) target = $region12
      $region11: #{unet_innermost_forward.4} parent=5 // pred_region
        %s160 = ssub.s32 %s21, 1
        // Predicated region
        $region13: #{unet_innermost_forward.4} parent=11 // pred_check
          %p161 = pneg %p68
        $region14: #{unet_innermost_forward.4} parent=11 // pred_check_branch
          %163 = sbr.rel (%p161) target = $region16
        $region15: #{unet_innermost_forward.4} parent=11 // pred_region
          %s165 = ssub.s32 1024, 1024
          %166 = vsyncadd [#allocation6], %s165
          %s167 = sshll.u32 [#allocation5], 4
          %s168 = int_to_ptr.vmem [resolvable:$true] %s167
          %173 = dma.hbm_to_vmem [thread:$0]  %s1, 1024, %s168, [#allocation6], 64, 64, 4
        $region16: #{unet_innermost_forward.4} parent=11 // pred_fallthru
          _
      $region12: #{unet_innermost_forward.4} parent=5 // pred_fallthru
        _
      %p174 = scmp.lt.s32.totalorder %s21, 2
      // Predicated region
      $region17: #{unet_innermost_forward.4} parent=5 // pred_check
        %p175 = pneg %p174
      $region18: #{unet_innermost_forward.4} parent=5 // pred_check_branch
        %177 = sbr.rel (%p175) target = $region20
      $region19: #{unet_innermost_forward.4} parent=5 // pred_region
        // Predicated region
        $region21: #{unet_innermost_forward.4} parent=19 // pred_check
          %p178 = pneg %p41
        $region22: #{unet_innermost_forward.4} parent=19 // pred_check_branch
          %180 = sbr.rel (%p178) target = $region24
        $region23: #{unet_innermost_forward.4} parent=19 // pred_region
          %s181 = sand.u32 %s31, 1
          %s182 = scalar_lea.sflag [#allocation3], %s181
          %s183 = sand.u32 %s31, 1
          %s184 = smul.addr %s183, 80
          %s185 = scalar_lea.vmem [#allocation2], %s184
          %s187 = ssub.s32 1280, 1280
          %188 = vsyncadd %s182, %s187
          %s189 = smul.addr %s21, 20
          %s190 = smul.addr %s189, 64
          %s191 = scalar_lea.hbm %s0, %s190
          %s192 = sshll.u32 %s185, 4
          %s193 = int_to_ptr.vmem [resolvable:$true] %s192
          %198 = dma.hbm_to_vmem [thread:$0]  %s191, 1280, %s193, %s182, 64, 64, 4
        $region24: #{unet_innermost_forward.4} parent=19 // pred_fallthru
          _
      $region20: #{unet_innermost_forward.4} parent=5 // pred_fallthru
        _
      %p199 = scmp.le.s32.totalorder 1, %s21
      %p200 = scmp.lt.s32.totalorder %s21, 3
      %p201 = pnand %p199, %p200
      %p202 = pneg %p201
      // Predicated region
      $region25: #{unet_innermost_forward.4} parent=5 // pred_check
        _
      $region26: #{unet_innermost_forward.4} parent=5 // pred_check_branch
        %204 = sbr.rel (%p201) target = $region28
      $region27: #{unet_innermost_forward.4} parent=5 // pred_region
        %s205 = ssub.s32 %s21, 1
        %s206 = sand.u32 %s34, 1
        %s207 = scalar_lea.sflag [#allocation3], %s206
        %s208 = sand.u32 %s34, 1
        %s209 = smul.addr %s208, 80
        %s210 = scalar_lea.vmem [#allocation2], %s209
        // Predicated region
        $region29: #{unet_innermost_forward.4} parent=27 // pred_check
          %p211 = pneg %p47
        $region30: #{unet_innermost_forward.4} parent=27 // pred_check_branch
          %213 = sbr.rel (%p211) target = $region32
        $region31: #{unet_innermost_forward.4} parent=27 // pred_region
          %214 = dma.done %s207, 1280
        $region32: #{unet_innermost_forward.4} parent=27 // pred_fallthru
          _
        // Predicated region
        $region33: #{unet_innermost_forward.4} parent=27 // pred_check
          %p215 = pneg %p68
        $region34: #{unet_innermost_forward.4} parent=27 // pred_check_branch
          %217 = sbr.rel (%p215) target = $region36
        $region35: #{unet_innermost_forward.4} parent=27 // pred_region
          %218 = dma.done [#allocation6], 1024
        $region36: #{unet_innermost_forward.4} parent=27 // pred_fallthru
          _
        %s219 = sand.u32 %s34, 1
        %s220 = scalar_lea.sflag [#allocation3], %s219
        %s221 = sand.u32 %s34, 1
        %s222 = smul.addr %s221, 80
        %s223 = scalar_lea.vmem [#allocation2], %s222
        %p224 = pneg %p47
        %p225 = pneg %p44
        %p226 = pneg %p68
        %p227 = pneg %p65
        %p228 = pneg %p94
        %p229 = pneg %p91
        %s230 = sand.u32 %s81, 1
        %s231 = scalar_lea.sflag [#allocation4], %s230
        %s232 = sand.u32 %s81, 1
        %s233 = smul.addr %s232, 64
        %s234 = scalar_lea.vmem [#allocation7], %s233
        %p235 = pneg %p120
        %p236 = pneg %p117
        %s237 = sand.u32 %s26, 1
        %s238 = scalar_lea.sflag [#allocation9], %s237
        %s239 = sand.u32 %s107, 1
        %s240 = scalar_lea.vmem [#allocation8], %s239
        %p241 = pneg %p146
        %p242 = pneg %p143
        %s243 = sand.u32 %s26, 1
        %s244 = scalar_lea.sflag [#allocation9], %s243
        %s245 = sand.u32 %s133, 1
        %s246 = scalar_lea.vmem [#allocation10], %s245
        %v248 = vld [vmem:[%s210] sm:$0xf]
        %v249 = vld [vmem:[%s210 + $0x4] sm:$0x1]
        %v250 = vld [vmem:[%s210 + $0x8] sm:$0xf]
        %v251 = vld [vmem:[%s210 + $0xc] sm:$0x1]
        %v252 = vld [vmem:[%s210 + $0x10] sm:$0xf]
        %v253 = vld [vmem:[%s210 + $0x14] sm:$0x1]
        %v254 = vld [vmem:[%s210 + $0x18] sm:$0xf]
        %v255 = vld [vmem:[%s210 + $0x1c] sm:$0x1]
        %v256 = vld [vmem:[%s210 + $0x20] sm:$0xf]
        %v257 = vld [vmem:[%s210 + $0x24] sm:$0x1]
        %v258 = vld [vmem:[%s210 + $0x28] sm:$0xf]
        %v259 = vld [vmem:[%s210 + $0x2c] sm:$0x1]
        %v260 = vld [vmem:[%s210 + $0x30] sm:$0xf]
        %v261 = vld [vmem:[%s210 + $0x34] sm:$0x1]
        %v262 = vld [vmem:[%s210 + $0x38] sm:$0xf]
        %v263 = vld [vmem:[%s210 + $0x3c] sm:$0x1]
        %v264 = vld [vmem:[%s210 + $0x40] sm:$0xf]
        %v265 = vld [vmem:[%s210 + $0x44] sm:$0x1]
        %v266 = vld [vmem:[%s210 + $0x48] sm:$0xf]
        %v267 = vld [vmem:[%s210 + $0x4c] sm:$0x1]
        %v268 = vld [vmem:[#allocation5] sm:$0xf]
        %vm269 = vsmask.f32 3328
        %vm270 = vsmask.f32 7440
        %vm271 = vmor %vm269, %vm270
        %v273 = vshrl.u32 %v248, 16
        %v275 = vrot.slane %v273, 4
        %v276 = vshll.u32 %v248, 16
        %v278 = vrot.slane %v276, 5
        %v279 = vor.u32 %v275, %v278
        %v280 = vrot.slane %v279, 4
        %v282 = vshll.u32 %v249, 16
        %v284 = vrot.slane %v282, 5
        %v285 = vsel %vm271, %v280, %v284
        %v287 = vshrl.u32 %v250, 16
        %v289 = vrot.slane %v287, 4
        %v290 = vshll.u32 %v250, 16
        %v292 = vrot.slane %v290, 5
        %v293 = vor.u32 %v289, %v292
        %v294 = vrot.slane %v293, 4
        %v296 = vshll.u32 %v251, 16
        %v298 = vrot.slane %v296, 5
        %v299 = vsel %vm271, %v294, %v298
        %v301 = vshrl.u32 %v252, 16
        %v303 = vrot.slane %v301, 4
        %v304 = vshll.u32 %v252, 16
        %v306 = vrot.slane %v304, 5
        %v307 = vor.u32 %v303, %v306
        %v308 = vrot.slane %v307, 4
        %v310 = vshll.u32 %v253, 16
        %v312 = vrot.slane %v310, 5
        %v313 = vsel %vm271, %v308, %v312
        %v315 = vshrl.u32 %v254, 16
        %v317 = vrot.slane %v315, 4
        %v318 = vshll.u32 %v254, 16
        %v320 = vrot.slane %v318, 5
        %v321 = vor.u32 %v317, %v320
        %v322 = vrot.slane %v321, 4
        %v324 = vshll.u32 %v255, 16
        %v326 = vrot.slane %v324, 5
        %v327 = vsel %vm271, %v322, %v326
        %v329 = vshrl.u32 %v256, 16
        %v331 = vrot.slane %v329, 4
        %v332 = vshll.u32 %v256, 16
        %v334 = vrot.slane %v332, 5
        %v335 = vor.u32 %v331, %v334
        %v336 = vrot.slane %v335, 4
        %v338 = vshll.u32 %v257, 16
        %v340 = vrot.slane %v338, 5
        %v341 = vsel %vm271, %v336, %v340
        %v343 = vshrl.u32 %v258, 16
        %v345 = vrot.slane %v343, 4
        %v346 = vshll.u32 %v258, 16
        %v348 = vrot.slane %v346, 5
        %v349 = vor.u32 %v345, %v348
        %v350 = vrot.slane %v349, 4
        %v352 = vshll.u32 %v259, 16
        %v354 = vrot.slane %v352, 5
        %v355 = vsel %vm271, %v350, %v354
        %v357 = vshrl.u32 %v260, 16
        %v359 = vrot.slane %v357, 4
        %v360 = vshll.u32 %v260, 16
        %v362 = vrot.slane %v360, 5
        %v363 = vor.u32 %v359, %v362
        %v364 = vrot.slane %v363, 4
        %v366 = vshll.u32 %v261, 16
        %v368 = vrot.slane %v366, 5
        %v369 = vsel %vm271, %v364, %v368
        %v371 = vshrl.u32 %v262, 16
        %v373 = vrot.slane %v371, 4
        %v374 = vshll.u32 %v262, 16
        %v376 = vrot.slane %v374, 5
        %v377 = vor.u32 %v373, %v376
        %v378 = vrot.slane %v377, 4
        %v380 = vshll.u32 %v263, 16
        %v382 = vrot.slane %v380, 5
        %v383 = vsel %vm271, %v378, %v382
        %s384 = scalar_lea.vmem [#allocation5], 4
        %v385 = vld [vmem:[%s384] sm:$0xf]
        %v386 = vunpack.c.l.b16 %v285
        %v387 = vunpack.c.l.b16 %v299
        %v388 = vunpack.c.l.b16 %v313
        %v389 = vunpack.c.l.b16 %v327
        %v390 = vunpack.c.l.b16 %v341
        %v391 = vunpack.c.l.b16 %v355
        %v392 = vunpack.c.l.b16 %v369
        %v393 = vunpack.c.l.b16 %v383
        %v394 = vpack.c.b16 %v387, %v386
        %v395 = vpack.c.b16 %v389, %v388
        %v396 = vpack.c.b16 %v391, %v390
        %v397 = vpack.c.b16 %v393, %v392
        %vm398 = vcmask 64512
        %v400 = vsel %vm398, %v394, 0
        %v403 = vsel %vm398, %v395, 0
        %v406 = vsel %vm398, %v396, 0
        %v409 = vsel %vm398, %v397, 0
        %vm411 = vcmask 1043456
        %v413 = vsel %vm411, %v385, 0
        %415 = vmatprep.subr.bf16.mxu0 0
        %416 = vmatpush1.bf16.msra.mxu0 %v413
        %417 = vmatprep.subr.bf16.mxu0 0
        %418 = vmatpush1.bf16.msra.mxu0 0
        %419 = vmatprep.subr.bf16.mxu0 0
        %420 = vmatpush1.bf16.msra.mxu0 0
        %421 = vmatprep.subr.bf16.mxu0 0
        %422 = vmatpush1.bf16.msra.mxu0 0
        %423 = vmatprep.subr.bf16.mxu0 0
        %424 = vmatpush1.bf16.msra.mxu0 0
        %425 = vmatprep.subr.bf16.mxu0 0
        %426 = vmatpush1.bf16.msra.mxu0 0
        %427 = vmatprep.subr.bf16.mxu0 0
        %428 = vmatpush1.bf16.msra.mxu0 0
        %429 = vmatprep.subr.bf16.mxu0 0
        %430 = vmatpush1.bf16.msra.mxu0 0
        %431 = vmatprep.subr.bf16.mxu0 0
        %432 = vmatpush1.bf16.msra.mxu0 0
        %433 = vmatprep.subr.bf16.mxu0 0
        %434 = vmatpush1.bf16.msra.mxu0 0
        %435 = vmatprep.subr.bf16.mxu0 0
        %436 = vmatpush1.bf16.msra.mxu0 0
        %437 = vmatprep.subr.bf16.mxu0 0
        %438 = vmatpush1.bf16.msra.mxu0 0
        %439 = vmatprep.subr.bf16.mxu0 0
        %440 = vmatpush1.bf16.msra.mxu0 0
        %441 = vmatprep.subr.bf16.mxu0 0
        %442 = vmatpush1.bf16.msra.mxu0 0
        %443 = vmatprep.subr.bf16.mxu0 0
        %444 = vmatpush1.bf16.msra.mxu0 0
        %445 = vmatprep.subr.bf16.mxu0 0
        %446 = vmatpush1.bf16.msra.mxu0 0
        %447 = vmatprep.mubr.bf16.mxu0 0
        %448 = vmatmul.mubr.bf16.gmra.mrb[0].mxu0 %v400
        %v449 = vpop.f32.mrb[0].mxu0
        %v450 = vadd.f32 0.0, %v449
        %v451 = vpop.f32.mrb[0].mxu0
        %v452 = vpop.f32.mrb[0].mxu0
        %v453 = vadd.f32 0.0, %v452
        %v454 = vpop.f32.mrb[0].mxu0
        %455 = vmatprep.mubr.bf16.mxu0 0
        %456 = vmatmul.mubr.bf16.gmra.mrb[0].mxu0 %v403
        %v457 = vpop.f32.mrb[0].mxu0
        %v458 = vadd.f32 0.0, %v457
        %v459 = vpop.f32.mrb[0].mxu0
        %v460 = vpop.f32.mrb[0].mxu0
        %v461 = vadd.f32 0.0, %v460
        %v462 = vpop.f32.mrb[0].mxu0
        %463 = vmatprep.mubr.bf16.mxu0 0
        %464 = vmatmul.mubr.bf16.gmra.mrb[0].mxu0 %v406
        %v465 = vpop.f32.mrb[0].mxu0
        %v466 = vadd.f32 0.0, %v465
        %v467 = vpop.f32.mrb[0].mxu0
        %v468 = vpop.f32.mrb[0].mxu0
        %v469 = vadd.f32 0.0, %v468
        %v470 = vpop.f32.mrb[0].mxu0
        %471 = vmatprep.mubr.bf16.mxu0 0
        %472 = vmatmul.mubr.bf16.gmra.mrb[0].mxu0 %v409
        %v473 = vpop.f32.mrb[0].mxu0
        %v474 = vadd.f32 0.0, %v473
        %v475 = vpop.f32.mrb[0].mxu0
        %v476 = vpop.f32.mrb[0].mxu0
        %v477 = vadd.f32 0.0, %v476
        %v478 = vpop.f32.mrb[0].mxu0
        %479 = vdwg.mxu0
        %v488 = vunpack.c.l.b16 %v248
        %v489 = vunpack.c.l.b16 %v250
        %v490 = vunpack.c.l.b16 %v252
        %v491 = vunpack.c.l.b16 %v254
        %v492 = vunpack.c.l.b16 %v256
        %v493 = vunpack.c.l.b16 %v258
        %v494 = vunpack.c.l.b16 %v260
        %v495 = vunpack.c.l.b16 %v262
        %v496 = vpack.c.b16 %v489, %v488
        %v497 = vpack.c.b16 %v491, %v490
        %v498 = vpack.c.b16 %v493, %v492
        %v499 = vpack.c.b16 %v495, %v494
        %v501 = vsel %vm398, %v496, 0
        %v504 = vsel %vm398, %v497, 0
        %v507 = vsel %vm398, %v498, 0
        %v510 = vsel %vm398, %v499, 0
        %v513 = vsel %vm411, %v268, 0
        %515 = vmatprep.subr.bf16.mxu0 0
        %516 = vmatpush1.bf16.msra.mxu0 %v513
        %517 = vmatprep.subr.bf16.mxu0 0
        %518 = vmatpush1.bf16.msra.mxu0 0
        %519 = vmatprep.subr.bf16.mxu0 0
        %520 = vmatpush1.bf16.msra.mxu0 0
        %521 = vmatprep.subr.bf16.mxu0 0
        %522 = vmatpush1.bf16.msra.mxu0 0
        %523 = vmatprep.subr.bf16.mxu0 0
        %524 = vmatpush1.bf16.msra.mxu0 0
        %525 = vmatprep.subr.bf16.mxu0 0
        %526 = vmatpush1.bf16.msra.mxu0 0
        %527 = vmatprep.subr.bf16.mxu0 0
        %528 = vmatpush1.bf16.msra.mxu0 0
        %529 = vmatprep.subr.bf16.mxu0 0
        %530 = vmatpush1.bf16.msra.mxu0 0
        %531 = vmatprep.subr.bf16.mxu0 0
        %532 = vmatpush1.bf16.msra.mxu0 0
        %533 = vmatprep.subr.bf16.mxu0 0
        %534 = vmatpush1.bf16.msra.mxu0 0
        %535 = vmatprep.subr.bf16.mxu0 0
        %536 = vmatpush1.bf16.msra.mxu0 0
        %537 = vmatprep.subr.bf16.mxu0 0
        %538 = vmatpush1.bf16.msra.mxu0 0
        %539 = vmatprep.subr.bf16.mxu0 0
        %540 = vmatpush1.bf16.msra.mxu0 0
        %541 = vmatprep.subr.bf16.mxu0 0
        %542 = vmatpush1.bf16.msra.mxu0 0
        %543 = vmatprep.subr.bf16.mxu0 0
        %544 = vmatpush1.bf16.msra.mxu0 0
        %545 = vmatprep.subr.bf16.mxu0 0
        %546 = vmatpush1.bf16.msra.mxu0 0
        %547 = vmatprep.mubr.bf16.mxu0 0
        %548 = vmatmul.mubr.bf16.gmra.mrb[0].mxu0 %v501
        %v549 = vpop.f32.mrb[0].mxu0
        %v550 = vadd.f32 %v450, %v549
        %v551 = vpop.f32.mrb[0].mxu0
        %v552 = vpop.f32.mrb[0].mxu0
        %v553 = vadd.f32 %v453, %v552
        %v554 = vpop.f32.mrb[0].mxu0
        %555 = vmatprep.mubr.bf16.mxu0 0
        %556 = vmatmul.mubr.bf16.gmra.mrb[0].mxu0 %v504
        %v557 = vpop.f32.mrb[0].mxu0
        %v558 = vadd.f32 %v458, %v557
        %v559 = vpop.f32.mrb[0].mxu0
        %v560 = vpop.f32.mrb[0].mxu0
        %v561 = vadd.f32 %v461, %v560
        %v562 = vpop.f32.mrb[0].mxu0
        %563 = vmatprep.mubr.bf16.mxu0 0
        %564 = vmatmul.mubr.bf16.gmra.mrb[0].mxu0 %v507
        %v565 = vpop.f32.mrb[0].mxu0
        %v566 = vadd.f32 %v466, %v565
        %v567 = vpop.f32.mrb[0].mxu0
        %v568 = vpop.f32.mrb[0].mxu0
        %v569 = vadd.f32 %v469, %v568
        %v570 = vpop.f32.mrb[0].mxu0
        %571 = vmatprep.mubr.bf16.mxu0 0
        %572 = vmatmul.mubr.bf16.gmra.mrb[0].mxu0 %v510
        %v573 = vpop.f32.mrb[0].mxu0
        %v574 = vadd.f32 %v474, %v573
        %v575 = vpop.f32.mrb[0].mxu0
        %v576 = vpop.f32.mrb[0].mxu0
        %v577 = vadd.f32 %v477, %v576
        %v578 = vpop.f32.mrb[0].mxu0
        %579 = vdwg.mxu0
        %s580 = scalar_lea.vmem [#allocation5], 8
        %v581 = vld [vmem:[%s580] sm:$0xf]
        %v583 = vunpack.c.l.b16 %v264
        %v584 = vpack.c.b16 %v490, %v489
        %v585 = vpack.c.b16 %v492, %v491
        %v586 = vpack.c.b16 %v494, %v493
        %v587 = vpack.c.b16 %v583, %v495
        %v589 = vsel %vm398, %v584, 0
        %v592 = vsel %vm398, %v585, 0
        %v595 = vsel %vm398, %v586, 0
        %v598 = vsel %vm398, %v587, 0
        %v601 = vsel %vm411, %v581, 0
        %603 = vmatprep.subr.bf16.mxu0 0
        %604 = vmatpush1.bf16.msra.mxu0 %v601
        %605 = vmatprep.subr.bf16.mxu0 0
        %606 = vmatpush1.bf16.msra.mxu0 0
        %607 = vmatprep.subr.bf16.mxu0 0
        %608 = vmatpush1.bf16.msra.mxu0 0
        %609 = vmatprep.subr.bf16.mxu0 0
        %610 = vmatpush1.bf16.msra.mxu0 0
        %611 = vmatprep.subr.bf16.mxu0 0
        %612 = vmatpush1.bf16.msra.mxu0 0
        %613 = vmatprep.subr.bf16.mxu0 0
        %614 = vmatpush1.bf16.msra.mxu0 0
        %615 = vmatprep.subr.bf16.mxu0 0
        %616 = vmatpush1.bf16.msra.mxu0 0
        %617 = vmatprep.subr.bf16.mxu0 0
        %618 = vmatpush1.bf16.msra.mxu0 0
        %619 = vmatprep.subr.bf16.mxu0 0
        %620 = vmatpush1.bf16.msra.mxu0 0
        %621 = vmatprep.subr.bf16.mxu0 0
        %622 = vmatpush1.bf16.msra.mxu0 0
        %623 = vmatprep.subr.bf16.mxu0 0
        %624 = vmatpush1.bf16.msra.mxu0 0
        %625 = vmatprep.subr.bf16.mxu0 0
        %626 = vmatpush1.bf16.msra.mxu0 0
        %627 = vmatprep.subr.bf16.mxu0 0
        %628 = vmatpush1.bf16.msra.mxu0 0
        %629 = vmatprep.subr.bf16.mxu0 0
        %630 = vmatpush1.bf16.msra.mxu0 0
        %631 = vmatprep.subr.bf16.mxu0 0
        %632 = vmatpush1.bf16.msra.mxu0 0
        %633 = vmatprep.subr.bf16.mxu0 0
        %634 = vmatpush1.bf16.msra.mxu0 0
        %635 = vmatprep.mubr.bf16.mxu0 0
        %636 = vmatmul.mubr.bf16.gmra.mrb[0].mxu0 %v589
        %v637 = vpop.f32.mrb[0].mxu0
        %v638 = vadd.f32 0.0, %v637
        %v639 = vpop.f32.mrb[0].mxu0
        %v640 = vpop.f32.mrb[0].mxu0
        %v641 = vadd.f32 0.0, %v640
        %v642 = vpop.f32.mrb[0].mxu0
        %643 = vmatprep.mubr.bf16.mxu0 0
        %644 = vmatmul.mubr.bf16.gmra.mrb[0].mxu0 %v592
        %v645 = vpop.f32.mrb[0].mxu0
        %v646 = vadd.f32 0.0, %v645
        %v647 = vpop.f32.mrb[0].mxu0
        %v648 = vpop.f32.mrb[0].mxu0
        %v649 = vadd.f32 0.0, %v648
        %v650 = vpop.f32.mrb[0].mxu0
        %651 = vmatprep.mubr.bf16.mxu0 0
        %652 = vmatmul.mubr.bf16.gmra.mrb[0].mxu0 %v595
        %v653 = vpop.f32.mrb[0].mxu0
        %v654 = vadd.f32 0.0, %v653
        %v655 = vpop.f32.mrb[0].mxu0
        %v656 = vpop.f32.mrb[0].mxu0
        %v657 = vadd.f32 0.0, %v656
        %v658 = vpop.f32.mrb[0].mxu0
        %659 = vmatprep.mubr.bf16.mxu0 0
        %660 = vmatmul.mubr.bf16.gmra.mrb[0].mxu0 %v598
        %v661 = vpop.f32.mrb[0].mxu0
        %v662 = vadd.f32 0.0, %v661
        %v663 = vpop.f32.mrb[0].mxu0
        %v664 = vpop.f32.mrb[0].mxu0
        %v665 = vadd.f32 0.0, %v664
        %v666 = vpop.f32.mrb[0].mxu0
        %667 = vdwg.mxu0
        %v668 = vadd.f32 %v550, %v638
        %v669 = vadd.f32 %v553, %v641
        %v670 = vadd.f32 %v558, %v646
        %v671 = vadd.f32 %v561, %v649
        %v672 = vadd.f32 %v566, %v654
        %v673 = vadd.f32 %v569, %v657
        %v674 = vadd.f32 %v574, %v662
        %v675 = vadd.f32 %v577, %v665
        %v677 = vshrl.u32 %v264, 16
        %v679 = vrot.slane %v677, 4
        %v680 = vshll.u32 %v264, 16
        %v682 = vrot.slane %v680, 5
        %v683 = vor.u32 %v679, %v682
        %v684 = vrot.slane %v683, 4
        %v686 = vshll.u32 %v265, 16
        %v688 = vrot.slane %v686, 5
        %v689 = vsel %vm271, %v684, %v688
        %s690 = scalar_lea.vmem [#allocation5], 12
        %v691 = vld [vmem:[%s690] sm:$0xf]
        %v692 = vunpack.c.l.b16 %v689
        %v693 = vpack.c.b16 %v388, %v387
        %v694 = vpack.c.b16 %v390, %v389
        %v695 = vpack.c.b16 %v392, %v391
        %v696 = vpack.c.b16 %v692, %v393
        %v698 = vsel %vm398, %v693, 0
        %v701 = vsel %vm398, %v694, 0
        %v704 = vsel %vm398, %v695, 0
        %v707 = vsel %vm398, %v696, 0
        %v710 = vsel %vm411, %v691, 0
        %712 = vmatprep.subr.bf16.mxu0 0
        %713 = vmatpush1.bf16.msra.mxu0 %v710
        %714 = vmatprep.subr.bf16.mxu0 0
        %715 = vmatpush1.bf16.msra.mxu0 0
        %716 = vmatprep.subr.bf16.mxu0 0
        %717 = vmatpush1.bf16.msra.mxu0 0
        %718 = vmatprep.subr.bf16.mxu0 0
        %719 = vmatpush1.bf16.msra.mxu0 0
        %720 = vmatprep.subr.bf16.mxu0 0
        %721 = vmatpush1.bf16.msra.mxu0 0
        %722 = vmatprep.subr.bf16.mxu0 0
        %723 = vmatpush1.bf16.msra.mxu0 0
        %724 = vmatprep.subr.bf16.mxu0 0
        %725 = vmatpush1.bf16.msra.mxu0 0
        %726 = vmatprep.subr.bf16.mxu0 0
        %727 = vmatpush1.bf16.msra.mxu0 0
        %728 = vmatprep.subr.bf16.mxu0 0
        %729 = vmatpush1.bf16.msra.mxu0 0
        %730 = vmatprep.subr.bf16.mxu0 0
        %731 = vmatpush1.bf16.msra.mxu0 0
        %732 = vmatprep.subr.bf16.mxu0 0
        %733 = vmatpush1.bf16.msra.mxu0 0
        %734 = vmatprep.subr.bf16.mxu0 0
        %735 = vmatpush1.bf16.msra.mxu0 0
        %736 = vmatprep.subr.bf16.mxu0 0
        %737 = vmatpush1.bf16.msra.mxu0 0
        %738 = vmatprep.subr.bf16.mxu0 0
        %739 = vmatpush1.bf16.msra.mxu0 0
        %740 = vmatprep.subr.bf16.mxu0 0
        %741 = vmatpush1.bf16.msra.mxu0 0
        %742 = vmatprep.subr.bf16.mxu0 0
        %743 = vmatpush1.bf16.msra.mxu0 0
        %744 = vmatprep.mubr.bf16.mxu0 0
        %745 = vmatmul.mubr.bf16.gmra.mrb[0].mxu0 %v698
        %v746 = vpop.f32.mrb[0].mxu0
        %v747 = vadd.f32 0.0, %v746
        %v748 = vpop.f32.mrb[0].mxu0
        %v749 = vpop.f32.mrb[0].mxu0
        %v750 = vadd.f32 0.0, %v749
        %v751 = vpop.f32.mrb[0].mxu0
        %752 = vmatprep.mubr.bf16.mxu0 0
        %753 = vmatmul.mubr.bf16.gmra.mrb[0].mxu0 %v701
        %v754 = vpop.f32.mrb[0].mxu0
        %v755 = vadd.f32 0.0, %v754
        %v756 = vpop.f32.mrb[0].mxu0
        %v757 = vpop.f32.mrb[0].mxu0
        %v758 = vadd.f32 0.0, %v757
        %v759 = vpop.f32.mrb[0].mxu0
        %760 = vmatprep.mubr.bf16.mxu0 0
        %761 = vmatmul.mubr.bf16.gmra.mrb[0].mxu0 %v704
        %v762 = vpop.f32.mrb[0].mxu0
        %v763 = vadd.f32 0.0, %v762
        %v764 = vpop.f32.mrb[0].mxu0
        %v765 = vpop.f32.mrb[0].mxu0
        %v766 = vadd.f32 0.0, %v765
        %v767 = vpop.f32.mrb[0].mxu0
        %768 = vmatprep.mubr.bf16.mxu0 0
        %769 = vmatmul.mubr.bf16.gmra.mrb[0].mxu0 %v707
        %v770 = vpop.f32.mrb[0].mxu0
        %v771 = vadd.f32 0.0, %v770
        %v772 = vpop.f32.mrb[0].mxu0
        %v773 = vpop.f32.mrb[0].mxu0
        %v774 = vadd.f32 0.0, %v773
        %v775 = vpop.f32.mrb[0].mxu0
        %776 = vdwg.mxu0
        %v777 = vadd.f32 %v668, %v747
        %v778 = vadd.f32 %v669, %v750
        %v779 = vadd.f32 %v670, %v755
        %v780 = vadd.f32 %v671, %v758
        %v781 = vadd.f32 %v672, %v763
        %v782 = vadd.f32 %v673, %v766
        %v783 = vadd.f32 %v674, %v771
        %v784 = vadd.f32 %v675, %v774
        %vm785 = vcmask 31744
        %v786 = vsel %vm785, %v777, 0.0
        %v787 = vsel %vm785, %v778, 0.0
        %v788 = vadd.f32 %v786, %v787
        %v789 = vsel %vm785, %v779, 0.0
        %v790 = vadd.f32 %v788, %v789
        %v791 = vsel %vm785, %v780, 0.0
        %v792 = vadd.f32 %v790, %v791
        %v793 = vsel %vm785, %v781, 0.0
        %v794 = vadd.f32 %v792, %v793
        %v795 = vsel %vm785, %v782, 0.0
        %v796 = vadd.f32 %v794, %v795
        %v797 = vsel %vm785, %v783, 0.0
        %v798 = vadd.f32 %v796, %v797
        %v799 = vsel %vm785, %v784, 0.0
        %v800 = vadd.f32 %v798, %v799
        %v801 = vrot.slane %v800, 4
        %v802 = vadd.f32 %v800, %v801
        %v803 = vrot.slane %v802, 2
        %v804 = vadd.f32 %v802, %v803
        %v805 = vrot.slane %v804, 1
        %v806 = vadd.f32 %v804, %v805
        %v807 = vadd.f32 %v806, 0.0
        %v808 = vmul.f32 %v777, %v777
        %v809 = vmul.f32 %v778, %v778
        %v810 = vmul.f32 %v779, %v779
        %v811 = vmul.f32 %v780, %v780
        %v812 = vmul.f32 %v781, %v781
        %v813 = vmul.f32 %v782, %v782
        %v814 = vmul.f32 %v783, %v783
        %v815 = vmul.f32 %v784, %v784
        %v816 = vsel %vm785, %v808, 0.0
        %v817 = vsel %vm785, %v809, 0.0
        %v818 = vadd.f32 %v816, %v817
        %v819 = vsel %vm785, %v810, 0.0
        %v820 = vadd.f32 %v818, %v819
        %v821 = vsel %vm785, %v811, 0.0
        %v822 = vadd.f32 %v820, %v821
        %v823 = vsel %vm785, %v812, 0.0
        %v824 = vadd.f32 %v822, %v823
        %v825 = vsel %vm785, %v813, 0.0
        %v826 = vadd.f32 %v824, %v825
        %v827 = vsel %vm785, %v814, 0.0
        %v828 = vadd.f32 %v826, %v827
        %v829 = vsel %vm785, %v815, 0.0
        %v830 = vadd.f32 %v828, %v829
        %v831 = vrot.slane %v830, 4
        %v832 = vadd.f32 %v830, %v831
        %v833 = vrot.slane %v832, 2
        %v834 = vadd.f32 %v832, %v833
        %v835 = vrot.slane %v834, 1
        %v836 = vadd.f32 %v834, %v835
        %v837 = vadd.f32 %v836, 0.0
        %v838 = vpack.c.bf16 %v777, %v777
        %v839 = vpack.c.bf16 %v778, %v778
        %v840 = vpack.c.bf16 %v779, %v779
        %v841 = vpack.c.bf16 %v780, %v780
        %v842 = vpack.c.bf16 %v781, %v781
        %v843 = vpack.c.bf16 %v782, %v782
        %v844 = vpack.c.bf16 %v783, %v783
        %v845 = vpack.c.bf16 %v784, %v784
        %vm846 = vcmask 27648
        %847 = vst.msk [vmem:[%s234] sm:$0xf] %vm846, %v838
        %848 = vst.msk [vmem:[%s234 + $0x8] sm:$0xf] %vm846, %v839
        %849 = vst.msk [vmem:[%s234 + $0x10] sm:$0xf] %vm846, %v840
        %850 = vst.msk [vmem:[%s234 + $0x18] sm:$0xf] %vm846, %v841
        %851 = vst.msk [vmem:[%s234 + $0x20] sm:$0xf] %vm846, %v842
        %852 = vst.msk [vmem:[%s234 + $0x28] sm:$0xf] %vm846, %v843
        %853 = vst.msk [vmem:[%s234 + $0x30] sm:$0xf] %vm846, %v844
        %854 = vst.msk [vmem:[%s234 + $0x38] sm:$0xf] %vm846, %v845
        %s855 = scalar_lea.vmem [#allocation5], 16
        %v856 = vld [vmem:[%s855] sm:$0xf]
        %vm865 = vcmask 1042432
        %vm866 = vcmask 1046532
        %vm867 = vmor %vm865, %vm866
        %v868 = vrot.slane %v248, 5
        %v869 = vrot.slane %v868, 4
        %v870 = vrot.slane %v249, 5
        %v871 = vsel %vm867, %v869, %v870
        %v872 = vrot.slane %v250, 5
        %v873 = vrot.slane %v872, 4
        %v874 = vrot.slane %v251, 5
        %v875 = vsel %vm867, %v873, %v874
        %v876 = vrot.slane %v252, 5
        %v877 = vrot.slane %v876, 4
        %v878 = vrot.slane %v253, 5
        %v879 = vsel %vm867, %v877, %v878
        %v880 = vrot.slane %v254, 5
        %v881 = vrot.slane %v880, 4
        %v882 = vrot.slane %v255, 5
        %v883 = vsel %vm867, %v881, %v882
        %v884 = vrot.slane %v256, 5
        %v885 = vrot.slane %v884, 4
        %v886 = vrot.slane %v257, 5
        %v887 = vsel %vm867, %v885, %v886
        %v888 = vrot.slane %v258, 5
        %v889 = vrot.slane %v888, 4
        %v890 = vrot.slane %v259, 5
        %v891 = vsel %vm867, %v889, %v890
        %v892 = vrot.slane %v260, 5
        %v893 = vrot.slane %v892, 4
        %v894 = vrot.slane %v261, 5
        %v895 = vsel %vm867, %v893, %v894
        %v896 = vrot.slane %v262, 5
        %v897 = vrot.slane %v896, 4
        %v898 = vrot.slane %v263, 5
        %v899 = vsel %vm867, %v897, %v898
        %s900 = scalar_lea.vmem [#allocation5], 20
        %v901 = vld [vmem:[%s900] sm:$0xf]
        %v902 = vunpack.c.l.b16 %v871
        %v903 = vunpack.c.l.b16 %v875
        %v904 = vunpack.c.l.b16 %v879
        %v905 = vunpack.c.l.b16 %v883
        %v906 = vunpack.c.l.b16 %v887
        %v907 = vunpack.c.l.b16 %v891
        %v908 = vunpack.c.l.b16 %v895
        %v909 = vunpack.c.l.b16 %v899
        %v910 = vpack.c.b16 %v903, %v902
        %v911 = vpack.c.b16 %v905, %v904
        %v912 = vpack.c.b16 %v907, %v906
        %v913 = vpack.c.b16 %v909, %v908
        %v915 = vsel %vm398, %v910, 0
        %v918 = vsel %vm398, %v911, 0
        %v921 = vsel %vm398, %v912, 0
        %v924 = vsel %vm398, %v913, 0
        %v927 = vsel %vm411, %v901, 0
        %929 = vmatprep.subr.bf16.mxu0 0
        %930 = vmatpush1.bf16.msra.mxu0 %v927
        %931 = vmatprep.subr.bf16.mxu0 0
        %932 = vmatpush1.bf16.msra.mxu0 0
        %933 = vmatprep.subr.bf16.mxu0 0
        %934 = vmatpush1.bf16.msra.mxu0 0
        %935 = vmatprep.subr.bf16.mxu0 0
        %936 = vmatpush1.bf16.msra.mxu0 0
        %937 = vmatprep.subr.bf16.mxu0 0
        %938 = vmatpush1.bf16.msra.mxu0 0
        %939 = vmatprep.subr.bf16.mxu0 0
        %940 = vmatpush1.bf16.msra.mxu0 0
        %941 = vmatprep.subr.bf16.mxu0 0
        %942 = vmatpush1.bf16.msra.mxu0 0
        %943 = vmatprep.subr.bf16.mxu0 0
        %944 = vmatpush1.bf16.msra.mxu0 0
        %945 = vmatprep.subr.bf16.mxu0 0
        %946 = vmatpush1.bf16.msra.mxu0 0
        %947 = vmatprep.subr.bf16.mxu0 0
        %948 = vmatpush1.bf16.msra.mxu0 0
        %949 = vmatprep.subr.bf16.mxu0 0
        %950 = vmatpush1.bf16.msra.mxu0 0
        %951 = vmatprep.subr.bf16.mxu0 0
        %952 = vmatpush1.bf16.msra.mxu0 0
        %953 = vmatprep.subr.bf16.mxu0 0
        %954 = vmatpush1.bf16.msra.mxu0 0
        %955 = vmatprep.subr.bf16.mxu0 0
        %956 = vmatpush1.bf16.msra.mxu0 0
        %957 = vmatprep.subr.bf16.mxu0 0
        %958 = vmatpush1.bf16.msra.mxu0 0
        %959 = vmatprep.subr.bf16.mxu0 0
        %960 = vmatpush1.bf16.msra.mxu0 0
        %961 = vmatprep.mubr.bf16.mxu0 0
        %962 = vmatmul.mubr.bf16.gmra.mrb[0].mxu0 %v915
        %v963 = vpop.f32.mrb[0].mxu0
        %v964 = vadd.f32 0.0, %v963
        %v965 = vpop.f32.mrb[0].mxu0
        %v966 = vpop.f32.mrb[0].mxu0
        %v967 = vadd.f32 0.0, %v966
        %v968 = vpop.f32.mrb[0].mxu0
        %969 = vmatprep.mubr.bf16.mxu0 0
        %970 = vmatmul.mubr.bf16.gmra.mrb[0].mxu0 %v918
        %v971 = vpop.f32.mrb[0].mxu0
        %v972 = vadd.f32 0.0, %v971
        %v973 = vpop.f32.mrb[0].mxu0
        %v974 = vpop.f32.mrb[0].mxu0
        %v975 = vadd.f32 0.0, %v974
        %v976 = vpop.f32.mrb[0].mxu0
        %977 = vmatprep.mubr.bf16.mxu0 0
        %978 = vmatmul.mubr.bf16.gmra.mrb[0].mxu0 %v921
        %v979 = vpop.f32.mrb[0].mxu0
        %v980 = vadd.f32 0.0, %v979
        %v981 = vpop.f32.mrb[0].mxu0
        %v982 = vpop.f32.mrb[0].mxu0
        %v983 = vadd.f32 0.0, %v982
        %v984 = vpop.f32.mrb[0].mxu0
        %985 = vmatprep.mubr.bf16.mxu0 0
        %986 = vmatmul.mubr.bf16.gmra.mrb[0].mxu0 %v924
        %v987 = vpop.f32.mrb[0].mxu0
        %v988 = vadd.f32 0.0, %v987
        %v989 = vpop.f32.mrb[0].mxu0
        %v990 = vpop.f32.mrb[0].mxu0
        %v991 = vadd.f32 0.0, %v990
        %v992 = vpop.f32.mrb[0].mxu0
        %993 = vdwg.mxu0
        %v995 = vsel %vm411, %v856, 0
        %997 = vmatprep.subr.bf16.mxu0 0
        %998 = vmatpush1.bf16.msra.mxu0 %v995
        %999 = vmatprep.subr.bf16.mxu0 0
        %1000 = vmatpush1.bf16.msra.mxu0 0
        %1001 = vmatprep.subr.bf16.mxu0 0
        %1002 = vmatpush1.bf16.msra.mxu0 0
        %1003 = vmatprep.subr.bf16.mxu0 0
        %1004 = vmatpush1.bf16.msra.mxu0 0
        %1005 = vmatprep.subr.bf16.mxu0 0
        %1006 = vmatpush1.bf16.msra.mxu0 0
        %1007 = vmatprep.subr.bf16.mxu0 0
        %1008 = vmatpush1.bf16.msra.mxu0 0
        %1009 = vmatprep.subr.bf16.mxu0 0
        %1010 = vmatpush1.bf16.msra.mxu0 0
        %1011 = vmatprep.subr.bf16.mxu0 0
        %1012 = vmatpush1.bf16.msra.mxu0 0
        %1013 = vmatprep.subr.bf16.mxu0 0
        %1014 = vmatpush1.bf16.msra.mxu0 0
        %1015 = vmatprep.subr.bf16.mxu0 0
        %1016 = vmatpush1.bf16.msra.mxu0 0
        %1017 = vmatprep.subr.bf16.mxu0 0
        %1018 = vmatpush1.bf16.msra.mxu0 0
        %1019 = vmatprep.subr.bf16.mxu0 0
        %1020 = vmatpush1.bf16.msra.mxu0 0
        %1021 = vmatprep.subr.bf16.mxu0 0
        %1022 = vmatpush1.bf16.msra.mxu0 0
        %1023 = vmatprep.subr.bf16.mxu0 0
        %1024 = vmatpush1.bf16.msra.mxu0 0
        %1025 = vmatprep.subr.bf16.mxu0 0
        %1026 = vmatpush1.bf16.msra.mxu0 0
        %1027 = vmatprep.subr.bf16.mxu0 0
        %1028 = vmatpush1.bf16.msra.mxu0 0
        %1029 = vmatprep.mubr.bf16.mxu0 0
        %1030 = vmatmul.mubr.bf16.gmra.mrb[0].mxu0 %v400
        %v1031 = vpop.f32.mrb[0].mxu0
        %v1032 = vadd.f32 %v964, %v1031
        %v1033 = vpop.f32.mrb[0].mxu0
        %v1034 = vpop.f32.mrb[0].mxu0
        %v1035 = vadd.f32 %v967, %v1034
        %v1036 = vpop.f32.mrb[0].mxu0
        %1037 = vmatprep.mubr.bf16.mxu0 0
        %1038 = vmatmul.mubr.bf16.gmra.mrb[0].mxu0 %v403
        %v1039 = vpop.f32.mrb[0].mxu0
        %v1040 = vadd.f32 %v972, %v1039
        %v1041 = vpop.f32.mrb[0].mxu0
        %v1042 = vpop.f32.mrb[0].mxu0
        %v1043 = vadd.f32 %v975, %v1042
        %v1044 = vpop.f32.mrb[0].mxu0
        %1045 = vmatprep.mubr.bf16.mxu0 0
        %1046 = vmatmul.mubr.bf16.gmra.mrb[0].mxu0 %v406
        %v1047 = vpop.f32.mrb[0].mxu0
        %v1048 = vadd.f32 %v980, %v1047
        %v1049 = vpop.f32.mrb[0].mxu0
        %v1050 = vpop.f32.mrb[0].mxu0
        %v1051 = vadd.f32 %v983, %v1050
        %v1052 = vpop.f32.mrb[0].mxu0
        %1053 = vmatprep.mubr.bf16.mxu0 0
        %1054 = vmatmul.mubr.bf16.gmra.mrb[0].mxu0 %v409
        %v1055 = vpop.f32.mrb[0].mxu0
        %v1056 = vadd.f32 %v988, %v1055
        %v1057 = vpop.f32.mrb[0].mxu0
        %v1058 = vpop.f32.mrb[0].mxu0
        %v1059 = vadd.f32 %v991, %v1058
        %v1060 = vpop.f32.mrb[0].mxu0
        %1061 = vdwg.mxu0
        %s1062 = scalar_lea.vmem [#allocation5], 24
        %v1063 = vld [vmem:[%s1062] sm:$0xf]
        %v1065 = vsel %vm411, %v1063, 0
        %1067 = vmatprep.subr.bf16.mxu0 0
        %1068 = vmatpush1.bf16.msra.mxu0 %v1065
        %1069 = vmatprep.subr.bf16.mxu0 0
        %1070 = vmatpush1.bf16.msra.mxu0 0
        %1071 = vmatprep.subr.bf16.mxu0 0
        %1072 = vmatpush1.bf16.msra.mxu0 0
        %1073 = vmatprep.subr.bf16.mxu0 0
        %1074 = vmatpush1.bf16.msra.mxu0 0
        %1075 = vmatprep.subr.bf16.mxu0 0
        %1076 = vmatpush1.bf16.msra.mxu0 0
        %1077 = vmatprep.subr.bf16.mxu0 0
        %1078 = vmatpush1.bf16.msra.mxu0 0
        %1079 = vmatprep.subr.bf16.mxu0 0
        %1080 = vmatpush1.bf16.msra.mxu0 0
        %1081 = vmatprep.subr.bf16.mxu0 0
        %1082 = vmatpush1.bf16.msra.mxu0 0
        %1083 = vmatprep.subr.bf16.mxu0 0
        %1084 = vmatpush1.bf16.msra.mxu0 0
        %1085 = vmatprep.subr.bf16.mxu0 0
        %1086 = vmatpush1.bf16.msra.mxu0 0
        %1087 = vmatprep.subr.bf16.mxu0 0
        %1088 = vmatpush1.bf16.msra.mxu0 0
        %1089 = vmatprep.subr.bf16.mxu0 0
        %1090 = vmatpush1.bf16.msra.mxu0 0
        %1091 = vmatprep.subr.bf16.mxu0 0
        %1092 = vmatpush1.bf16.msra.mxu0 0
        %1093 = vmatprep.subr.bf16.mxu0 0
        %1094 = vmatpush1.bf16.msra.mxu0 0
        %1095 = vmatprep.subr.bf16.mxu0 0
        %1096 = vmatpush1.bf16.msra.mxu0 0
        %1097 = vmatprep.subr.bf16.mxu0 0
        %1098 = vmatpush1.bf16.msra.mxu0 0
        %1099 = vmatprep.mubr.bf16.mxu0 0
        %1100 = vmatmul.mubr.bf16.gmra.mrb[0].mxu0 %v698
        %v1101 = vpop.f32.mrb[0].mxu0
        %v1102 = vadd.f32 0.0, %v1101
        %v1103 = vpop.f32.mrb[0].mxu0
        %v1104 = vpop.f32.mrb[0].mxu0
        %v1105 = vadd.f32 0.0, %v1104
        %v1106 = vpop.f32.mrb[0].mxu0
        %1107 = vmatprep.mubr.bf16.mxu0 0
        %1108 = vmatmul.mubr.bf16.gmra.mrb[0].mxu0 %v701
        %v1109 = vpop.f32.mrb[0].mxu0
        %v1110 = vadd.f32 0.0, %v1109
        %v1111 = vpop.f32.mrb[0].mxu0
        %v1112 = vpop.f32.mrb[0].mxu0
        %v1113 = vadd.f32 0.0, %v1112
        %v1114 = vpop.f32.mrb[0].mxu0
        %1115 = vmatprep.mubr.bf16.mxu0 0
        %1116 = vmatmul.mubr.bf16.gmra.mrb[0].mxu0 %v704
        %v1117 = vpop.f32.mrb[0].mxu0
        %v1118 = vadd.f32 0.0, %v1117
        %v1119 = vpop.f32.mrb[0].mxu0
        %v1120 = vpop.f32.mrb[0].mxu0
        %v1121 = vadd.f32 0.0, %v1120
        %v1122 = vpop.f32.mrb[0].mxu0
        %1123 = vmatprep.mubr.bf16.mxu0 0
        %1124 = vmatmul.mubr.bf16.gmra.mrb[0].mxu0 %v707
        %v1125 = vpop.f32.mrb[0].mxu0
        %v1126 = vadd.f32 0.0, %v1125
        %v1127 = vpop.f32.mrb[0].mxu0
        %v1128 = vpop.f32.mrb[0].mxu0
        %v1129 = vadd.f32 0.0, %v1128
        %v1130 = vpop.f32.mrb[0].mxu0
        %1131 = vdwg.mxu0
        %v1132 = vadd.f32 %v1032, %v1102
        %v1133 = vadd.f32 %v1035, %v1105
        %v1134 = vadd.f32 %v1040, %v1110
        %v1135 = vadd.f32 %v1043, %v1113
        %v1136 = vadd.f32 %v1048, %v1118
        %v1137 = vadd.f32 %v1051, %v1121
        %v1138 = vadd.f32 %v1056, %v1126
        %v1139 = vadd.f32 %v1059, %v1129
        %v1141 = vrot.slane %v264, 5
        %v1142 = vrot.slane %v1141, 4
        %v1143 = vrot.slane %v265, 5
        %v1144 = vsel %vm867, %v1142, %v1143
        %s1145 = scalar_lea.vmem [#allocation5], 28
        %v1146 = vld [vmem:[%s1145] sm:$0xf]
        %v1147 = vunpack.c.l.b16 %v1144
        %v1148 = vpack.c.b16 %v904, %v903
        %v1149 = vpack.c.b16 %v906, %v905
        %v1150 = vpack.c.b16 %v908, %v907
        %v1151 = vpack.c.b16 %v1147, %v909
        %v1153 = vsel %vm398, %v1148, 0
        %v1156 = vsel %vm398, %v1149, 0
        %v1159 = vsel %vm398, %v1150, 0
        %v1162 = vsel %vm398, %v1151, 0
        %v1165 = vsel %vm411, %v1146, 0
        %1167 = vmatprep.subr.bf16.mxu0 0
        %1168 = vmatpush1.bf16.msra.mxu0 %v1165
        %1169 = vmatprep.subr.bf16.mxu0 0
        %1170 = vmatpush1.bf16.msra.mxu0 0
        %1171 = vmatprep.subr.bf16.mxu0 0
        %1172 = vmatpush1.bf16.msra.mxu0 0
        %1173 = vmatprep.subr.bf16.mxu0 0
        %1174 = vmatpush1.bf16.msra.mxu0 0
        %1175 = vmatprep.subr.bf16.mxu0 0
        %1176 = vmatpush1.bf16.msra.mxu0 0
        %1177 = vmatprep.subr.bf16.mxu0 0
        %1178 = vmatpush1.bf16.msra.mxu0 0
        %1179 = vmatprep.subr.bf16.mxu0 0
        %1180 = vmatpush1.bf16.msra.mxu0 0
        %1181 = vmatprep.subr.bf16.mxu0 0
        %1182 = vmatpush1.bf16.msra.mxu0 0
        %1183 = vmatprep.subr.bf16.mxu0 0
        %1184 = vmatpush1.bf16.msra.mxu0 0
        %1185 = vmatprep.subr.bf16.mxu0 0
        %1186 = vmatpush1.bf16.msra.mxu0 0
        %1187 = vmatprep.subr.bf16.mxu0 0
        %1188 = vmatpush1.bf16.msra.mxu0 0
        %1189 = vmatprep.subr.bf16.mxu0 0
        %1190 = vmatpush1.bf16.msra.mxu0 0
        %1191 = vmatprep.subr.bf16.mxu0 0
        %1192 = vmatpush1.bf16.msra.mxu0 0
        %1193 = vmatprep.subr.bf16.mxu0 0
        %1194 = vmatpush1.bf16.msra.mxu0 0
        %1195 = vmatprep.subr.bf16.mxu0 0
        %1196 = vmatpush1.bf16.msra.mxu0 0
        %1197 = vmatprep.subr.bf16.mxu0 0
        %1198 = vmatpush1.bf16.msra.mxu0 0
        %1199 = vmatprep.mubr.bf16.mxu0 0
        %1200 = vmatmul.mubr.bf16.gmra.mrb[0].mxu0 %v1153
        %v1201 = vpop.f32.mrb[0].mxu0
        %v1202 = vadd.f32 0.0, %v1201
        %v1203 = vpop.f32.mrb[0].mxu0
        %v1204 = vpop.f32.mrb[0].mxu0
        %v1205 = vadd.f32 0.0, %v1204
        %v1206 = vpop.f32.mrb[0].mxu0
        %1207 = vmatprep.mubr.bf16.mxu0 0
        %1208 = vmatmul.mubr.bf16.gmra.mrb[0].mxu0 %v1156
        %v1209 = vpop.f32.mrb[0].mxu0
        %v1210 = vadd.f32 0.0, %v1209
        %v1211 = vpop.f32.mrb[0].mxu0
        %v1212 = vpop.f32.mrb[0].mxu0
        %v1213 = vadd.f32 0.0, %v1212
        %v1214 = vpop.f32.mrb[0].mxu0
        %1215 = vmatprep.mubr.bf16.mxu0 0
        %1216 = vmatmul.mubr.bf16.gmra.mrb[0].mxu0 %v1159
        %v1217 = vpop.f32.mrb[0].mxu0
        %v1218 = vadd.f32 0.0, %v1217
        %v1219 = vpop.f32.mrb[0].mxu0
        %v1220 = vpop.f32.mrb[0].mxu0
        %v1221 = vadd.f32 0.0, %v1220
        %v1222 = vpop.f32.mrb[0].mxu0
        %1223 = vmatprep.mubr.bf16.mxu0 0
        %1224 = vmatmul.mubr.bf16.gmra.mrb[0].mxu0 %v1162
        %v1225 = vpop.f32.mrb[0].mxu0
        %v1226 = vadd.f32 0.0, %v1225
        %v1227 = vpop.f32.mrb[0].mxu0
        %v1228 = vpop.f32.mrb[0].mxu0
        %v1229 = vadd.f32 0.0, %v1228
        %v1230 = vpop.f32.mrb[0].mxu0
        %1231 = vdwg.mxu0
        %v1232 = vadd.f32 %v1132, %v1202
        %v1233 = vadd.f32 %v1133, %v1205
        %v1234 = vadd.f32 %v1134, %v1210
        %v1235 = vadd.f32 %v1135, %v1213
        %v1236 = vadd.f32 %v1136, %v1218
        %v1237 = vadd.f32 %v1137, %v1221
        %v1238 = vadd.f32 %v1138, %v1226
        %v1239 = vadd.f32 %v1139, %v1229
        %v1240 = vsel %vm785, %v1232, 0.0
        %v1241 = vsel %vm785, %v1233, 0.0
        %v1242 = vadd.f32 %v1240, %v1241
        %v1243 = vsel %vm785, %v1234, 0.0
        %v1244 = vadd.f32 %v1242, %v1243
        %v1245 = vsel %vm785, %v1235, 0.0
        %v1246 = vadd.f32 %v1244, %v1245
        %v1247 = vsel %vm785, %v1236, 0.0
        %v1248 = vadd.f32 %v1246, %v1247
        %v1249 = vsel %vm785, %v1237, 0.0
        %v1250 = vadd.f32 %v1248, %v1249
        %v1251 = vsel %vm785, %v1238, 0.0
        %v1252 = vadd.f32 %v1250, %v1251
        %v1253 = vsel %vm785, %v1239, 0.0
        %v1254 = vadd.f32 %v1252, %v1253
        %v1255 = vrot.slane %v1254, 4
        %v1256 = vadd.f32 %v1254, %v1255
        %v1257 = vrot.slane %v1256, 2
        %v1258 = vadd.f32 %v1256, %v1257
        %v1259 = vrot.slane %v1258, 1
        %v1260 = vadd.f32 %v1258, %v1259
        %v1261 = vadd.f32 %v807, %v1260
        %v1262 = vmul.f32 %v1232, %v1232
        %v1263 = vmul.f32 %v1233, %v1233
        %v1264 = vmul.f32 %v1234, %v1234
        %v1265 = vmul.f32 %v1235, %v1235
        %v1266 = vmul.f32 %v1236, %v1236
        %v1267 = vmul.f32 %v1237, %v1237
        %v1268 = vmul.f32 %v1238, %v1238
        %v1269 = vmul.f32 %v1239, %v1239
        %v1270 = vsel %vm785, %v1262, 0.0
        %v1271 = vsel %vm785, %v1263, 0.0
        %v1272 = vadd.f32 %v1270, %v1271
        %v1273 = vsel %vm785, %v1264, 0.0
        %v1274 = vadd.f32 %v1272, %v1273
        %v1275 = vsel %vm785, %v1265, 0.0
        %v1276 = vadd.f32 %v1274, %v1275
        %v1277 = vsel %vm785, %v1266, 0.0
        %v1278 = vadd.f32 %v1276, %v1277
        %v1279 = vsel %vm785, %v1267, 0.0
        %v1280 = vadd.f32 %v1278, %v1279
        %v1281 = vsel %vm785, %v1268, 0.0
        %v1282 = vadd.f32 %v1280, %v1281
        %v1283 = vsel %vm785, %v1269, 0.0
        %v1284 = vadd.f32 %v1282, %v1283
        %v1285 = vrot.slane %v1284, 4
        %v1286 = vadd.f32 %v1284, %v1285
        %v1287 = vrot.slane %v1286, 2
        %v1288 = vadd.f32 %v1286, %v1287
        %v1289 = vrot.slane %v1288, 1
        %v1290 = vadd.f32 %v1288, %v1289
        %v1291 = vadd.f32 %v837, %v1290
        %v1292 = vpack.c.bf16 %v1232, %v1232
        %v1293 = vpack.c.bf16 %v1233, %v1233
        %v1294 = vpack.c.bf16 %v1234, %v1234
        %v1295 = vpack.c.bf16 %v1235, %v1235
        %v1296 = vpack.c.bf16 %v1236, %v1236
        %v1297 = vpack.c.bf16 %v1237, %v1237
        %v1298 = vpack.c.bf16 %v1238, %v1238
        %v1299 = vpack.c.bf16 %v1239, %v1239
        %v1308 = vunpack.c.l.b16 %v1292
        %v1309 = vunpack.c.l.b16 %v1293
        %v1310 = vunpack.c.l.b16 %v1294
        %v1311 = vunpack.c.l.b16 %v1295
        %v1312 = vunpack.c.l.b16 %v1296
        %v1313 = vunpack.c.l.b16 %v1297
        %v1314 = vunpack.c.l.b16 %v1298
        %v1315 = vunpack.c.l.b16 %v1299
        %v1316 = vpack.c.b16 %v1308, %v1308
        %v1317 = vpack.c.b16 %v1309, %v1309
        %v1318 = vpack.c.b16 %v1310, %v1310
        %v1319 = vpack.c.b16 %v1311, %v1311
        %v1320 = vpack.c.b16 %v1312, %v1312
        %v1321 = vpack.c.b16 %v1313, %v1313
        %v1322 = vpack.c.b16 %v1314, %v1314
        %v1323 = vpack.c.b16 %v1315, %v1315
        %1324 = vrot.lane.b32.xlu0 %v1316, 4
        %v1325 = vpop.permute.xlu0 %1324
        %1326 = vrot.lane.b32.xlu0 %v1317, 4
        %v1327 = vpop.permute.xlu0 %1326
        %1328 = vrot.lane.b32.xlu0 %v1318, 4
        %v1329 = vpop.permute.xlu0 %1328
        %1330 = vrot.lane.b32.xlu0 %v1319, 4
        %v1331 = vpop.permute.xlu0 %1330
        %1332 = vrot.lane.b32.xlu0 %v1320, 4
        %v1333 = vpop.permute.xlu0 %1332
        %1334 = vrot.lane.b32.xlu0 %v1321, 4
        %v1335 = vpop.permute.xlu0 %1334
        %1336 = vrot.lane.b32.xlu0 %v1322, 4
        %v1337 = vpop.permute.xlu0 %1336
        %1338 = vrot.lane.b32.xlu0 %v1323, 4
        %v1339 = vpop.permute.xlu0 %1338
        %vm1348 = vcmask 60448
        %1349 = vst.msk [vmem:[%s234] sm:$0xf] %vm1348, %v1325
        %1350 = vst.msk [vmem:[%s234 + $0x8] sm:$0xf] %vm1348, %v1327
        %1351 = vst.msk [vmem:[%s234 + $0x10] sm:$0xf] %vm1348, %v1329
        %1352 = vst.msk [vmem:[%s234 + $0x18] sm:$0xf] %vm1348, %v1331
        %1353 = vst.msk [vmem:[%s234 + $0x20] sm:$0xf] %vm1348, %v1333
        %1354 = vst.msk [vmem:[%s234 + $0x28] sm:$0xf] %vm1348, %v1335
        %1355 = vst.msk [vmem:[%s234 + $0x30] sm:$0xf] %vm1348, %v1337
        %1356 = vst.msk [vmem:[%s234 + $0x38] sm:$0xf] %vm1348, %v1339
        %s1357 = scalar_lea.vmem [#allocation5], 32
        %v1358 = vld [vmem:[%s1357] sm:$0xf]
        %s1359 = scalar_lea.vmem [#allocation5], 36
        %v1360 = vld [vmem:[%s1359] sm:$0xf]
        %v1362 = vsel %vm411, %v1360, 0
        %1364 = vmatprep.subr.bf16.mxu0 0
        %1365 = vmatpush1.bf16.msra.mxu0 %v1362
        %1366 = vmatprep.subr.bf16.mxu0 0
        %1367 = vmatpush1.bf16.msra.mxu0 0
        %1368 = vmatprep.subr.bf16.mxu0 0
        %1369 = vmatpush1.bf16.msra.mxu0 0
        %1370 = vmatprep.subr.bf16.mxu0 0
        %1371 = vmatpush1.bf16.msra.mxu0 0
        %1372 = vmatprep.subr.bf16.mxu0 0
        %1373 = vmatpush1.bf16.msra.mxu0 0
        %1374 = vmatprep.subr.bf16.mxu0 0
        %1375 = vmatpush1.bf16.msra.mxu0 0
        %1376 = vmatprep.subr.bf16.mxu0 0
        %1377 = vmatpush1.bf16.msra.mxu0 0
        %1378 = vmatprep.subr.bf16.mxu0 0
        %1379 = vmatpush1.bf16.msra.mxu0 0
        %1380 = vmatprep.subr.bf16.mxu0 0
        %1381 = vmatpush1.bf16.msra.mxu0 0
        %1382 = vmatprep.subr.bf16.mxu0 0
        %1383 = vmatpush1.bf16.msra.mxu0 0
        %1384 = vmatprep.subr.bf16.mxu0 0
        %1385 = vmatpush1.bf16.msra.mxu0 0
        %1386 = vmatprep.subr.bf16.mxu0 0
        %1387 = vmatpush1.bf16.msra.mxu0 0
        %1388 = vmatprep.subr.bf16.mxu0 0
        %1389 = vmatpush1.bf16.msra.mxu0 0
        %1390 = vmatprep.subr.bf16.mxu0 0
        %1391 = vmatpush1.bf16.msra.mxu0 0
        %1392 = vmatprep.subr.bf16.mxu0 0
        %1393 = vmatpush1.bf16.msra.mxu0 0
        %1394 = vmatprep.subr.bf16.mxu0 0
        %1395 = vmatpush1.bf16.msra.mxu0 0
        %1396 = vmatprep.mubr.bf16.mxu0 0
        %1397 = vmatmul.mubr.bf16.gmra.mrb[0].mxu0 %v698
        %v1398 = vpop.f32.mrb[0].mxu0
        %v1399 = vadd.f32 0.0, %v1398
        %v1400 = vpop.f32.mrb[0].mxu0
        %v1401 = vpop.f32.mrb[0].mxu0
        %v1402 = vadd.f32 0.0, %v1401
        %v1403 = vpop.f32.mrb[0].mxu0
        %1404 = vmatprep.mubr.bf16.mxu0 0
        %1405 = vmatmul.mubr.bf16.gmra.mrb[0].mxu0 %v701
        %v1406 = vpop.f32.mrb[0].mxu0
        %v1407 = vadd.f32 0.0, %v1406
        %v1408 = vpop.f32.mrb[0].mxu0
        %v1409 = vpop.f32.mrb[0].mxu0
        %v1410 = vadd.f32 0.0, %v1409
        %v1411 = vpop.f32.mrb[0].mxu0
        %1412 = vmatprep.mubr.bf16.mxu0 0
        %1413 = vmatmul.mubr.bf16.gmra.mrb[0].mxu0 %v704
        %v1414 = vpop.f32.mrb[0].mxu0
        %v1415 = vadd.f32 0.0, %v1414
        %v1416 = vpop.f32.mrb[0].mxu0
        %v1417 = vpop.f32.mrb[0].mxu0
        %v1418 = vadd.f32 0.0, %v1417
        %v1419 = vpop.f32.mrb[0].mxu0
        %1420 = vmatprep.mubr.bf16.mxu0 0
        %1421 = vmatmul.mubr.bf16.gmra.mrb[0].mxu0 %v707
        %v1422 = vpop.f32.mrb[0].mxu0
        %v1423 = vadd.f32 0.0, %v1422
        %v1424 = vpop.f32.mrb[0].mxu0
        %v1425 = vpop.f32.mrb[0].mxu0
        %v1426 = vadd.f32 0.0, %v1425
        %v1427 = vpop.f32.mrb[0].mxu0
        %1428 = vdwg.mxu0
        %v1430 = vsel %vm411, %v1358, 0
        %1432 = vmatprep.subr.bf16.mxu0 0
        %1433 = vmatpush1.bf16.msra.mxu0 %v1430
        %1434 = vmatprep.subr.bf16.mxu0 0
        %1435 = vmatpush1.bf16.msra.mxu0 0
        %1436 = vmatprep.subr.bf16.mxu0 0
        %1437 = vmatpush1.bf16.msra.mxu0 0
        %1438 = vmatprep.subr.bf16.mxu0 0
        %1439 = vmatpush1.bf16.msra.mxu0 0
        %1440 = vmatprep.subr.bf16.mxu0 0
        %1441 = vmatpush1.bf16.msra.mxu0 0
        %1442 = vmatprep.subr.bf16.mxu0 0
        %1443 = vmatpush1.bf16.msra.mxu0 0
        %1444 = vmatprep.subr.bf16.mxu0 0
        %1445 = vmatpush1.bf16.msra.mxu0 0
        %1446 = vmatprep.subr.bf16.mxu0 0
        %1447 = vmatpush1.bf16.msra.mxu0 0
        %1448 = vmatprep.subr.bf16.mxu0 0
        %1449 = vmatpush1.bf16.msra.mxu0 0
        %1450 = vmatprep.subr.bf16.mxu0 0
        %1451 = vmatpush1.bf16.msra.mxu0 0
        %1452 = vmatprep.subr.bf16.mxu0 0
        %1453 = vmatpush1.bf16.msra.mxu0 0
        %1454 = vmatprep.subr.bf16.mxu0 0
        %1455 = vmatpush1.bf16.msra.mxu0 0
        %1456 = vmatprep.subr.bf16.mxu0 0
        %1457 = vmatpush1.bf16.msra.mxu0 0
        %1458 = vmatprep.subr.bf16.mxu0 0
        %1459 = vmatpush1.bf16.msra.mxu0 0
        %1460 = vmatprep.subr.bf16.mxu0 0
        %1461 = vmatpush1.bf16.msra.mxu0 0
        %1462 = vmatprep.subr.bf16.mxu0 0
        %1463 = vmatpush1.bf16.msra.mxu0 0
        %1464 = vmatprep.mubr.bf16.mxu0 0
        %1465 = vmatmul.mubr.bf16.gmra.mrb[0].mxu0 %v589
        %v1466 = vpop.f32.mrb[0].mxu0
        %v1467 = vadd.f32 %v1399, %v1466
        %v1468 = vpop.f32.mrb[0].mxu0
        %v1469 = vpop.f32.mrb[0].mxu0
        %v1470 = vadd.f32 %v1402, %v1469
        %v1471 = vpop.f32.mrb[0].mxu0
        %1472 = vmatprep.mubr.bf16.mxu0 0
        %1473 = vmatmul.mubr.bf16.gmra.mrb[0].mxu0 %v592
        %v1474 = vpop.f32.mrb[0].mxu0
        %v1475 = vadd.f32 %v1407, %v1474
        %v1476 = vpop.f32.mrb[0].mxu0
        %v1477 = vpop.f32.mrb[0].mxu0
        %v1478 = vadd.f32 %v1410, %v1477
        %v1479 = vpop.f32.mrb[0].mxu0
        %1480 = vmatprep.mubr.bf16.mxu0 0
        %1481 = vmatmul.mubr.bf16.gmra.mrb[0].mxu0 %v595
        %v1482 = vpop.f32.mrb[0].mxu0
        %v1483 = vadd.f32 %v1415, %v1482
        %v1484 = vpop.f32.mrb[0].mxu0
        %v1485 = vpop.f32.mrb[0].mxu0
        %v1486 = vadd.f32 %v1418, %v1485
        %v1487 = vpop.f32.mrb[0].mxu0
        %1488 = vmatprep.mubr.bf16.mxu0 0
        %1489 = vmatmul.mubr.bf16.gmra.mrb[0].mxu0 %v598
        %v1490 = vpop.f32.mrb[0].mxu0
        %v1491 = vadd.f32 %v1423, %v1490
        %v1492 = vpop.f32.mrb[0].mxu0
        %v1493 = vpop.f32.mrb[0].mxu0
        %v1494 = vadd.f32 %v1426, %v1493
        %v1495 = vpop.f32.mrb[0].mxu0
        %1496 = vdwg.mxu0
        %s1497 = scalar_lea.vmem [#allocation5], 40
        %v1498 = vld [vmem:[%s1497] sm:$0xf]
        %v1500 = vunpack.c.l.b16 %v266
        %v1501 = vpack.c.b16 %v1500, %v583
        %v1503 = vsel %vm398, %v1501, 0
        %v1506 = vsel %vm411, %v1498, 0
        %1508 = vmatprep.subr.bf16.mxu0 0
        %1509 = vmatpush1.bf16.msra.mxu0 %v1506
        %1510 = vmatprep.subr.bf16.mxu0 0
        %1511 = vmatpush1.bf16.msra.mxu0 0
        %1512 = vmatprep.subr.bf16.mxu0 0
        %1513 = vmatpush1.bf16.msra.mxu0 0
        %1514 = vmatprep.subr.bf16.mxu0 0
        %1515 = vmatpush1.bf16.msra.mxu0 0
        %1516 = vmatprep.subr.bf16.mxu0 0
        %1517 = vmatpush1.bf16.msra.mxu0 0
        %1518 = vmatprep.subr.bf16.mxu0 0
        %1519 = vmatpush1.bf16.msra.mxu0 0
        %1520 = vmatprep.subr.bf16.mxu0 0
        %1521 = vmatpush1.bf16.msra.mxu0 0
        %1522 = vmatprep.subr.bf16.mxu0 0
        %1523 = vmatpush1.bf16.msra.mxu0 0
        %1524 = vmatprep.subr.bf16.mxu0 0
        %1525 = vmatpush1.bf16.msra.mxu0 0
        %1526 = vmatprep.subr.bf16.mxu0 0
        %1527 = vmatpush1.bf16.msra.mxu0 0
        %1528 = vmatprep.subr.bf16.mxu0 0
        %1529 = vmatpush1.bf16.msra.mxu0 0
        %1530 = vmatprep.subr.bf16.mxu0 0
        %1531 = vmatpush1.bf16.msra.mxu0 0
        %1532 = vmatprep.subr.bf16.mxu0 0
        %1533 = vmatpush1.bf16.msra.mxu0 0
        %1534 = vmatprep.subr.bf16.mxu0 0
        %1535 = vmatpush1.bf16.msra.mxu0 0
        %1536 = vmatprep.subr.bf16.mxu0 0
        %1537 = vmatpush1.bf16.msra.mxu0 0
        %1538 = vmatprep.subr.bf16.mxu0 0
        %1539 = vmatpush1.bf16.msra.mxu0 0
        %1540 = vmatprep.mubr.bf16.mxu0 0
        %1541 = vmatmul.mubr.bf16.gmra.mrb[0].mxu0 %v504
        %v1542 = vpop.f32.mrb[0].mxu0
        %v1543 = vadd.f32 0.0, %v1542
        %v1544 = vpop.f32.mrb[0].mxu0
        %v1545 = vpop.f32.mrb[0].mxu0
        %v1546 = vadd.f32 0.0, %v1545
        %v1547 = vpop.f32.mrb[0].mxu0
        %1548 = vmatprep.mubr.bf16.mxu0 0
        %1549 = vmatmul.mubr.bf16.gmra.mrb[0].mxu0 %v507
        %v1550 = vpop.f32.mrb[0].mxu0
        %v1551 = vadd.f32 0.0, %v1550
        %v1552 = vpop.f32.mrb[0].mxu0
        %v1553 = vpop.f32.mrb[0].mxu0
        %v1554 = vadd.f32 0.0, %v1553
        %v1555 = vpop.f32.mrb[0].mxu0
        %1556 = vmatprep.mubr.bf16.mxu0 0
        %1557 = vmatmul.mubr.bf16.gmra.mrb[0].mxu0 %v510
        %v1558 = vpop.f32.mrb[0].mxu0
        %v1559 = vadd.f32 0.0, %v1558
        %v1560 = vpop.f32.mrb[0].mxu0
        %v1561 = vpop.f32.mrb[0].mxu0
        %v1562 = vadd.f32 0.0, %v1561
        %v1563 = vpop.f32.mrb[0].mxu0
        %1564 = vmatprep.mubr.bf16.mxu0 0
        %1565 = vmatmul.mubr.bf16.gmra.mrb[0].mxu0 %v1503
        %v1566 = vpop.f32.mrb[0].mxu0
        %v1567 = vadd.f32 0.0, %v1566
        %v1568 = vpop.f32.mrb[0].mxu0
        %v1569 = vpop.f32.mrb[0].mxu0
        %v1570 = vadd.f32 0.0, %v1569
        %v1571 = vpop.f32.mrb[0].mxu0
        %1572 = vdwg.mxu0
        %v1573 = vadd.f32 %v1467, %v1543
        %v1574 = vadd.f32 %v1470, %v1546
        %v1575 = vadd.f32 %v1475, %v1551
        %v1576 = vadd.f32 %v1478, %v1554
        %v1577 = vadd.f32 %v1483, %v1559
        %v1578 = vadd.f32 %v1486, %v1562
        %v1579 = vadd.f32 %v1491, %v1567
        %v1580 = vadd.f32 %v1494, %v1570
        %v1582 = vshrl.u32 %v266, 16
        %v1584 = vrot.slane %v1582, 4
        %v1585 = vshll.u32 %v266, 16
        %v1587 = vrot.slane %v1585, 5
        %v1588 = vor.u32 %v1584, %v1587
        %v1589 = vrot.slane %v1588, 4
        %v1591 = vshll.u32 %v267, 16
        %v1593 = vrot.slane %v1591, 5
        %v1594 = vsel %vm271, %v1589, %v1593
        %s1595 = scalar_lea.vmem [#allocation5], 44
        %v1596 = vld [vmem:[%s1595] sm:$0xf]
        %v1597 = vunpack.c.l.b16 %v1594
        %v1598 = vpack.c.b16 %v1597, %v692
        %v1600 = vsel %vm398, %v1598, 0
        %v1603 = vsel %vm411, %v1596, 0
        %1605 = vmatprep.subr.bf16.mxu0 0
        %1606 = vmatpush1.bf16.msra.mxu0 %v1603
        %1607 = vmatprep.subr.bf16.mxu0 0
        %1608 = vmatpush1.bf16.msra.mxu0 0
        %1609 = vmatprep.subr.bf16.mxu0 0
        %1610 = vmatpush1.bf16.msra.mxu0 0
        %1611 = vmatprep.subr.bf16.mxu0 0
        %1612 = vmatpush1.bf16.msra.mxu0 0
        %1613 = vmatprep.subr.bf16.mxu0 0
        %1614 = vmatpush1.bf16.msra.mxu0 0
        %1615 = vmatprep.subr.bf16.mxu0 0
        %1616 = vmatpush1.bf16.msra.mxu0 0
        %1617 = vmatprep.subr.bf16.mxu0 0
        %1618 = vmatpush1.bf16.msra.mxu0 0
        %1619 = vmatprep.subr.bf16.mxu0 0
        %1620 = vmatpush1.bf16.msra.mxu0 0
        %1621 = vmatprep.subr.bf16.mxu0 0
        %1622 = vmatpush1.bf16.msra.mxu0 0
        %1623 = vmatprep.subr.bf16.mxu0 0
        %1624 = vmatpush1.bf16.msra.mxu0 0
        %1625 = vmatprep.subr.bf16.mxu0 0
        %1626 = vmatpush1.bf16.msra.mxu0 0
        %1627 = vmatprep.subr.bf16.mxu0 0
        %1628 = vmatpush1.bf16.msra.mxu0 0
        %1629 = vmatprep.subr.bf16.mxu0 0
        %1630 = vmatpush1.bf16.msra.mxu0 0
        %1631 = vmatprep.subr.bf16.mxu0 0
        %1632 = vmatpush1.bf16.msra.mxu0 0
        %1633 = vmatprep.subr.bf16.mxu0 0
        %1634 = vmatpush1.bf16.msra.mxu0 0
        %1635 = vmatprep.subr.bf16.mxu0 0
        %1636 = vmatpush1.bf16.msra.mxu0 0
        %1637 = vmatprep.mubr.bf16.mxu0 0
        %1638 = vmatmul.mubr.bf16.gmra.mrb[0].mxu0 %v403
        %v1639 = vpop.f32.mrb[0].mxu0
        %v1640 = vadd.f32 0.0, %v1639
        %v1641 = vpop.f32.mrb[0].mxu0
        %v1642 = vpop.f32.mrb[0].mxu0
        %v1643 = vadd.f32 0.0, %v1642
        %v1644 = vpop.f32.mrb[0].mxu0
        %1645 = vmatprep.mubr.bf16.mxu0 0
        %1646 = vmatmul.mubr.bf16.gmra.mrb[0].mxu0 %v406
        %v1647 = vpop.f32.mrb[0].mxu0
        %v1648 = vadd.f32 0.0, %v1647
        %v1649 = vpop.f32.mrb[0].mxu0
        %v1650 = vpop.f32.mrb[0].mxu0
        %v1651 = vadd.f32 0.0, %v1650
        %v1652 = vpop.f32.mrb[0].mxu0
        %1653 = vmatprep.mubr.bf16.mxu0 0
        %1654 = vmatmul.mubr.bf16.gmra.mrb[0].mxu0 %v409
        %v1655 = vpop.f32.mrb[0].mxu0
        %v1656 = vadd.f32 0.0, %v1655
        %v1657 = vpop.f32.mrb[0].mxu0
        %v1658 = vpop.f32.mrb[0].mxu0
        %v1659 = vadd.f32 0.0, %v1658
        %v1660 = vpop.f32.mrb[0].mxu0
        %1661 = vmatprep.mubr.bf16.mxu0 0
        %1662 = vmatmul.mubr.bf16.gmra.mrb[0].mxu0 %v1600
        %v1663 = vpop.f32.mrb[0].mxu0
        %v1664 = vadd.f32 0.0, %v1663
        %v1665 = vpop.f32.mrb[0].mxu0
        %v1666 = vpop.f32.mrb[0].mxu0
        %v1667 = vadd.f32 0.0, %v1666
        %v1668 = vpop.f32.mrb[0].mxu0
        %1669 = vdwg.mxu0
        %v1670 = vadd.f32 %v1573, %v1640
        %v1671 = vadd.f32 %v1574, %v1643
        %v1672 = vadd.f32 %v1575, %v1648
        %v1673 = vadd.f32 %v1576, %v1651
        %v1674 = vadd.f32 %v1577, %v1656
        %v1675 = vadd.f32 %v1578, %v1659
        %v1676 = vadd.f32 %v1579, %v1664
        %v1677 = vadd.f32 %v1580, %v1667
        %v1678 = vsel %vm785, %v1670, 0.0
        %v1679 = vsel %vm785, %v1671, 0.0
        %v1680 = vadd.f32 %v1678, %v1679
        %v1681 = vsel %vm785, %v1672, 0.0
        %v1682 = vadd.f32 %v1680, %v1681
        %v1683 = vsel %vm785, %v1673, 0.0
        %v1684 = vadd.f32 %v1682, %v1683
        %v1685 = vsel %vm785, %v1674, 0.0
        %v1686 = vadd.f32 %v1684, %v1685
        %v1687 = vsel %vm785, %v1675, 0.0
        %v1688 = vadd.f32 %v1686, %v1687
        %v1689 = vsel %vm785, %v1676, 0.0
        %v1690 = vadd.f32 %v1688, %v1689
        %v1691 = vsel %vm785, %v1677, 0.0
        %v1692 = vadd.f32 %v1690, %v1691
        %v1693 = vrot.slane %v1692, 4
        %v1694 = vadd.f32 %v1692, %v1693
        %v1695 = vrot.slane %v1694, 2
        %v1696 = vadd.f32 %v1694, %v1695
        %v1697 = vrot.slane %v1696, 1
        %v1698 = vadd.f32 %v1696, %v1697
        %v1699 = vadd.f32 %v1261, %v1698
        %v1700 = vmul.f32 %v1670, %v1670
        %v1701 = vmul.f32 %v1671, %v1671
        %v1702 = vmul.f32 %v1672, %v1672
        %v1703 = vmul.f32 %v1673, %v1673
        %v1704 = vmul.f32 %v1674, %v1674
        %v1705 = vmul.f32 %v1675, %v1675
        %v1706 = vmul.f32 %v1676, %v1676
        %v1707 = vmul.f32 %v1677, %v1677
        %v1708 = vsel %vm785, %v1700, 0.0
        %v1709 = vsel %vm785, %v1701, 0.0
        %v1710 = vadd.f32 %v1708, %v1709
        %v1711 = vsel %vm785, %v1702, 0.0
        %v1712 = vadd.f32 %v1710, %v1711
        %v1713 = vsel %vm785, %v1703, 0.0
        %v1714 = vadd.f32 %v1712, %v1713
        %v1715 = vsel %vm785, %v1704, 0.0
        %v1716 = vadd.f32 %v1714, %v1715
        %v1717 = vsel %vm785, %v1705, 0.0
        %v1718 = vadd.f32 %v1716, %v1717
        %v1719 = vsel %vm785, %v1706, 0.0
        %v1720 = vadd.f32 %v1718, %v1719
        %v1721 = vsel %vm785, %v1707, 0.0
        %v1722 = vadd.f32 %v1720, %v1721
        %v1723 = vrot.slane %v1722, 4
        %v1724 = vadd.f32 %v1722, %v1723
        %v1725 = vrot.slane %v1724, 2
        %v1726 = vadd.f32 %v1724, %v1725
        %v1727 = vrot.slane %v1726, 1
        %v1728 = vadd.f32 %v1726, %v1727
        %v1729 = vadd.f32 %v1291, %v1728
        %v1730 = vpack.c.bf16 %v1670, %v1670
        %v1731 = vpack.c.bf16 %v1671, %v1671
        %v1732 = vpack.c.bf16 %v1672, %v1672
        %v1733 = vpack.c.bf16 %v1673, %v1673
        %v1734 = vpack.c.bf16 %v1674, %v1674
        %v1735 = vpack.c.bf16 %v1675, %v1675
        %v1736 = vpack.c.bf16 %v1676, %v1676
        %v1737 = vpack.c.bf16 %v1677, %v1677
        %s1738 = scalar_lea.vmem %s234, 4 [#allocation7]
        %1739 = vst.msk [vmem:[%s1738] sm:$0xf] %vm846, %v1730
        %1740 = vst.msk [vmem:[%s1738 + $0x8] sm:$0xf] %vm846, %v1731
        %1741 = vst.msk [vmem:[%s1738 + $0x10] sm:$0xf] %vm846, %v1732
        %1742 = vst.msk [vmem:[%s1738 + $0x18] sm:$0xf] %vm846, %v1733
        %1743 = vst.msk [vmem:[%s1738 + $0x20] sm:$0xf] %vm846, %v1734
        %1744 = vst.msk [vmem:[%s1738 + $0x28] sm:$0xf] %vm846, %v1735
        %1745 = vst.msk [vmem:[%s1738 + $0x30] sm:$0xf] %vm846, %v1736
        %1746 = vst.msk [vmem:[%s1738 + $0x38] sm:$0xf] %vm846, %v1737
        %s1747 = scalar_lea.vmem [#allocation5], 48
        %v1748 = vld [vmem:[%s1747] sm:$0xf]
        %s1749 = scalar_lea.vmem [#allocation5], 52
        %v1750 = vld [vmem:[%s1749] sm:$0xf]
        %v1752 = vsel %vm411, %v1750, 0
        %1754 = vmatprep.subr.bf16.mxu0 0
        %1755 = vmatpush1.bf16.msra.mxu0 %v1752
        %1756 = vmatprep.subr.bf16.mxu0 0
        %1757 = vmatpush1.bf16.msra.mxu0 0
        %1758 = vmatprep.subr.bf16.mxu0 0
        %1759 = vmatpush1.bf16.msra.mxu0 0
        %1760 = vmatprep.subr.bf16.mxu0 0
        %1761 = vmatpush1.bf16.msra.mxu0 0
        %1762 = vmatprep.subr.bf16.mxu0 0
        %1763 = vmatpush1.bf16.msra.mxu0 0
        %1764 = vmatprep.subr.bf16.mxu0 0
        %1765 = vmatpush1.bf16.msra.mxu0 0
        %1766 = vmatprep.subr.bf16.mxu0 0
        %1767 = vmatpush1.bf16.msra.mxu0 0
        %1768 = vmatprep.subr.bf16.mxu0 0
        %1769 = vmatpush1.bf16.msra.mxu0 0
        %1770 = vmatprep.subr.bf16.mxu0 0
        %1771 = vmatpush1.bf16.msra.mxu0 0
        %1772 = vmatprep.subr.bf16.mxu0 0
        %1773 = vmatpush1.bf16.msra.mxu0 0
        %1774 = vmatprep.subr.bf16.mxu0 0
        %1775 = vmatpush1.bf16.msra.mxu0 0
        %1776 = vmatprep.subr.bf16.mxu0 0
        %1777 = vmatpush1.bf16.msra.mxu0 0
        %1778 = vmatprep.subr.bf16.mxu0 0
        %1779 = vmatpush1.bf16.msra.mxu0 0
        %1780 = vmatprep.subr.bf16.mxu0 0
        %1781 = vmatpush1.bf16.msra.mxu0 0
        %1782 = vmatprep.subr.bf16.mxu0 0
        %1783 = vmatpush1.bf16.msra.mxu0 0
        %1784 = vmatprep.subr.bf16.mxu0 0
        %1785 = vmatpush1.bf16.msra.mxu0 0
        %1786 = vmatprep.mubr.bf16.mxu0 0
        %1787 = vmatmul.mubr.bf16.gmra.mrb[0].mxu0 %v1153
        %v1788 = vpop.f32.mrb[0].mxu0
        %v1789 = vadd.f32 0.0, %v1788
        %v1790 = vpop.f32.mrb[0].mxu0
        %v1791 = vpop.f32.mrb[0].mxu0
        %v1792 = vadd.f32 0.0, %v1791
        %v1793 = vpop.f32.mrb[0].mxu0
        %1794 = vmatprep.mubr.bf16.mxu0 0
        %1795 = vmatmul.mubr.bf16.gmra.mrb[0].mxu0 %v1156
        %v1796 = vpop.f32.mrb[0].mxu0
        %v1797 = vadd.f32 0.0, %v1796
        %v1798 = vpop.f32.mrb[0].mxu0
        %v1799 = vpop.f32.mrb[0].mxu0
        %v1800 = vadd.f32 0.0, %v1799
        %v1801 = vpop.f32.mrb[0].mxu0
        %1802 = vmatprep.mubr.bf16.mxu0 0
        %1803 = vmatmul.mubr.bf16.gmra.mrb[0].mxu0 %v1159
        %v1804 = vpop.f32.mrb[0].mxu0
        %v1805 = vadd.f32 0.0, %v1804
        %v1806 = vpop.f32.mrb[0].mxu0
        %v1807 = vpop.f32.mrb[0].mxu0
        %v1808 = vadd.f32 0.0, %v1807
        %v1809 = vpop.f32.mrb[0].mxu0
        %1810 = vmatprep.mubr.bf16.mxu0 0
        %1811 = vmatmul.mubr.bf16.gmra.mrb[0].mxu0 %v1162
        %v1812 = vpop.f32.mrb[0].mxu0
        %v1813 = vadd.f32 0.0, %v1812
        %v1814 = vpop.f32.mrb[0].mxu0
        %v1815 = vpop.f32.mrb[0].mxu0
        %v1816 = vadd.f32 0.0, %v1815
        %v1817 = vpop.f32.mrb[0].mxu0
        %1818 = vdwg.mxu0
        %v1820 = vsel %vm411, %v1748, 0
        %1822 = vmatprep.subr.bf16.mxu0 0
        %1823 = vmatpush1.bf16.msra.mxu0 %v1820
        %1824 = vmatprep.subr.bf16.mxu0 0
        %1825 = vmatpush1.bf16.msra.mxu0 0
        %1826 = vmatprep.subr.bf16.mxu0 0
        %1827 = vmatpush1.bf16.msra.mxu0 0
        %1828 = vmatprep.subr.bf16.mxu0 0
        %1829 = vmatpush1.bf16.msra.mxu0 0
        %1830 = vmatprep.subr.bf16.mxu0 0
        %1831 = vmatpush1.bf16.msra.mxu0 0
        %1832 = vmatprep.subr.bf16.mxu0 0
        %1833 = vmatpush1.bf16.msra.mxu0 0
        %1834 = vmatprep.subr.bf16.mxu0 0
        %1835 = vmatpush1.bf16.msra.mxu0 0
        %1836 = vmatprep.subr.bf16.mxu0 0
        %1837 = vmatpush1.bf16.msra.mxu0 0
        %1838 = vmatprep.subr.bf16.mxu0 0
        %1839 = vmatpush1.bf16.msra.mxu0 0
        %1840 = vmatprep.subr.bf16.mxu0 0
        %1841 = vmatpush1.bf16.msra.mxu0 0
        %1842 = vmatprep.subr.bf16.mxu0 0
        %1843 = vmatpush1.bf16.msra.mxu0 0
        %1844 = vmatprep.subr.bf16.mxu0 0
        %1845 = vmatpush1.bf16.msra.mxu0 0
        %1846 = vmatprep.subr.bf16.mxu0 0
        %1847 = vmatpush1.bf16.msra.mxu0 0
        %1848 = vmatprep.subr.bf16.mxu0 0
        %1849 = vmatpush1.bf16.msra.mxu0 0
        %1850 = vmatprep.subr.bf16.mxu0 0
        %1851 = vmatpush1.bf16.msra.mxu0 0
        %1852 = vmatprep.subr.bf16.mxu0 0
        %1853 = vmatpush1.bf16.msra.mxu0 0
        %1854 = vmatprep.mubr.bf16.mxu0 0
        %1855 = vmatmul.mubr.bf16.gmra.mrb[0].mxu0 %v698
        %v1856 = vpop.f32.mrb[0].mxu0
        %v1857 = vadd.f32 %v1789, %v1856
        %v1858 = vpop.f32.mrb[0].mxu0
        %v1859 = vpop.f32.mrb[0].mxu0
        %v1860 = vadd.f32 %v1792, %v1859
        %v1861 = vpop.f32.mrb[0].mxu0
        %1862 = vmatprep.mubr.bf16.mxu0 0
        %1863 = vmatmul.mubr.bf16.gmra.mrb[0].mxu0 %v701
        %v1864 = vpop.f32.mrb[0].mxu0
        %v1865 = vadd.f32 %v1797, %v1864
        %v1866 = vpop.f32.mrb[0].mxu0
        %v1867 = vpop.f32.mrb[0].mxu0
        %v1868 = vadd.f32 %v1800, %v1867
        %v1869 = vpop.f32.mrb[0].mxu0
        %1870 = vmatprep.mubr.bf16.mxu0 0
        %1871 = vmatmul.mubr.bf16.gmra.mrb[0].mxu0 %v704
        %v1872 = vpop.f32.mrb[0].mxu0
        %v1873 = vadd.f32 %v1805, %v1872
        %v1874 = vpop.f32.mrb[0].mxu0
        %v1875 = vpop.f32.mrb[0].mxu0
        %v1876 = vadd.f32 %v1808, %v1875
        %v1877 = vpop.f32.mrb[0].mxu0
        %1878 = vmatprep.mubr.bf16.mxu0 0
        %1879 = vmatmul.mubr.bf16.gmra.mrb[0].mxu0 %v707
        %v1880 = vpop.f32.mrb[0].mxu0
        %v1881 = vadd.f32 %v1813, %v1880
        %v1882 = vpop.f32.mrb[0].mxu0
        %v1883 = vpop.f32.mrb[0].mxu0
        %v1884 = vadd.f32 %v1816, %v1883
        %v1885 = vpop.f32.mrb[0].mxu0
        %1886 = vdwg.mxu0
        %s1887 = scalar_lea.vmem [#allocation5], 56
        %v1888 = vld [vmem:[%s1887] sm:$0xf]
        %v1890 = vsel %vm411, %v1888, 0
        %1892 = vmatprep.subr.bf16.mxu0 0
        %1893 = vmatpush1.bf16.msra.mxu0 %v1890
        %1894 = vmatprep.subr.bf16.mxu0 0
        %1895 = vmatpush1.bf16.msra.mxu0 0
        %1896 = vmatprep.subr.bf16.mxu0 0
        %1897 = vmatpush1.bf16.msra.mxu0 0
        %1898 = vmatprep.subr.bf16.mxu0 0
        %1899 = vmatpush1.bf16.msra.mxu0 0
        %1900 = vmatprep.subr.bf16.mxu0 0
        %1901 = vmatpush1.bf16.msra.mxu0 0
        %1902 = vmatprep.subr.bf16.mxu0 0
        %1903 = vmatpush1.bf16.msra.mxu0 0
        %1904 = vmatprep.subr.bf16.mxu0 0
        %1905 = vmatpush1.bf16.msra.mxu0 0
        %1906 = vmatprep.subr.bf16.mxu0 0
        %1907 = vmatpush1.bf16.msra.mxu0 0
        %1908 = vmatprep.subr.bf16.mxu0 0
        %1909 = vmatpush1.bf16.msra.mxu0 0
        %1910 = vmatprep.subr.bf16.mxu0 0
        %1911 = vmatpush1.bf16.msra.mxu0 0
        %1912 = vmatprep.subr.bf16.mxu0 0
        %1913 = vmatpush1.bf16.msra.mxu0 0
        %1914 = vmatprep.subr.bf16.mxu0 0
        %1915 = vmatpush1.bf16.msra.mxu0 0
        %1916 = vmatprep.subr.bf16.mxu0 0
        %1917 = vmatpush1.bf16.msra.mxu0 0
        %1918 = vmatprep.subr.bf16.mxu0 0
        %1919 = vmatpush1.bf16.msra.mxu0 0
        %1920 = vmatprep.subr.bf16.mxu0 0
        %1921 = vmatpush1.bf16.msra.mxu0 0
        %1922 = vmatprep.subr.bf16.mxu0 0
        %1923 = vmatpush1.bf16.msra.mxu0 0
        %1924 = vmatprep.mubr.bf16.mxu0 0
        %1925 = vmatmul.mubr.bf16.gmra.mrb[0].mxu0 %v403
        %v1926 = vpop.f32.mrb[0].mxu0
        %v1927 = vadd.f32 0.0, %v1926
        %v1928 = vpop.f32.mrb[0].mxu0
        %v1929 = vpop.f32.mrb[0].mxu0
        %v1930 = vadd.f32 0.0, %v1929
        %v1931 = vpop.f32.mrb[0].mxu0
        %1932 = vmatprep.mubr.bf16.mxu0 0
        %1933 = vmatmul.mubr.bf16.gmra.mrb[0].mxu0 %v406
        %v1934 = vpop.f32.mrb[0].mxu0
        %v1935 = vadd.f32 0.0, %v1934
        %v1936 = vpop.f32.mrb[0].mxu0
        %v1937 = vpop.f32.mrb[0].mxu0
        %v1938 = vadd.f32 0.0, %v1937
        %v1939 = vpop.f32.mrb[0].mxu0
        %1940 = vmatprep.mubr.bf16.mxu0 0
        %1941 = vmatmul.mubr.bf16.gmra.mrb[0].mxu0 %v409
        %v1942 = vpop.f32.mrb[0].mxu0
        %v1943 = vadd.f32 0.0, %v1942
        %v1944 = vpop.f32.mrb[0].mxu0
        %v1945 = vpop.f32.mrb[0].mxu0
        %v1946 = vadd.f32 0.0, %v1945
        %v1947 = vpop.f32.mrb[0].mxu0
        %1948 = vmatprep.mubr.bf16.mxu0 0
        %1949 = vmatmul.mubr.bf16.gmra.mrb[0].mxu0 %v1600
        %v1950 = vpop.f32.mrb[0].mxu0
        %v1951 = vadd.f32 0.0, %v1950
        %v1952 = vpop.f32.mrb[0].mxu0
        %v1953 = vpop.f32.mrb[0].mxu0
        %v1954 = vadd.f32 0.0, %v1953
        %v1955 = vpop.f32.mrb[0].mxu0
        %1956 = vdwg.mxu0
        %v1957 = vadd.f32 %v1857, %v1927
        %v1958 = vadd.f32 %v1860, %v1930
        %v1959 = vadd.f32 %v1865, %v1935
        %v1960 = vadd.f32 %v1868, %v1938
        %v1961 = vadd.f32 %v1873, %v1943
        %v1962 = vadd.f32 %v1876, %v1946
        %v1963 = vadd.f32 %v1881, %v1951
        %v1964 = vadd.f32 %v1884, %v1954
        %v1966 = vrot.slane %v266, 5
        %v1967 = vrot.slane %v1966, 4
        %v1968 = vrot.slane %v267, 5
        %v1969 = vsel %vm867, %v1967, %v1968
        %s1970 = scalar_lea.vmem [#allocation5], 60
        %v1971 = vld [vmem:[%s1970] sm:$0xf]
        %v1972 = vunpack.c.l.b16 %v1969
        %v1973 = vpack.c.b16 %v1972, %v1147
        %v1975 = vsel %vm398, %v1973, 0
        %v1978 = vsel %vm411, %v1971, 0
        %1980 = vmatprep.subr.bf16.mxu0 0
        %1981 = vmatpush1.bf16.msra.mxu0 %v1978
        %1982 = vmatprep.subr.bf16.mxu0 0
        %1983 = vmatpush1.bf16.msra.mxu0 0
        %1984 = vmatprep.subr.bf16.mxu0 0
        %1985 = vmatpush1.bf16.msra.mxu0 0
        %1986 = vmatprep.subr.bf16.mxu0 0
        %1987 = vmatpush1.bf16.msra.mxu0 0
        %1988 = vmatprep.subr.bf16.mxu0 0
        %1989 = vmatpush1.bf16.msra.mxu0 0
        %1990 = vmatprep.subr.bf16.mxu0 0
        %1991 = vmatpush1.bf16.msra.mxu0 0
        %1992 = vmatprep.subr.bf16.mxu0 0
        %1993 = vmatpush1.bf16.msra.mxu0 0
        %1994 = vmatprep.subr.bf16.mxu0 0
        %1995 = vmatpush1.bf16.msra.mxu0 0
        %1996 = vmatprep.subr.bf16.mxu0 0
        %1997 = vmatpush1.bf16.msra.mxu0 0
        %1998 = vmatprep.subr.bf16.mxu0 0
        %1999 = vmatpush1.bf16.msra.mxu0 0
        %2000 = vmatprep.subr.bf16.mxu0 0
        %2001 = vmatpush1.bf16.msra.mxu0 0
        %2002 = vmatprep.subr.bf16.mxu0 0
        %2003 = vmatpush1.bf16.msra.mxu0 0
        %2004 = vmatprep.subr.bf16.mxu0 0
        %2005 = vmatpush1.bf16.msra.mxu0 0
        %2006 = vmatprep.subr.bf16.mxu0 0
        %2007 = vmatpush1.bf16.msra.mxu0 0
        %2008 = vmatprep.subr.bf16.mxu0 0
        %2009 = vmatpush1.bf16.msra.mxu0 0
        %2010 = vmatprep.subr.bf16.mxu0 0
        %2011 = vmatpush1.bf16.msra.mxu0 0
        %2012 = vmatprep.mubr.bf16.mxu0 0
        %2013 = vmatmul.mubr.bf16.gmra.mrb[0].mxu0 %v918
        %v2014 = vpop.f32.mrb[0].mxu0
        %v2015 = vadd.f32 0.0, %v2014
        %v2016 = vpop.f32.mrb[0].mxu0
        %v2017 = vpop.f32.mrb[0].mxu0
        %v2018 = vadd.f32 0.0, %v2017
        %v2019 = vpop.f32.mrb[0].mxu0
        %2020 = vmatprep.mubr.bf16.mxu0 0
        %2021 = vmatmul.mubr.bf16.gmra.mrb[0].mxu0 %v921
        %v2022 = vpop.f32.mrb[0].mxu0
        %v2023 = vadd.f32 0.0, %v2022
        %v2024 = vpop.f32.mrb[0].mxu0
        %v2025 = vpop.f32.mrb[0].mxu0
        %v2026 = vadd.f32 0.0, %v2025
        %v2027 = vpop.f32.mrb[0].mxu0
        %2028 = vmatprep.mubr.bf16.mxu0 0
        %2029 = vmatmul.mubr.bf16.gmra.mrb[0].mxu0 %v924
        %v2030 = vpop.f32.mrb[0].mxu0
        %v2031 = vadd.f32 0.0, %v2030
        %v2032 = vpop.f32.mrb[0].mxu0
        %v2033 = vpop.f32.mrb[0].mxu0
        %v2034 = vadd.f32 0.0, %v2033
        %v2035 = vpop.f32.mrb[0].mxu0
        %2036 = vmatprep.mubr.bf16.mxu0 0
        %2037 = vmatmul.mubr.bf16.gmra.mrb[0].mxu0 %v1975
        %v2038 = vpop.f32.mrb[0].mxu0
        %v2039 = vadd.f32 0.0, %v2038
        %v2040 = vpop.f32.mrb[0].mxu0
        %v2041 = vpop.f32.mrb[0].mxu0
        %v2042 = vadd.f32 0.0, %v2041
        %v2043 = vpop.f32.mrb[0].mxu0
        %2044 = vdwg.mxu0
        %v2045 = vadd.f32 %v1957, %v2015
        %v2046 = vadd.f32 %v1958, %v2018
        %v2047 = vadd.f32 %v1959, %v2023
        %v2048 = vadd.f32 %v1960, %v2026
        %v2049 = vadd.f32 %v1961, %v2031
        %v2050 = vadd.f32 %v1962, %v2034
        %v2051 = vadd.f32 %v1963, %v2039
        %v2052 = vadd.f32 %v1964, %v2042
        %v2053 = vsel %vm785, %v2045, 0.0
        %v2054 = vsel %vm785, %v2046, 0.0
        %v2055 = vadd.f32 %v2053, %v2054
        %v2056 = vsel %vm785, %v2047, 0.0
        %v2057 = vadd.f32 %v2055, %v2056
        %v2058 = vsel %vm785, %v2048, 0.0
        %v2059 = vadd.f32 %v2057, %v2058
        %v2060 = vsel %vm785, %v2049, 0.0
        %v2061 = vadd.f32 %v2059, %v2060
        %v2062 = vsel %vm785, %v2050, 0.0
        %v2063 = vadd.f32 %v2061, %v2062
        %v2064 = vsel %vm785, %v2051, 0.0
        %v2065 = vadd.f32 %v2063, %v2064
        %v2066 = vsel %vm785, %v2052, 0.0
        %v2067 = vadd.f32 %v2065, %v2066
        %v2068 = vrot.slane %v2067, 4
        %v2069 = vadd.f32 %v2067, %v2068
        %v2070 = vrot.slane %v2069, 2
        %v2071 = vadd.f32 %v2069, %v2070
        %v2072 = vrot.slane %v2071, 1
        %v2073 = vadd.f32 %v2071, %v2072
        %v2074 = vadd.f32 %v1699, %v2073
        %v2075 = vmul.f32 %v2045, %v2045
        %v2076 = vmul.f32 %v2046, %v2046
        %v2077 = vmul.f32 %v2047, %v2047
        %v2078 = vmul.f32 %v2048, %v2048
        %v2079 = vmul.f32 %v2049, %v2049
        %v2080 = vmul.f32 %v2050, %v2050
        %v2081 = vmul.f32 %v2051, %v2051
        %v2082 = vmul.f32 %v2052, %v2052
        %v2083 = vsel %vm785, %v2075, 0.0
        %v2084 = vsel %vm785, %v2076, 0.0
        %v2085 = vadd.f32 %v2083, %v2084
        %v2086 = vsel %vm785, %v2077, 0.0
        %v2087 = vadd.f32 %v2085, %v2086
        %v2088 = vsel %vm785, %v2078, 0.0
        %v2089 = vadd.f32 %v2087, %v2088
        %v2090 = vsel %vm785, %v2079, 0.0
        %v2091 = vadd.f32 %v2089, %v2090
        %v2092 = vsel %vm785, %v2080, 0.0
        %v2093 = vadd.f32 %v2091, %v2092
        %v2094 = vsel %vm785, %v2081, 0.0
        %v2095 = vadd.f32 %v2093, %v2094
        %v2096 = vsel %vm785, %v2082, 0.0
        %v2097 = vadd.f32 %v2095, %v2096
        %v2098 = vrot.slane %v2097, 4
        %v2099 = vadd.f32 %v2097, %v2098
        %v2100 = vrot.slane %v2099, 2
        %v2101 = vadd.f32 %v2099, %v2100
        %v2102 = vrot.slane %v2101, 1
        %v2103 = vadd.f32 %v2101, %v2102
        %v2104 = vadd.f32 %v1729, %v2103
        %v2105 = vpack.c.bf16 %v2045, %v2045
        %v2106 = vpack.c.bf16 %v2046, %v2046
        %v2107 = vpack.c.bf16 %v2047, %v2047
        %v2108 = vpack.c.bf16 %v2048, %v2048
        %v2109 = vpack.c.bf16 %v2049, %v2049
        %v2110 = vpack.c.bf16 %v2050, %v2050
        %v2111 = vpack.c.bf16 %v2051, %v2051
        %v2112 = vpack.c.bf16 %v2052, %v2052
        %v2121 = vunpack.c.l.b16 %v2105
        %v2122 = vunpack.c.l.b16 %v2106
        %v2123 = vunpack.c.l.b16 %v2107
        %v2124 = vunpack.c.l.b16 %v2108
        %v2125 = vunpack.c.l.b16 %v2109
        %v2126 = vunpack.c.l.b16 %v2110
        %v2127 = vunpack.c.l.b16 %v2111
        %v2128 = vunpack.c.l.b16 %v2112
        %v2129 = vpack.c.b16 %v2121, %v2121
        %v2130 = vpack.c.b16 %v2122, %v2122
        %v2131 = vpack.c.b16 %v2123, %v2123
        %v2132 = vpack.c.b16 %v2124, %v2124
        %v2133 = vpack.c.b16 %v2125, %v2125
        %v2134 = vpack.c.b16 %v2126, %v2126
        %v2135 = vpack.c.b16 %v2127, %v2127
        %v2136 = vpack.c.b16 %v2128, %v2128
        %2137 = vrot.lane.b32.xlu0 %v2129, 4
        %v2138 = vpop.permute.xlu0 %2137
        %2139 = vrot.lane.b32.xlu0 %v2130, 4
        %v2140 = vpop.permute.xlu0 %2139
        %2141 = vrot.lane.b32.xlu0 %v2131, 4
        %v2142 = vpop.permute.xlu0 %2141
        %2143 = vrot.lane.b32.xlu0 %v2132, 4
        %v2144 = vpop.permute.xlu0 %2143
        %2145 = vrot.lane.b32.xlu0 %v2133, 4
        %v2146 = vpop.permute.xlu0 %2145
        %2147 = vrot.lane.b32.xlu0 %v2134, 4
        %v2148 = vpop.permute.xlu0 %2147
        %2149 = vrot.lane.b32.xlu0 %v2135, 4
        %v2150 = vpop.permute.xlu0 %2149
        %2151 = vrot.lane.b32.xlu0 %v2136, 4
        %v2152 = vpop.permute.xlu0 %2151
        %2161 = vst.msk [vmem:[%s1738] sm:$0xf] %vm1348, %v2138
        %2162 = vst.msk [vmem:[%s1738 + $0x8] sm:$0xf] %vm1348, %v2140
        %2163 = vst.msk [vmem:[%s1738 + $0x10] sm:$0xf] %vm1348, %v2142
        %2164 = vst.msk [vmem:[%s1738 + $0x18] sm:$0xf] %vm1348, %v2144
        %2165 = vst.msk [vmem:[%s1738 + $0x20] sm:$0xf] %vm1348, %v2146
        %2166 = vst.msk [vmem:[%s1738 + $0x28] sm:$0xf] %vm1348, %v2148
        %2167 = vst.msk [vmem:[%s1738 + $0x30] sm:$0xf] %vm1348, %v2150
        %2168 = vst.msk [vmem:[%s1738 + $0x38] sm:$0xf] %vm1348, %v2152
        %vm2169 = vcmask 24576
        %2170 = vst.msk [vmem:[%s240] sm:$0x1] %vm2169, %v2074
        %2171 = vst.msk [vmem:[%s246] sm:$0x1] %vm2169, %v2104
        %s2172 = sand.u32 %s81, 1
        %s2173 = scalar_lea.sflag [#allocation4], %s2172
        %s2174 = sand.u32 %s81, 1
        %s2175 = smul.addr %s2174, 64
        %s2176 = scalar_lea.vmem [#allocation7], %s2175
        %s2177 = sand.u32 %s26, 1
        %s2178 = scalar_lea.sflag [#allocation9], %s2177
        %s2179 = sand.u32 %s107, 1
        %s2180 = scalar_lea.vmem [#allocation8], %s2179
        %s2181 = sand.u32 %s26, 1
        %s2182 = scalar_lea.sflag [#allocation9], %s2181
        %s2183 = sand.u32 %s133, 1
        %s2184 = scalar_lea.vmem [#allocation10], %s2183
        // Predicated region
        $region37: #{unet_innermost_forward.4} parent=27 // pred_check
          %p2185 = pneg %p91
        $region38: #{unet_innermost_forward.4} parent=27 // pred_check_branch
          %2187 = sbr.rel (%p2185) target = $region40
        $region39: #{unet_innermost_forward.4} parent=27 // pred_region
          %s2189 = ssub.s32 1024, 1024
          %2190 = vsyncadd %s2173, %s2189
          %s2191 = smul.addr %s26, 16
          %s2192 = smul.addr %s2191, 64
          %s2193 = scalar_lea.hbm %s2, %s2192
          %s2194 = sshll.u32 %s2176, 4
          %s2195 = int_to_ptr.vmem [resolvable:$true] %s2194
          %2200 = dma.vmem_to_hbm [thread:$0]  %s2195, 1024, %s2193, %s2173, 64, 64, 4
        $region40: #{unet_innermost_forward.4} parent=27 // pred_fallthru
          _
        // Predicated region
        $region41: #{unet_innermost_forward.4} parent=27 // pred_check
          %p2201 = pneg %p117
        $region42: #{unet_innermost_forward.4} parent=27 // pred_check_branch
          %2203 = sbr.rel (%p2201) target = $region44
        $region43: #{unet_innermost_forward.4} parent=27 // pred_region
          %s2205 = ssub.s32 16, 16
          %2206 = vsyncadd %s2178, %s2205
          %s2207 = smul.addr %s26, 16
          %s2208 = scalar_lea.hbm %s3, %s2207
          %s2210 = sshll.u32 %s2180, 4
          %s2211 = int_to_ptr.vmem [resolvable:$true] %s2210
          %2213 = dma.vmem_to_hbm [thread:$0]  %s2211, 16, %s2208, %s2178
        $region44: #{unet_innermost_forward.4} parent=27 // pred_fallthru
          _
        // Predicated region
        $region45: #{unet_innermost_forward.4} parent=27 // pred_check
          %p2214 = pneg %p143
        $region46: #{unet_innermost_forward.4} parent=27 // pred_check_branch
          %2216 = sbr.rel (%p2214) target = $region48
        $region47: #{unet_innermost_forward.4} parent=27 // pred_region
          %s2218 = ssub.s32 16, 16
          %2219 = vsyncadd %s2182, %s2218
          %s2220 = smul.addr %s26, 16
          %s2221 = scalar_lea.hbm %s4, %s2220
          %s2223 = sshll.u32 %s2184, 4
          %s2224 = int_to_ptr.vmem [resolvable:$true] %s2223
          %2226 = dma.vmem_to_hbm [thread:$0]  %s2224, 16, %s2221, %s2182
        $region48: #{unet_innermost_forward.4} parent=27 // pred_fallthru
          _
      $region28: #{unet_innermost_forward.4} parent=5 // pred_fallthru
        _
      %p2227 = scmp.le.s32.totalorder 2, %s21
      // Predicated region
      $region49: #{unet_innermost_forward.4} parent=5 // pred_check
        %p2228 = pneg %p2227
      $region50: #{unet_innermost_forward.4} parent=5 // pred_check_branch
        %2230 = sbr.rel (%p2228) target = $region52
      $region51: #{unet_innermost_forward.4} parent=5 // pred_region
        %s2231 = ssub.s32 %s21, 2
        // Predicated region
        $region53: #{unet_innermost_forward.4} parent=51 // pred_check
          %p2232 = pneg %p97
        $region54: #{unet_innermost_forward.4} parent=51 // pred_check_branch
          %2234 = sbr.rel (%p2232) target = $region56
        $region55: #{unet_innermost_forward.4} parent=51 // pred_region
          %s2235 = sand.u32 %s82, 1
          %s2236 = scalar_lea.sflag [#allocation4], %s2235
          %s2237 = sand.u32 %s82, 1
          %s2238 = smul.addr %s2237, 64
          %s2239 = scalar_lea.vmem [#allocation7], %s2238
          %2240 = dma.done %s2236, 1024
        $region56: #{unet_innermost_forward.4} parent=51 // pred_fallthru
          _
        // Predicated region
        $region57: #{unet_innermost_forward.4} parent=51 // pred_check
          %p2241 = pneg %p123
        $region58: #{unet_innermost_forward.4} parent=51 // pred_check_branch
          %2243 = sbr.rel (%p2241) target = $region60
        $region59: #{unet_innermost_forward.4} parent=51 // pred_region
          %s2244 = sand.u32 %s27, 1
          %s2245 = scalar_lea.sflag [#allocation9], %s2244
          %s2246 = sand.u32 %s108, 1
          %s2247 = scalar_lea.vmem [#allocation8], %s2246
          %2248 = dma.done %s2245, 16
        $region60: #{unet_innermost_forward.4} parent=51 // pred_fallthru
          _
        // Predicated region
        $region61: #{unet_innermost_forward.4} parent=51 // pred_check
          %p2249 = pneg %p149
        $region62: #{unet_innermost_forward.4} parent=51 // pred_check_branch
          %2251 = sbr.rel (%p2249) target = $region64
        $region63: #{unet_innermost_forward.4} parent=51 // pred_region
          %s2252 = sand.u32 %s27, 1
          %s2253 = scalar_lea.sflag [#allocation9], %s2252
          %s2254 = sand.u32 %s134, 1
          %s2255 = scalar_lea.vmem [#allocation10], %s2254
          %2256 = dma.done %s2253, 16
        $region64: #{unet_innermost_forward.4} parent=51 // pred_fallthru
          _
      $region52: #{unet_innermost_forward.4} parent=5 // pred_fallthru
        _
    $region6: #{unet_innermost_forward.4} parent=1 // loop_footer
      %s25 = sadd.s32 1, %s21
    $region7: #{unet_innermost_forward.4} parent=1 // loop_footer_branch
      %20 = sbr.rel target = $region3
    $region8: #{unet_innermost_forward.4} parent=1 // loop_exit
      _
    %2257 = vsyncpa [#allocation3], 1
    %s2258 = scalar_lea.sflag [#allocation3], 1
    %2259 = vsyncpa %s2258, 1
    %2260 = vsyncpa [#allocation6], 1
    %2261 = vsyncpa [#allocation4], 1
    %s2262 = scalar_lea.sflag [#allocation4], 1
    %2263 = vsyncpa %s2262, 1
    %2264 = vsyncpa [#allocation9], 1
    %s2265 = scalar_lea.sflag [#allocation9], 1
    %2266 = vsyncpa %s2265, 1

</llo_original>
